<compile_context>
chip_gen: v6e
topology: v6e:2x2x1
jax: 0.10.0
libtpu: 0.0.40
codegen_flags: <defaults>
</compile_context>

<pallas_src>
import jax
import jax.numpy as jnp
from jax import lax
from jax.experimental import pallas as pl
from jax.experimental.pallas import tpu as pltpu

INPUT_DIM = 28 * 28          # 784
INPUT_PAD = 896              # 7 * 128 -> lane-aligned
HIDDEN = 512
LATENT = 64
LATENT2 = 2 * LATENT         # 128: packed [mu | sigma] lanes

_TILE_MIN = 16               # bf16 sublane tile (keeps (16,128) layout for bf16 blocks)


def _vae_kernel(
    x_ref, eps_ref,
    ew1_ref, eb1_ref, ew2_ref, eb2_ref,
    wq_ref, bq_ref,
    dw1_ref, db1_ref, dw2_ref, db2_ref,
    dec_mu_ref, q_ref,
):
    bf16 = jnp.bfloat16
    f32 = jnp.float32

    # ---- Encoder ----
    x = x_ref[...]                                   # already bf16 (cast in wrapper)
    h = jnp.dot(x, ew1_ref[...], preferred_element_type=f32) + eb1_ref[...]
    h = jnp.maximum(h, 0.0)
    h = jnp.dot(h.astype(bf16), ew2_ref[...], preferred_element_type=f32) + eb2_ref[...]
    h = jnp.maximum(h, 0.0)

    # Fused mu / log_sigma projection -> lane-dense [tb, 128] = [mu | log_sigma].
    q_lin = jnp.dot(h.astype(bf16), wq_ref[...], preferred_element_type=f32) + bq_ref[...]
    lane = lax.broadcasted_iota(jnp.int32, q_lin.shape, 1)
    is_mu = lane < LATENT
    # Note: exp() is evaluated on the (discarded) mu lanes too; benign for O(1)
    # activations, keep in mind if mu could become very large.
    q_packed = jnp.where(is_mu, q_lin, jnp.exp(q_lin))      # [mu | sigma]
    q_ref[...] = q_packed                                    # one unmasked 128-lane store

    # ---- Reparameterization (Normal.rsample): z = mu + sigma * eps ----
    # eps_ref is pre-packed as [0 | eps], so q_packed * eps = [0 | sigma*eps];
    # rolling by 64 lanes lands sigma*eps on the mu lanes (XLU, off the VPU path).
    noise = q_packed * eps_ref[...]
    # Upper 64 lanes of z hold sigma; dw1 rows 64:127 are zero so they are inert.
    z = q_packed + pltpu.roll(noise, shift=LATENT, axis=1)

    # ---- Decoder ----
    d = jnp.dot(z.astype(bf16), dw1_ref[...], preferred_element_type=f32) + db1_ref[...]
    d = jnp.maximum(d, 0.0)
    out = jnp.dot(d.astype(bf16), dw2_ref[...], preferred_element_type=f32) + db2_ref[...]
    # tanh in bf16 (bf16 EUP path on v6e/v7x) + bf16 store -> halves output traffic.
    dec_mu_ref[...] = jnp.tanh(out.astype(bf16))


def _round_up(n, m):
    return (n + m - 1) // m * m


def _cdiv(a, b):
    return (a + b - 1) // b


def _choose_tile(batch, tile_b):
    """Pick a batch tile: 16-row granularity, >=2 grid steps when possible."""
    b_al = _round_up(batch, _TILE_MIN)
    tb = min(_round_up(tile_b, _TILE_MIN), b_al)
    if b_al <= tb and b_al >= 2 * _TILE_MIN:
        # Cap the tile so the grid has >=2 steps: lets ("parallel",) shard the
        # batch across both v7x TensorCores instead of leaving one idle.
        tb = _round_up(_cdiv(b_al, 2), _TILE_MIN)
    b_pad = _round_up(b_al, tb)
    return tb, b_pad


def init_params(key):
    """Deterministic init, PyTorch-Linear-style uniform(-1/sqrt(fan_in), +)."""
    def linear(key, fan_in, fan_out):
        kw, kb = jax.random.split(key)
        bound = 1.0 / jnp.sqrt(fan_in)
        w = jax.random.uniform(kw, (fan_in, fan_out), jnp.float32, -bound, bound)
        b = jax.random.uniform(kb, (1, fan_out), jnp.float32, -bound, bound)
        return w, b

    keys = jax.random.split(key, 6)
    ew1, eb1 = linear(keys[0], INPUT_DIM, HIDDEN)   # Encoder.linear1
    ew2, eb2 = linear(keys[1], HIDDEN, HIDDEN)      # Encoder.linear2
    wmu, bmu = linear(keys[2], HIDDEN, LATENT)      # Encoder.enc_mu
    wls, bls = linear(keys[3], HIDDEN, LATENT)      # Encoder.enc_log_sigma
    dw1, db1 = linear(keys[4], LATENT, HIDDEN)      # Decoder.linear1
    dw2, db2 = linear(keys[5], HIDDEN, INPUT_DIM)   # Decoder.linear2
    return (ew1, eb1, ew2, eb2, wmu, bmu, wls, bls, dw1, db1, dw2, db2)


def pack_params(params):
    """Pad/fuse/cast the PyTorch-layout params into the kernel layout."""
    (ew1, eb1, ew2, eb2, wmu, bmu, wls, bls, dw1, db1, dw2, db2) = params
    bf = jnp.bfloat16
    ew1_p = jnp.pad(ew1, ((0, INPUT_PAD - INPUT_DIM), (0, 0))).astype(bf)  # [896,512]
    ew2_p = ew2.astype(bf)                                                 # [512,512]
    wq = jnp.concatenate([wmu, wls], axis=1).astype(bf)                    # [512,128]
    bq = jnp.concatenate([bmu, bls], axis=1).astype(jnp.float32)           # [1,128]
    dw1_p = jnp.pad(dw1, ((0, LATENT2 - LATENT), (0, 0))).astype(bf)       # [128,512]
    dw2_p = jnp.pad(dw2, ((0, 0), (0, INPUT_PAD - INPUT_DIM))).astype(bf)  # [512,896]
    db2_p = jnp.pad(db2, ((0, 0), (0, INPUT_PAD - INPUT_DIM)))             # [1,896]
    return (ew1_p, eb1, ew2_p, eb2, wq, bq, dw1_p, db1, dw2_p, db2_p)


def vae_forward(state, eps, packed, *, tile_b=256):
    """Mirrors VAE.forward: returns ((dec_mu, dec_sigma), (q_mu, q_sigma))."""
    B = state.shape[0]
    tb, b_pad = _choose_tile(B, tile_b)

    # bf16 input stream (weights are already bf16; f32 accumulation in-kernel).
    x_pad = jnp.pad(state.astype(jnp.bfloat16),
                    ((0, b_pad - B), (0, INPUT_PAD - INPUT_DIM)))
    # Pack eps into the upper 64 lanes: [0 | eps].
    eps_pad = jnp.pad(eps.astype(jnp.float32), ((0, b_pad - B), (LATENT, 0)))

    def batch_spec(width):
        return pl.BlockSpec((tb, width), lambda i: (i, 0))

    def const_spec(shape):
        # Constant index_map -> weight/bias DMA'd once, stays VMEM-resident.
        # TODO(synk): single-buffer these (pipeline_mode=pl.Buffered(1)) and/or
        # persist weights across calls (P10 cross-call future) for tiny serving
        # batches, where the ~2.5 MiB weight re-stream dominates on v5e.
        return pl.BlockSpec(shape, lambda i: (0, 0))

    in_specs = [batch_spec(INPUT_PAD), batch_spec(LATENT2)]
    in_specs += [const_spec(p.shape) for p in packed]

    # Advisory cost estimate so XLA schedules the surrounding pad/slice sanely.
    flops_per_row = 2 * (INPUT_PAD * HIDDEN + HIDDEN * HIDDEN + HIDDEN * LATENT2
                         + LATENT2 * HIDDEN + HIDDEN * INPUT_PAD)
    weight_bytes = int(sum(int(p.size) * p.dtype.itemsize for p in packed))
    act_bytes = b_pad * (INPUT_PAD * 2 + LATENT2 * 4 + INPUT_PAD * 2 + LATENT2 * 4)
    cost = pl.CostEstimate(
        flops=b_pad * flops_per_row,
        transcendentals=b_pad * (LATENT2 + INPUT_PAD),
        bytes_accessed=weight_bytes + act_bytes,
    )

    dec_mu_pad, q_packed = pl.pallas_call(
        _vae_kernel,
        grid=(b_pad // tb,),
        out_shape=(
            jax.ShapeDtypeStruct((b_pad, INPUT_PAD), jnp.bfloat16),
            jax.ShapeDtypeStruct((b_pad, LATENT2), jnp.float32),
        ),
        in_specs=in_specs,
        out_specs=(batch_spec(INPUT_PAD), batch_spec(LATENT2)),
        compiler_params=pltpu.CompilerParams(
            dimension_semantics=("parallel",),
            vmem_limit_bytes=32 << 20,
        ),
        cost_estimate=cost,
    )(x_pad, eps_pad, *packed)

    dec_mu = dec_mu_pad[:B, :INPUT_DIM].astype(jnp.float32)
    q_mu = q_packed[:B, :LATENT]
    q_sigma = q_packed[:B, LATENT:]
    # Decoder Normal scale == torch.ones_like(mu): return a broadcastable (1,1)
    # ones instead of materializing a full [B,784] ones array in HBM.
    dec_sigma = jnp.ones((1, 1), dec_mu.dtype)
    return (dec_mu, dec_sigma), (q_mu, q_sigma)


def reference_forward(state, eps, params):
    """Pure-JAX reference (weights/input bf16-rounded to match kernel precision)."""
    (ew1, eb1, ew2, eb2, wmu, bmu, wls, bls, dw1, db1, dw2, db2) = params
    qw = lambda w: w.astype(jnp.bfloat16).astype(jnp.float32)
    x = qw(state)
    h = jnp.maximum(x @ qw(ew1) + eb1, 0.0)
    h = jnp.maximum(h @ qw(ew2) + eb2, 0.0)
    q_mu = h @ qw(wmu) + bmu
    q_sigma = jnp.exp(h @ qw(wls) + bls)
    z = q_mu + q_sigma * eps
    d = jnp.maximum(z @ qw(dw1) + db1, 0.0)
    dec_mu = jnp.tanh(d @ qw(dw2) + db2)
    return dec_mu, q_mu, q_sigma


if __name__ == "__main__":
    key = jax.random.PRNGKey(0)
    k_params, k_x, k_eps = jax.random.split(key, 3)

    B = 32
    params = init_params(k_params)
    packed = pack_params(params)

    state = jax.random.normal(k_x, (B, INPUT_DIM), jnp.float32)
    # Standard-normal noise for Normal.rsample drawn outside the kernel so the
    # computation is deterministic and comparable against the reference.
    eps = jax.random.normal(k_eps, (B, LATENT), jnp.float32)

    fwd = jax.jit(vae_forward, static_argnames=("tile_b",))
    # B=32 -> tb=16, 2 grid steps (exercises the >=2-step / 2-TC path).
    (dec_mu, dec_sigma), (q_mu, q_sigma) = jax.block_until_ready(
        fwd(state, eps, packed)
    )

    ref_dec_mu, ref_q_mu, ref_q_sigma = reference_forward(state, eps, params)
    assert dec_mu.shape == (B, INPUT_DIM)
    assert q_mu.shape == (B, LATENT) and q_sigma.shape == (B, LATENT)
    assert jnp.allclose(dec_mu, ref_dec_mu, atol=3e-2, rtol=3e-2)
    assert jnp.allclose(q_mu, ref_q_mu, atol=3e-2, rtol=3e-2)
    assert jnp.allclose(q_sigma, ref_q_sigma, atol=3e-2, rtol=3e-2)
    assert dec_sigma.shape == (1, 1) and bool(jnp.all(dec_sigma == 1.0))
    print("KERNEL_OK")
</pallas_src>

<mosaic_0001>
module attributes {stable_mosaic.version = 11 : i64} {
  func.func @_vae_kernel(%arg0: i32, %arg1: memref<16x896xbf16, #tpu.memory_space<vmem>>, %arg2: memref<16x128xf32, #tpu.memory_space<vmem>>, %arg3: memref<896x512xbf16, #tpu.memory_space<vmem>>, %arg4: memref<1x512xf32, #tpu.memory_space<vmem>>, %arg5: memref<512x512xbf16, #tpu.memory_space<vmem>>, %arg6: memref<1x512xf32, #tpu.memory_space<vmem>>, %arg7: memref<512x128xbf16, #tpu.memory_space<vmem>>, %arg8: memref<1x128xf32, #tpu.memory_space<vmem>>, %arg9: memref<128x512xbf16, #tpu.memory_space<vmem>>, %arg10: memref<1x512xf32, #tpu.memory_space<vmem>>, %arg11: memref<512x896xbf16, #tpu.memory_space<vmem>>, %arg12: memref<1x896xf32, #tpu.memory_space<vmem>>, %arg13: memref<16x896xbf16, #tpu.memory_space<vmem>>, %arg14: memref<16x128xf32, #tpu.memory_space<vmem>>) attributes {dimension_semantics = [#tpu.dimension_semantics<parallel>], iteration_bounds = array<i64: 2>, scalar_prefetch = 0 : i64, scratch_operands = 0 : i64, tpu.core_type = #tpu.core_type<tc>, window_params = [{transform_indices = @transform_0, window_bounds = array<i64: 16, 896>}, {transform_indices = @transform_1, window_bounds = array<i64: 16, 128>}, {pipeline_mode = #tpu.pipeline_mode<synchronous>, transform_indices = @transform_2, window_bounds = array<i64: 896, 512>}, {pipeline_mode = #tpu.pipeline_mode<synchronous>, transform_indices = @transform_3, window_bounds = array<i64: 1, 512>}, {pipeline_mode = #tpu.pipeline_mode<synchronous>, transform_indices = @transform_4, window_bounds = array<i64: 512, 512>}, {pipeline_mode = #tpu.pipeline_mode<synchronous>, transform_indices = @transform_5, window_bounds = array<i64: 1, 512>}, {pipeline_mode = #tpu.pipeline_mode<synchronous>, transform_indices = @transform_6, window_bounds = array<i64: 512, 128>}, {pipeline_mode = #tpu.pipeline_mode<synchronous>, transform_indices = @transform_7, window_bounds = array<i64: 1, 128>}, {pipeline_mode = #tpu.pipeline_mode<synchronous>, transform_indices = @transform_8, window_bounds = array<i64: 128, 512>}, {pipeline_mode = #tpu.pipeline_mode<synchronous>, transform_indices = @transform_9, window_bounds = array<i64: 1, 512>}, {pipeline_mode = #tpu.pipeline_mode<synchronous>, transform_indices = @transform_10, window_bounds = array<i64: 512, 896>}, {pipeline_mode = #tpu.pipeline_mode<synchronous>, transform_indices = @transform_11, window_bounds = array<i64: 1, 896>}, {transform_indices = @transform_12, window_bounds = array<i64: 16, 896>}, {transform_indices = @transform_13, window_bounds = array<i64: 16, 128>}]} {
    %c0 = arith.constant 0 : index
    %c0_0 = arith.constant 0 : index
    %0 = vector.load %arg1[%c0, %c0_0] : memref<16x896xbf16, #tpu.memory_space<vmem>>, vector<16x896xbf16>
    %c0_1 = arith.constant 0 : index
    %c0_2 = arith.constant 0 : index
    %1 = vector.load %arg3[%c0_1, %c0_2] : memref<896x512xbf16, #tpu.memory_space<vmem>>, vector<896x512xbf16>
    %cst = arith.constant dense<0.000000e+00> : vector<16x512xf32>
    %2 = tpu.matmul %0, %1, %cst {dimension_numbers = #tpu.dot_dimension_numbers<[1], [0], [0], [1], [0, 0, 1, 1], [], []>} : vector<16x896xbf16>, vector<896x512xbf16>, vector<16x512xf32> -> vector<16x512xf32>
    %c0_3 = arith.constant 0 : index
    %c0_4 = arith.constant 0 : index
    %3 = vector.load %arg4[%c0_3, %c0_4] : memref<1x512xf32, #tpu.memory_space<vmem>>, vector<1x512xf32>
    %4 = vector.broadcast %3 : vector<1x512xf32> to vector<16x512xf32>
    %5 = arith.addf %2, %4 : vector<16x512xf32>
    %cst_5 = arith.constant 0.000000e+00 : f32
    %6 = vector.broadcast %cst_5 : f32 to vector<16x512xf32>
    %7 = arith.maximumf %5, %6 : vector<16x512xf32>
    %8 = arith.truncf %7 : vector<16x512xf32> to vector<16x512xbf16>
    %c0_6 = arith.constant 0 : index
    %c0_7 = arith.constant 0 : index
    %9 = vector.load %arg5[%c0_6, %c0_7] : memref<512x512xbf16, #tpu.memory_space<vmem>>, vector<512x512xbf16>
    %cst_8 = arith.constant dense<0.000000e+00> : vector<16x512xf32>
    %10 = tpu.matmul %8, %9, %cst_8 {dimension_numbers = #tpu.dot_dimension_numbers<[1], [0], [0], [1], [0, 0, 1, 1], [], []>} : vector<16x512xbf16>, vector<512x512xbf16>, vector<16x512xf32> -> vector<16x512xf32>
    %c0_9 = arith.constant 0 : index
    %c0_10 = arith.constant 0 : index
    %11 = vector.load %arg6[%c0_9, %c0_10] : memref<1x512xf32, #tpu.memory_space<vmem>>, vector<1x512xf32>
    %12 = vector.broadcast %11 : vector<1x512xf32> to vector<16x512xf32>
    %13 = arith.addf %10, %12 : vector<16x512xf32>
    %cst_11 = arith.constant 0.000000e+00 : f32
    %14 = vector.broadcast %cst_11 : f32 to vector<16x512xf32>
    %15 = arith.maximumf %13, %14 : vector<16x512xf32>
    %16 = arith.truncf %15 : vector<16x512xf32> to vector<16x512xbf16>
    %c0_12 = arith.constant 0 : index
    %c0_13 = arith.constant 0 : index
    %17 = vector.load %arg7[%c0_12, %c0_13] : memref<512x128xbf16, #tpu.memory_space<vmem>>, vector<512x128xbf16>
    %cst_14 = arith.constant dense<0.000000e+00> : vector<16x128xf32>
    %18 = tpu.matmul %16, %17, %cst_14 {dimension_numbers = #tpu.dot_dimension_numbers<[1], [0], [0], [1], [0, 0, 1, 1], [], []>} : vector<16x512xbf16>, vector<512x128xbf16>, vector<16x128xf32> -> vector<16x128xf32>
    %c0_15 = arith.constant 0 : index
    %c0_16 = arith.constant 0 : index
    %19 = vector.load %arg8[%c0_15, %c0_16] : memref<1x128xf32, #tpu.memory_space<vmem>>, vector<1x128xf32>
    %20 = vector.broadcast %19 : vector<1x128xf32> to vector<16x128xf32>
    %21 = arith.addf %18, %20 : vector<16x128xf32>
    %22 = tpu.iota {dimensions = array<i32: 1>} : vector<16x128xi32>
    %c64_i32 = arith.constant 64 : i32
    %23 = vector.broadcast %c64_i32 : i32 to vector<16x128xi32>
    %24 = arith.cmpi slt, %22, %23 : vector<16x128xi32>
    %25 = math.exp %21 : vector<16x128xf32>
    %26 = arith.select %24, %21, %25 : vector<16x128xi1>, vector<16x128xf32>
    %c0_17 = arith.constant 0 : index
    %c0_18 = arith.constant 0 : index
    %27 = vector.load %arg14[%c0_17, %c0_18] : memref<16x128xf32, #tpu.memory_space<vmem>>, vector<16x128xf32>
    tpu.vector_store %arg14[%c0_17, %c0_18], %26 {strides = array<i32>} : memref<16x128xf32, #tpu.memory_space<vmem>>, vector<16x128xf32>,
    %c0_19 = arith.constant 0 : index
    %c0_20 = arith.constant 0 : index
    %28 = vector.load %arg2[%c0_19, %c0_20] : memref<16x128xf32, #tpu.memory_space<vmem>>, vector<16x128xf32>
    %29 = arith.mulf %26, %28 : vector<16x128xf32>
    %c64_i32_21 = arith.constant 64 : i32
    %30 = tpu.dynamic_rotate %29 by %c64_i32_21 dim 1 : vector<16x128xf32>, i32 -> vector<16x128xf32>
    %31 = arith.addf %26, %30 : vector<16x128xf32>
    %32 = arith.truncf %31 : vector<16x128xf32> to vector<16x128xbf16>
    %c0_22 = arith.constant 0 : index
    %c0_23 = arith.constant 0 : index
    %33 = vector.load %arg9[%c0_22, %c0_23] : memref<128x512xbf16, #tpu.memory_space<vmem>>, vector<128x512xbf16>
    %cst_24 = arith.constant dense<0.000000e+00> : vector<16x512xf32>
    %34 = tpu.matmul %32, %33, %cst_24 {dimension_numbers = #tpu.dot_dimension_numbers<[1], [0], [0], [1], [0, 0, 1, 1], [], []>} : vector<16x128xbf16>, vector<128x512xbf16>, vector<16x512xf32> -> vector<16x512xf32>
    %c0_25 = arith.constant 0 : index
    %c0_26 = arith.constant 0 : index
    %35 = vector.load %arg10[%c0_25, %c0_26] : memref<1x512xf32, #tpu.memory_space<vmem>>, vector<1x512xf32>
    %36 = vector.broadcast %35 : vector<1x512xf32> to vector<16x512xf32>
    %37 = arith.addf %34, %36 : vector<16x512xf32>
    %cst_27 = arith.constant 0.000000e+00 : f32
    %38 = vector.broadcast %cst_27 : f32 to vector<16x512xf32>
    %39 = arith.maximumf %37, %38 : vector<16x512xf32>
    %40 = arith.truncf %39 : vector<16x512xf32> to vector<16x512xbf16>
    %c0_28 = arith.constant 0 : index
    %c0_29 = arith.constant 0 : index
    %41 = vector.load %arg11[%c0_28, %c0_29] : memref<512x896xbf16, #tpu.memory_space<vmem>>, vector<512x896xbf16>
    %cst_30 = arith.constant dense<0.000000e+00> : vector<16x896xf32>
    %42 = tpu.matmul %40, %41, %cst_30 {dimension_numbers = #tpu.dot_dimension_numbers<[1], [0], [0], [1], [0, 0, 1, 1], [], []>} : vector<16x512xbf16>, vector<512x896xbf16>, vector<16x896xf32> -> vector<16x896xf32>
    %c0_31 = arith.constant 0 : index
    %c0_32 = arith.constant 0 : index
    %43 = vector.load %arg12[%c0_31, %c0_32] : memref<1x896xf32, #tpu.memory_space<vmem>>, vector<1x896xf32>
    %44 = vector.broadcast %43 : vector<1x896xf32> to vector<16x896xf32>
    %45 = arith.addf %42, %44 : vector<16x896xf32>
    %46 = arith.truncf %45 : vector<16x896xf32> to vector<16x896xbf16>
    %47 = math.tanh %46 : vector<16x896xbf16>
    %c0_33 = arith.constant 0 : index
    %c0_34 = arith.constant 0 : index
    %48 = vector.load %arg13[%c0_33, %c0_34] : memref<16x896xbf16, #tpu.memory_space<vmem>>, vector<16x896xbf16>
    tpu.vector_store %arg13[%c0_33, %c0_34], %47 {strides = array<i32>} : memref<16x896xbf16, #tpu.memory_space<vmem>>, vector<16x896xbf16>,
    return
  }
  func.func @transform_0(%arg0: i32) -> (i32, i32) {
    %c0_i32 = arith.constant 0 : i32
    %c0_i32_0 = arith.constant 0 : i32
    return %arg0, %c0_i32 : i32, i32
  }
  func.func @transform_1(%arg0: i32) -> (i32, i32) {
    %c0_i32 = arith.constant 0 : i32
    %c0_i32_0 = arith.constant 0 : i32
    return %arg0, %c0_i32 : i32, i32
  }
  func.func @transform_2(%arg0: i32) -> (i32, i32) {
    %c0_i32 = arith.constant 0 : i32
    %c0_i32_0 = arith.constant 0 : i32
    %c0_i32_1 = arith.constant 0 : i32
    return %c0_i32, %c0_i32_0 : i32, i32
  }
  func.func @transform_3(%arg0: i32) -> (i32, i32) {
    %c0_i32 = arith.constant 0 : i32
    %c0_i32_0 = arith.constant 0 : i32
    %c0_i32_1 = arith.constant 0 : i32
    return %c0_i32, %c0_i32_0 : i32, i32
  }
  func.func @transform_4(%arg0: i32) -> (i32, i32) {
    %c0_i32 = arith.constant 0 : i32
    %c0_i32_0 = arith.constant 0 : i32
    %c0_i32_1 = arith.constant 0 : i32
    return %c0_i32, %c0_i32_0 : i32, i32
  }
  func.func @transform_5(%arg0: i32) -> (i32, i32) {
    %c0_i32 = arith.constant 0 : i32
    %c0_i32_0 = arith.constant 0 : i32
    %c0_i32_1 = arith.constant 0 : i32
    return %c0_i32, %c0_i32_0 : i32, i32
  }
  func.func @transform_6(%arg0: i32) -> (i32, i32) {
    %c0_i32 = arith.constant 0 : i32
    %c0_i32_0 = arith.constant 0 : i32
    %c0_i32_1 = arith.constant 0 : i32
    return %c0_i32, %c0_i32_0 : i32, i32
  }
  func.func @transform_7(%arg0: i32) -> (i32, i32) {
    %c0_i32 = arith.constant 0 : i32
    %c0_i32_0 = arith.constant 0 : i32
    %c0_i32_1 = arith.constant 0 : i32
    return %c0_i32, %c0_i32_0 : i32, i32
  }
  func.func @transform_8(%arg0: i32) -> (i32, i32) {
    %c0_i32 = arith.constant 0 : i32
    %c0_i32_0 = arith.constant 0 : i32
    %c0_i32_1 = arith.constant 0 : i32
    return %c0_i32, %c0_i32_0 : i32, i32
  }
  func.func @transform_9(%arg0: i32) -> (i32, i32) {
    %c0_i32 = arith.constant 0 : i32
    %c0_i32_0 = arith.constant 0 : i32
    %c0_i32_1 = arith.constant 0 : i32
    return %c0_i32, %c0_i32_0 : i32, i32
  }
  func.func @transform_10(%arg0: i32) -> (i32, i32) {
    %c0_i32 = arith.constant 0 : i32
    %c0_i32_0 = arith.constant 0 : i32
    %c0_i32_1 = arith.constant 0 : i32
    return %c0_i32, %c0_i32_0 : i32, i32
  }
  func.func @transform_11(%arg0: i32) -> (i32, i32) {
    %c0_i32 = arith.constant 0 : i32
    %c0_i32_0 = arith.constant 0 : i32
    %c0_i32_1 = arith.constant 0 : i32
    return %c0_i32, %c0_i32_0 : i32, i32
  }
  func.func @transform_12(%arg0: i32) -> (i32, i32) {
    %c0_i32 = arith.constant 0 : i32
    %c0_i32_0 = arith.constant 0 : i32
    return %arg0, %c0_i32 : i32, i32
  }
  func.func @transform_13(%arg0: i32) -> (i32, i32) {
    %c0_i32 = arith.constant 0 : i32
    %c0_i32_0 = arith.constant 0 : i32
    return %arg0, %c0_i32 : i32, i32
  }
}

</mosaic_0001>

<llo_original>
// kernel: vae_forward.1
$region0: #{vae_forward.1}
  #allocation0 [shape = 'u32[]', space=smem, size = 0x4, offset = 0x4, fixed_abs, tag = 'smem constant byte address 0x4 - core index']
  #allocation1 [shape = 'u32[144,128]{1,0:T(1,128)}', space=vmem, size = 0x12000, scoped, tag = 'internal scratch']
  %s0 = inlined_call_operand.vmem [shape: bf16[32,896], index: 0, kind: input, shape index: {}]
  %s1 = inlined_call_operand.vmem [shape: f32[32,128], index: 1, kind: input, shape index: {}]
  %s2 = inlined_call_operand.hbm [shape: bf16[896,512], index: 2, kind: input, shape index: {}]
  %s3 = inlined_call_operand.vmem [shape: f32[1,512], index: 3, kind: input, shape index: {}]
  %s4 = inlined_call_operand.hbm [shape: bf16[512,512], index: 4, kind: input, shape index: {}]
  %s5 = inlined_call_operand.vmem [shape: f32[1,512], index: 5, kind: input, shape index: {}]
  %s6 = inlined_call_operand.vmem [shape: bf16[512,128], index: 6, kind: input, shape index: {}]
  %s7 = inlined_call_operand.vmem [shape: f32[1,128], index: 7, kind: input, shape index: {}]
  %s8 = inlined_call_operand.vmem [shape: bf16[128,512], index: 8, kind: input, shape index: {}]
  %s9 = inlined_call_operand.vmem [shape: f32[1,512], index: 9, kind: input, shape index: {}]
  %s10 = inlined_call_operand.hbm [shape: bf16[512,896], index: 10, kind: input, shape index: {}]
  %s11 = inlined_call_operand.vmem [shape: f32[1,896], index: 11, kind: input, shape index: {}]
  %s12 = inlined_call_operand.vmem [shape: bf16[32,896], index: 12, kind: output, shape index: {0}]
  %s13 = inlined_call_operand.vmem [shape: f32[32,128], index: 13, kind: output, shape index: {1}]
  %14 = xla_tuple %s12, %s13
  %s15 = sld [smem:[#allocation0]]
  $region101: #{vae_forward.1} parent=0
    _
  %s17 = ssub.s32 1, %s15
  %s18 = scalar_select 0, %s17, %s15
  $region1: #{vae_forward.1} parent=0
    #allocation2 [shape = 'u8[917504]{0}', space=vmem, size = 0xe0000, scoped, tag = 'input window, operand 2, single buffered']
    #allocation3 [shape = 's32[2]{0}', space=sflag, size = 0x8, scoped, tag = 'scoped memory for vae_forward.1']
    #allocation4 [shape = 'u8[524288]{0}', space=vmem, size = 0x80000, scoped, tag = 'input window, operand 4, single buffered']
    #allocation5 [shape = 's32[1]{0}', space=sflag, size = 0x4, scoped, tag = 'scoped memory for vae_forward.1']
    #allocation6 [shape = 'u8[917504]{0}', space=vmem, size = 0xe0000, scoped, tag = 'input window, operand 10, single buffered']
    %19 = vsyncpa [#allocation3], 0
    %20 = vsyncpa [#allocation5], 0
    loop: start=0, step=1, limit=4
    $region2: #{vae_forward.1} parent=1 // loop_pre_header
      _
    $region3: #{vae_forward.1} parent=1 // loop_header
      %s22 = sphi 0, %s26
      %p23 = scmp.ge.s32.totalorder %s22, 4
      %s32 = sphi 0, %s34
      %s35 = sphi 0, %s32
      %s36 = sphi 0, %s35
      %s52 = sphi 0, %s36
      %s58 = sphi 0, %s60
      %s61 = sphi 0, %s58
      %s62 = sphi 0, %s61
      %s78 = sphi 0, %s62
      %s82 = sphi 0, %s82
      %s84 = sphi 0, %s82
      %s85 = sphi 0, %s84
      %s99 = sphi 0, %s85
      %s103 = sphi 0, %s103
      %s105 = sphi 0, %s103
      %s106 = sphi 0, %s105
      %s120 = sphi 0, %s106
      %s124 = sphi 0, %s124
      %s126 = sphi 0, %s124
      %s127 = sphi 0, %s126
      %s141 = sphi 0, %s127
      %s145 = sphi 0, %s145
      %s147 = sphi 0, %s145
      %s148 = sphi 0, %s147
      %s162 = sphi 0, %s148
      %s166 = sphi 0, %s166
      %s168 = sphi 0, %s166
      %s169 = sphi 0, %s168
      %s183 = sphi 0, %s169
      %s187 = sphi 0, %s187
      %s189 = sphi 0, %s187
      %s190 = sphi 0, %s189
      %s204 = sphi 0, %s190
      %s208 = sphi 0, %s208
      %s210 = sphi 0, %s208
      %s211 = sphi 0, %s210
      %s225 = sphi 0, %s211
      %s229 = sphi 0, %s229
      %s231 = sphi 0, %s229
      %s232 = sphi 0, %s231
      %s246 = sphi 0, %s232
      %s250 = sphi 0, %s250
      %s252 = sphi 0, %s250
      %s253 = sphi 0, %s252
      %s267 = sphi 0, %s253
      %s271 = sphi 0, %s271
      %s273 = sphi 0, %s271
      %s274 = sphi 0, %s273
      %s288 = sphi 0, %s274
      %s294 = sphi 0, %s296
      %s297 = sphi 0, %s294
      %s298 = sphi 0, %s297
      %s314 = sphi 0, %s298
      %s320 = sphi 0, %s322
      %s323 = sphi 0, %s320
      %s324 = sphi 0, %s323
      %s340 = sphi 0, %s324
    $region4: #{vae_forward.1} parent=1 // loop_header_branch
      %25 = sbr.rel (%p23) target = $region8
    $region5: #{vae_forward.1} parent=1 // loop_body
      %s27 = ssub.s32 %s22, 1
      %s28 = ssub.s32 %s22, 2
      %s29 = sadd.s32 %s22, 1
      %s30 = ssub.s32 %s22, %s29
      %p31 = scmp.eq.s32.totalorder %s30, 0
      %s33 = sadd.s32 %s32, 1
      %s34 = scalar_select %p31, %s32, %s33
      %p37 = pneg %p31
      %p38 = scmp.eq.s32.totalorder %s22, 1
      %p39 = por %p37, %p38
      %p40 = scmp.ne.s32.totalorder %s32, %s35
      %p41 = scmp.eq.s32.totalorder %s22, 0
      %p42 = por %p40, %p41
      %p43 = scmp.ne.s32.totalorder %s32, %s35
      %p44 = scmp.eq.s32.totalorder %s27, 1
      %p45 = por %p43, %p44
      %p46 = scmp.ne.s32.totalorder %s35, %s36
      %p47 = scmp.eq.s32.totalorder %s27, 0
      %p48 = por %p46, %p47
      %p49 = scmp.ne.s32.totalorder %s35, %s36
      %p50 = scmp.eq.s32.totalorder %s28, 1
      %p51 = por %p49, %p50
      %p53 = scmp.ne.s32.totalorder %s36, %s52
      %p54 = scmp.eq.s32.totalorder %s28, 0
      %p55 = por %p53, %p54
      %s56 = ssub.s32 %s22, %s29
      %p57 = scmp.eq.s32.totalorder %s56, 0
      %s59 = sadd.s32 %s58, 1
      %s60 = scalar_select %p57, %s58, %s59
      %p63 = pneg %p57
      %p64 = scmp.eq.s32.totalorder %s22, 1
      %p65 = por %p63, %p64
      %p66 = scmp.ne.s32.totalorder %s58, %s61
      %p67 = scmp.eq.s32.totalorder %s22, 0
      %p68 = por %p66, %p67
      %p69 = scmp.ne.s32.totalorder %s58, %s61
      %p70 = scmp.eq.s32.totalorder %s27, 1
      %p71 = por %p69, %p70
      %p72 = scmp.ne.s32.totalorder %s61, %s62
      %p73 = scmp.eq.s32.totalorder %s27, 0
      %p74 = por %p72, %p73
      %p75 = scmp.ne.s32.totalorder %s61, %s62
      %p76 = scmp.eq.s32.totalorder %s28, 1
      %p77 = por %p75, %p76
      %p79 = scmp.ne.s32.totalorder %s62, %s78
      %p80 = scmp.eq.s32.totalorder %s28, 0
      %p81 = por %p79, %p80
      %s83 = sadd.s32 %s82, 1
      %p86 = scmp.eq.s32.totalorder %s22, 1
      %p87 = scmp.ne.s32.totalorder %s82, %s84
      %p88 = scmp.eq.s32.totalorder %s22, 0
      %p89 = por %p87, %p88
      %p90 = scmp.ne.s32.totalorder %s82, %s84
      %p91 = scmp.eq.s32.totalorder %s27, 1
      %p92 = por %p90, %p91
      %p93 = scmp.ne.s32.totalorder %s84, %s85
      %p94 = scmp.eq.s32.totalorder %s27, 0
      %p95 = por %p93, %p94
      %p96 = scmp.ne.s32.totalorder %s84, %s85
      %p97 = scmp.eq.s32.totalorder %s28, 1
      %p98 = por %p96, %p97
      %p100 = scmp.ne.s32.totalorder %s85, %s99
      %p101 = scmp.eq.s32.totalorder %s28, 0
      %p102 = por %p100, %p101
      %s104 = sadd.s32 %s103, 1
      %p107 = scmp.eq.s32.totalorder %s22, 1
      %p108 = scmp.ne.s32.totalorder %s103, %s105
      %p109 = scmp.eq.s32.totalorder %s22, 0
      %p110 = por %p108, %p109
      %p111 = scmp.ne.s32.totalorder %s103, %s105
      %p112 = scmp.eq.s32.totalorder %s27, 1
      %p113 = por %p111, %p112
      %p114 = scmp.ne.s32.totalorder %s105, %s106
      %p115 = scmp.eq.s32.totalorder %s27, 0
      %p116 = por %p114, %p115
      %p117 = scmp.ne.s32.totalorder %s105, %s106
      %p118 = scmp.eq.s32.totalorder %s28, 1
      %p119 = por %p117, %p118
      %p121 = scmp.ne.s32.totalorder %s106, %s120
      %p122 = scmp.eq.s32.totalorder %s28, 0
      %p123 = por %p121, %p122
      %s125 = sadd.s32 %s124, 1
      %p128 = scmp.eq.s32.totalorder %s22, 1
      %p129 = scmp.ne.s32.totalorder %s124, %s126
      %p130 = scmp.eq.s32.totalorder %s22, 0
      %p131 = por %p129, %p130
      %p132 = scmp.ne.s32.totalorder %s124, %s126
      %p133 = scmp.eq.s32.totalorder %s27, 1
      %p134 = por %p132, %p133
      %p135 = scmp.ne.s32.totalorder %s126, %s127
      %p136 = scmp.eq.s32.totalorder %s27, 0
      %p137 = por %p135, %p136
      %p138 = scmp.ne.s32.totalorder %s126, %s127
      %p139 = scmp.eq.s32.totalorder %s28, 1
      %p140 = por %p138, %p139
      %p142 = scmp.ne.s32.totalorder %s127, %s141
      %p143 = scmp.eq.s32.totalorder %s28, 0
      %p144 = por %p142, %p143
      %s146 = sadd.s32 %s145, 1
      %p149 = scmp.eq.s32.totalorder %s22, 1
      %p150 = scmp.ne.s32.totalorder %s145, %s147
      %p151 = scmp.eq.s32.totalorder %s22, 0
      %p152 = por %p150, %p151
      %p153 = scmp.ne.s32.totalorder %s145, %s147
      %p154 = scmp.eq.s32.totalorder %s27, 1
      %p155 = por %p153, %p154
      %p156 = scmp.ne.s32.totalorder %s147, %s148
      %p157 = scmp.eq.s32.totalorder %s27, 0
      %p158 = por %p156, %p157
      %p159 = scmp.ne.s32.totalorder %s147, %s148
      %p160 = scmp.eq.s32.totalorder %s28, 1
      %p161 = por %p159, %p160
      %p163 = scmp.ne.s32.totalorder %s148, %s162
      %p164 = scmp.eq.s32.totalorder %s28, 0
      %p165 = por %p163, %p164
      %s167 = sadd.s32 %s166, 1
      %p170 = scmp.eq.s32.totalorder %s22, 1
      %p171 = scmp.ne.s32.totalorder %s166, %s168
      %p172 = scmp.eq.s32.totalorder %s22, 0
      %p173 = por %p171, %p172
      %p174 = scmp.ne.s32.totalorder %s166, %s168
      %p175 = scmp.eq.s32.totalorder %s27, 1
      %p176 = por %p174, %p175
      %p177 = scmp.ne.s32.totalorder %s168, %s169
      %p178 = scmp.eq.s32.totalorder %s27, 0
      %p179 = por %p177, %p178
      %p180 = scmp.ne.s32.totalorder %s168, %s169
      %p181 = scmp.eq.s32.totalorder %s28, 1
      %p182 = por %p180, %p181
      %p184 = scmp.ne.s32.totalorder %s169, %s183
      %p185 = scmp.eq.s32.totalorder %s28, 0
      %p186 = por %p184, %p185
      %s188 = sadd.s32 %s187, 1
      %p191 = scmp.eq.s32.totalorder %s22, 1
      %p192 = scmp.ne.s32.totalorder %s187, %s189
      %p193 = scmp.eq.s32.totalorder %s22, 0
      %p194 = por %p192, %p193
      %p195 = scmp.ne.s32.totalorder %s187, %s189
      %p196 = scmp.eq.s32.totalorder %s27, 1
      %p197 = por %p195, %p196
      %p198 = scmp.ne.s32.totalorder %s189, %s190
      %p199 = scmp.eq.s32.totalorder %s27, 0
      %p200 = por %p198, %p199
      %p201 = scmp.ne.s32.totalorder %s189, %s190
      %p202 = scmp.eq.s32.totalorder %s28, 1
      %p203 = por %p201, %p202
      %p205 = scmp.ne.s32.totalorder %s190, %s204
      %p206 = scmp.eq.s32.totalorder %s28, 0
      %p207 = por %p205, %p206
      %s209 = sadd.s32 %s208, 1
      %p212 = scmp.eq.s32.totalorder %s22, 1
      %p213 = scmp.ne.s32.totalorder %s208, %s210
      %p214 = scmp.eq.s32.totalorder %s22, 0
      %p215 = por %p213, %p214
      %p216 = scmp.ne.s32.totalorder %s208, %s210
      %p217 = scmp.eq.s32.totalorder %s27, 1
      %p218 = por %p216, %p217
      %p219 = scmp.ne.s32.totalorder %s210, %s211
      %p220 = scmp.eq.s32.totalorder %s27, 0
      %p221 = por %p219, %p220
      %p222 = scmp.ne.s32.totalorder %s210, %s211
      %p223 = scmp.eq.s32.totalorder %s28, 1
      %p224 = por %p222, %p223
      %p226 = scmp.ne.s32.totalorder %s211, %s225
      %p227 = scmp.eq.s32.totalorder %s28, 0
      %p228 = por %p226, %p227
      %s230 = sadd.s32 %s229, 1
      %p233 = scmp.eq.s32.totalorder %s22, 1
      %p234 = scmp.ne.s32.totalorder %s229, %s231
      %p235 = scmp.eq.s32.totalorder %s22, 0
      %p236 = por %p234, %p235
      %p237 = scmp.ne.s32.totalorder %s229, %s231
      %p238 = scmp.eq.s32.totalorder %s27, 1
      %p239 = por %p237, %p238
      %p240 = scmp.ne.s32.totalorder %s231, %s232
      %p241 = scmp.eq.s32.totalorder %s27, 0
      %p242 = por %p240, %p241
      %p243 = scmp.ne.s32.totalorder %s231, %s232
      %p244 = scmp.eq.s32.totalorder %s28, 1
      %p245 = por %p243, %p244
      %p247 = scmp.ne.s32.totalorder %s232, %s246
      %p248 = scmp.eq.s32.totalorder %s28, 0
      %p249 = por %p247, %p248
      %s251 = sadd.s32 %s250, 1
      %p254 = scmp.eq.s32.totalorder %s22, 1
      %p255 = scmp.ne.s32.totalorder %s250, %s252
      %p256 = scmp.eq.s32.totalorder %s22, 0
      %p257 = por %p255, %p256
      %p258 = scmp.ne.s32.totalorder %s250, %s252
      %p259 = scmp.eq.s32.totalorder %s27, 1
      %p260 = por %p258, %p259
      %p261 = scmp.ne.s32.totalorder %s252, %s253
      %p262 = scmp.eq.s32.totalorder %s27, 0
      %p263 = por %p261, %p262
      %p264 = scmp.ne.s32.totalorder %s252, %s253
      %p265 = scmp.eq.s32.totalorder %s28, 1
      %p266 = por %p264, %p265
      %p268 = scmp.ne.s32.totalorder %s253, %s267
      %p269 = scmp.eq.s32.totalorder %s28, 0
      %p270 = por %p268, %p269
      %s272 = sadd.s32 %s271, 1
      %p275 = scmp.eq.s32.totalorder %s22, 1
      %p276 = scmp.ne.s32.totalorder %s271, %s273
      %p277 = scmp.eq.s32.totalorder %s22, 0
      %p278 = por %p276, %p277
      %p279 = scmp.ne.s32.totalorder %s271, %s273
      %p280 = scmp.eq.s32.totalorder %s27, 1
      %p281 = por %p279, %p280
      %p282 = scmp.ne.s32.totalorder %s273, %s274
      %p283 = scmp.eq.s32.totalorder %s27, 0
      %p284 = por %p282, %p283
      %p285 = scmp.ne.s32.totalorder %s273, %s274
      %p286 = scmp.eq.s32.totalorder %s28, 1
      %p287 = por %p285, %p286
      %p289 = scmp.ne.s32.totalorder %s274, %s288
      %p290 = scmp.eq.s32.totalorder %s28, 0
      %p291 = por %p289, %p290
      %s292 = ssub.s32 %s22, %s29
      %p293 = scmp.eq.s32.totalorder %s292, 0
      %s295 = sadd.s32 %s294, 1
      %s296 = scalar_select %p293, %s294, %s295
      %p299 = pneg %p293
      %p300 = scmp.eq.s32.totalorder %s22, 1
      %p301 = por %p299, %p300
      %p302 = scmp.ne.s32.totalorder %s294, %s297
      %p303 = scmp.eq.s32.totalorder %s22, 0
      %p304 = por %p302, %p303
      %p305 = scmp.ne.s32.totalorder %s294, %s297
      %p306 = scmp.eq.s32.totalorder %s27, 1
      %p307 = por %p305, %p306
      %p308 = scmp.ne.s32.totalorder %s297, %s298
      %p309 = scmp.eq.s32.totalorder %s27, 0
      %p310 = por %p308, %p309
      %p311 = scmp.ne.s32.totalorder %s297, %s298
      %p312 = scmp.eq.s32.totalorder %s28, 1
      %p313 = por %p311, %p312
      %p315 = scmp.ne.s32.totalorder %s298, %s314
      %p316 = scmp.eq.s32.totalorder %s28, 0
      %p317 = por %p315, %p316
      %s318 = ssub.s32 %s22, %s29
      %p319 = scmp.eq.s32.totalorder %s318, 0
      %s321 = sadd.s32 %s320, 1
      %s322 = scalar_select %p319, %s320, %s321
      %p325 = pneg %p319
      %p326 = scmp.eq.s32.totalorder %s22, 1
      %p327 = por %p325, %p326
      %p328 = scmp.ne.s32.totalorder %s320, %s323
      %p329 = scmp.eq.s32.totalorder %s22, 0
      %p330 = por %p328, %p329
      %p331 = scmp.ne.s32.totalorder %s320, %s323
      %p332 = scmp.eq.s32.totalorder %s27, 1
      %p333 = por %p331, %p332
      %p334 = scmp.ne.s32.totalorder %s323, %s324
      %p335 = scmp.eq.s32.totalorder %s27, 0
      %p336 = por %p334, %p335
      %p337 = scmp.ne.s32.totalorder %s323, %s324
      %p338 = scmp.eq.s32.totalorder %s28, 1
      %p339 = por %p337, %p338
      %p341 = scmp.ne.s32.totalorder %s324, %s340
      %p342 = scmp.eq.s32.totalorder %s28, 0
      %p343 = por %p341, %p342
      %p344 = scmp.le.s32.totalorder 1, %s22
      %p345 = scmp.lt.s32.totalorder %s22, 3
      %p346 = pnand %p344, %p345
      %p347 = pneg %p346
      // Predicated region
      $region9: #{vae_forward.1} parent=5 // pred_check
        _
      $region10: #{vae_forward.1} parent=5 // pred_check_branch
        %349 = sbr.rel (%p346) target = $region12
      $region11: #{vae_forward.1} parent=5 // pred_region
        %s350 = ssub.s32 %s22, 1
        // Predicated region
        $region13: #{vae_forward.1} parent=11 // pred_check
          %p351 = pneg %p95
        $region14: #{vae_forward.1} parent=11 // pred_check_branch
          %353 = sbr.rel (%p351) target = $region16
        $region15: #{vae_forward.1} parent=11 // pred_region
          %s355 = ssub.s32 28672, 28672
          %356 = vsyncadd [#allocation3], %s355
          %s357 = sshll.u32 [#allocation2], 4
          %s358 = int_to_ptr.vmem [resolvable:$true] %s357
          %363 = dma.hbm_to_vmem [thread:$0]  %s2, 28672, %s358, [#allocation3], 256, 256, 16
        $region16: #{vae_forward.1} parent=11 // pred_fallthru
          _
        // Predicated region
        $region17: #{vae_forward.1} parent=11 // pred_check
          %p364 = pneg %p116
        $region18: #{vae_forward.1} parent=11 // pred_check_branch
          %366 = sbr.rel (%p364) target = $region20
        $region19: #{vae_forward.1} parent=11 // pred_region
          _
        $region20: #{vae_forward.1} parent=11 // pred_fallthru
          _
        // Predicated region
        $region21: #{vae_forward.1} parent=11 // pred_check
          %p367 = pneg %p137
        $region22: #{vae_forward.1} parent=11 // pred_check_branch
          %369 = sbr.rel (%p367) target = $region24
        $region23: #{vae_forward.1} parent=11 // pred_region
          %s371 = ssub.s32 16384, 16384
          %372 = vsyncadd [#allocation5], %s371
          %s373 = sshll.u32 [#allocation4], 4
          %s374 = int_to_ptr.vmem [resolvable:$true] %s373
          %379 = dma.hbm_to_vmem [thread:$0]  %s4, 16384, %s374, [#allocation5], 256, 256, 16
        $region24: #{vae_forward.1} parent=11 // pred_fallthru
          _
        // Predicated region
        $region25: #{vae_forward.1} parent=11 // pred_check
          %p380 = pneg %p158
        $region26: #{vae_forward.1} parent=11 // pred_check_branch
          %382 = sbr.rel (%p380) target = $region28
        $region27: #{vae_forward.1} parent=11 // pred_region
          _
        $region28: #{vae_forward.1} parent=11 // pred_fallthru
          _
        // Predicated region
        $region29: #{vae_forward.1} parent=11 // pred_check
          %p383 = pneg %p179
        $region30: #{vae_forward.1} parent=11 // pred_check_branch
          %385 = sbr.rel (%p383) target = $region32
        $region31: #{vae_forward.1} parent=11 // pred_region
          _
        $region32: #{vae_forward.1} parent=11 // pred_fallthru
          _
        // Predicated region
        $region33: #{vae_forward.1} parent=11 // pred_check
          %p386 = pneg %p200
        $region34: #{vae_forward.1} parent=11 // pred_check_branch
          %388 = sbr.rel (%p386) target = $region36
        $region35: #{vae_forward.1} parent=11 // pred_region
          _
        $region36: #{vae_forward.1} parent=11 // pred_fallthru
          _
        // Predicated region
        $region37: #{vae_forward.1} parent=11 // pred_check
          %p389 = pneg %p221
        $region38: #{vae_forward.1} parent=11 // pred_check_branch
          %391 = sbr.rel (%p389) target = $region40
        $region39: #{vae_forward.1} parent=11 // pred_region
          _
        $region40: #{vae_forward.1} parent=11 // pred_fallthru
          _
        // Predicated region
        $region41: #{vae_forward.1} parent=11 // pred_check
          %p392 = pneg %p242
        $region42: #{vae_forward.1} parent=11 // pred_check_branch
          %394 = sbr.rel (%p392) target = $region44
        $region43: #{vae_forward.1} parent=11 // pred_region
          _
        $region44: #{vae_forward.1} parent=11 // pred_fallthru
          _
        // Predicated region
        $region45: #{vae_forward.1} parent=11 // pred_check
          %p395 = pneg %p263
        $region46: #{vae_forward.1} parent=11 // pred_check_branch
          %397 = sbr.rel (%p395) target = $region48
        $region47: #{vae_forward.1} parent=11 // pred_region
          %s399 = ssub.s32 28672, 28672
          %400 = vsyncadd [#allocation5], %s399
          %s401 = sshll.u32 [#allocation6], 4
          %s402 = int_to_ptr.vmem [resolvable:$true] %s401
          %407 = dma.hbm_to_vmem [thread:$0]  %s10, 28672, %s402, [#allocation5], 448, 448, 28
        $region48: #{vae_forward.1} parent=11 // pred_fallthru
          _
        // Predicated region
        $region49: #{vae_forward.1} parent=11 // pred_check
          %p408 = pneg %p284
        $region50: #{vae_forward.1} parent=11 // pred_check_branch
          %410 = sbr.rel (%p408) target = $region52
        $region51: #{vae_forward.1} parent=11 // pred_region
          _
        $region52: #{vae_forward.1} parent=11 // pred_fallthru
          _
      $region12: #{vae_forward.1} parent=5 // pred_fallthru
        _
      %p411 = scmp.lt.s32.totalorder %s22, 2
      // Predicated region
      $region53: #{vae_forward.1} parent=5 // pred_check
        %p412 = pneg %p411
      $region54: #{vae_forward.1} parent=5 // pred_check_branch
        %414 = sbr.rel (%p412) target = $region56
      $region55: #{vae_forward.1} parent=5 // pred_region
        // Predicated region
        $region57: #{vae_forward.1} parent=55 // pred_check
          %p415 = pneg %p42
        $region58: #{vae_forward.1} parent=55 // pred_check_branch
          %417 = sbr.rel (%p415) target = $region60
        $region59: #{vae_forward.1} parent=55 // pred_region
          %s418 = smul.u32 2, %s22
          %p419 = scmp.lt.s32.totalorder %s418, 3
          %s420 = scalar_select %p419, %s418, 3
          %s421 = smul.addr %s420, 7
          %s422 = smul.addr %s421, 4
          %s423 = scalar_lea.vmem %s0, %s422
          %s424 = smul.u32 2, %s22
        $region60: #{vae_forward.1} parent=55 // pred_fallthru
          _
        // Predicated region
        $region61: #{vae_forward.1} parent=55 // pred_check
          %p425 = pneg %p68
        $region62: #{vae_forward.1} parent=55 // pred_check_branch
          %427 = sbr.rel (%p425) target = $region64
        $region63: #{vae_forward.1} parent=55 // pred_region
          %s428 = smul.u32 2, %s22
          %p429 = scmp.lt.s32.totalorder %s428, 3
          %s430 = scalar_select %p429, %s428, 3
          %s431 = smul.addr %s430, 8
          %s432 = scalar_lea.vmem %s1, %s431
          %s433 = smul.u32 2, %s22
        $region64: #{vae_forward.1} parent=55 // pred_fallthru
          _
      $region56: #{vae_forward.1} parent=5 // pred_fallthru
        _
      %p434 = scmp.le.s32.totalorder 1, %s22
      %p435 = scmp.lt.s32.totalorder %s22, 3
      %p436 = pnand %p434, %p435
      %p437 = pneg %p436
      // Predicated region
      $region65: #{vae_forward.1} parent=5 // pred_check
        _
      $region66: #{vae_forward.1} parent=5 // pred_check_branch
        %439 = sbr.rel (%p436) target = $region68
      $region67: #{vae_forward.1} parent=5 // pred_region
        %s440 = ssub.s32 %s22, 1
        // Predicated region
        $region69: #{vae_forward.1} parent=67 // pred_check
          %p441 = pneg %p95
        $region70: #{vae_forward.1} parent=67 // pred_check_branch
          %443 = sbr.rel (%p441) target = $region72
        $region71: #{vae_forward.1} parent=67 // pred_region
          %444 = dma.done [#allocation3], 28672
        $region72: #{vae_forward.1} parent=67 // pred_fallthru
          _
        // Predicated region
        $region73: #{vae_forward.1} parent=67 // pred_check
          %p445 = pneg %p137
        $region74: #{vae_forward.1} parent=67 // pred_check_branch
          %447 = sbr.rel (%p445) target = $region76
        $region75: #{vae_forward.1} parent=67 // pred_region
          %448 = dma.done [#allocation5], 16384
        $region76: #{vae_forward.1} parent=67 // pred_fallthru
          _
        // Predicated region
        $region77: #{vae_forward.1} parent=67 // pred_check
          %p449 = pneg %p263
        $region78: #{vae_forward.1} parent=67 // pred_check_branch
          %451 = sbr.rel (%p449) target = $region80
        $region79: #{vae_forward.1} parent=67 // pred_region
          %452 = dma.done [#allocation5], 28672
        $region80: #{vae_forward.1} parent=67 // pred_fallthru
          _
        %s453 = smul.u32 2, %s27
        %p454 = scmp.lt.s32.totalorder %s453, 3
        %s455 = scalar_select %p454, %s453, 3
        %s456 = smul.addr %s455, 7
        %s457 = smul.addr %s456, 4
        %s458 = scalar_lea.vmem %s0, %s457
        %p459 = pneg %p48
        %p460 = pneg %p45
        %s461 = smul.u32 2, %s27
        %p462 = scmp.lt.s32.totalorder %s461, 3
        %s463 = scalar_select %p462, %s461, 3
        %s464 = smul.addr %s463, 8
        %s465 = scalar_lea.vmem %s1, %s464
        %p466 = pneg %p74
        %p467 = pneg %p71
        %p468 = pneg %p95
        %p469 = pneg %p92
        %p470 = pneg %p116
        %p471 = pneg %p113
        %p472 = pneg %p137
        %p473 = pneg %p134
        %p474 = pneg %p158
        %p475 = pneg %p155
        %p476 = pneg %p179
        %p477 = pneg %p176
        %p478 = pneg %p200
        %p479 = pneg %p197
        %p480 = pneg %p221
        %p481 = pneg %p218
        %p482 = pneg %p242
        %p483 = pneg %p239
        %p484 = pneg %p263
        %p485 = pneg %p260
        %p486 = pneg %p284
        %p487 = pneg %p281
        %p488 = pneg %p310
        %p489 = pneg %p307
        %s490 = smul.u32 2, %s27
        %p491 = scmp.lt.s32.totalorder %s490, 3
        %s492 = scalar_select %p491, %s490, 3
        %s493 = smul.addr %s492, 7
        %s494 = smul.addr %s493, 4
        %s495 = scalar_lea.vmem %s12, %s494
        %p496 = pneg %p336
        %p497 = pneg %p333
        %s498 = smul.u32 2, %s27
        %p499 = scmp.lt.s32.totalorder %s498, 3
        %s500 = scalar_select %p499, %s498, 3
        %s501 = smul.addr %s500, 8
        %s502 = scalar_lea.vmem %s13, %s501
        %s503 = smul.u32 2, %s27
        %p504 = scmp.lt.s32.totalorder %s503, 3
        %s505 = scalar_select %p504, %s503, 3
        %s506 = smul.addr %s505, 7
        %s507 = smul.addr %s506, 4
        %s508 = scalar_lea.vmem %s0, %s507
        %s509 = smul.u32 2, %s27
        %s510 = smul.u32 2, %s27
        %p511 = scmp.lt.s32.totalorder %s510, 3
        %s512 = scalar_select %p511, %s510, 3
        %s513 = smul.addr %s512, 8
        %s514 = scalar_lea.vmem %s1, %s513
        %s515 = smul.u32 2, %s27
        %s516 = smul.u32 2, %s27
        %p517 = scmp.lt.s32.totalorder %s516, 3
        %s518 = scalar_select %p517, %s516, 3
        %s519 = smul.addr %s518, 7
        %s520 = smul.addr %s519, 4
        %s521 = scalar_lea.vmem %s12, %s520
        %s522 = smul.u32 2, %s27
        %s523 = smul.u32 2, %s27
        %p524 = scmp.lt.s32.totalorder %s523, 3
        %s525 = scalar_select %p524, %s523, 3
        %s526 = smul.addr %s525, 8
        %s527 = scalar_lea.vmem %s13, %s526
        %s528 = smul.u32 2, %s27
        %v530 = vld [vmem:[%s508] sm:$0xff]
        %v531 = vld [vmem:[%s508 + $0x8] sm:$0xff]
        %v532 = vld [vmem:[%s508 + $0x10] sm:$0xff]
        %v533 = vld [vmem:[%s508 + $0x18] sm:$0xf]
        %v534 = vld [vmem:[%s508 + $0x1c] sm:$0xff]
        %v535 = vld [vmem:[%s508 + $0x24] sm:$0xff]
        %v536 = vld [vmem:[%s508 + $0x2c] sm:$0xff]
        %v537 = vld [vmem:[%s508 + $0x34] sm:$0xf]
        %v538 = vld [vmem:[#allocation2] sm:$0xff]
        %v539 = vld [vmem:[#allocation2 + $0x8] sm:$0xff]
        %v540 = vld [vmem:[#allocation2 + $0x10] sm:$0xff]
        %v541 = vld [vmem:[#allocation2 + $0x18] sm:$0xff]
        %v542 = vld [vmem:[#allocation2 + $0x20] sm:$0xff]
        %v543 = vld [vmem:[#allocation2 + $0x28] sm:$0xff]
        %v544 = vld [vmem:[#allocation2 + $0x30] sm:$0xff]
        %v545 = vld [vmem:[#allocation2 + $0x38] sm:$0xff]
        %v546 = vld [vmem:[#allocation2 + $0x40] sm:$0xff]
        %v547 = vld [vmem:[#allocation2 + $0x48] sm:$0xff]
        %v548 = vld [vmem:[#allocation2 + $0x50] sm:$0xff]
        %v549 = vld [vmem:[#allocation2 + $0x58] sm:$0xff]
        %v550 = vld [vmem:[#allocation2 + $0x60] sm:$0xff]
        %v551 = vld [vmem:[#allocation2 + $0x68] sm:$0xff]
        %v552 = vld [vmem:[#allocation2 + $0x70] sm:$0xff]
        %v553 = vld [vmem:[#allocation2 + $0x78] sm:$0xff]
        %v554 = vld [vmem:[#allocation2 + $0x80] sm:$0xff]
        %v555 = vld [vmem:[#allocation2 + $0x88] sm:$0xff]
        %v556 = vld [vmem:[#allocation2 + $0x90] sm:$0xff]
        %v557 = vld [vmem:[#allocation2 + $0x98] sm:$0xff]
        %v558 = vld [vmem:[#allocation2 + $0xa0] sm:$0xff]
        %v559 = vld [vmem:[#allocation2 + $0xa8] sm:$0xff]
        %v560 = vld [vmem:[#allocation2 + $0xb0] sm:$0xff]
        %v561 = vld [vmem:[#allocation2 + $0xb8] sm:$0xff]
        %v562 = vld [vmem:[#allocation2 + $0xc0] sm:$0xff]
        %v563 = vld [vmem:[#allocation2 + $0xc8] sm:$0xff]
        %v564 = vld [vmem:[#allocation2 + $0xd0] sm:$0xff]
        %v565 = vld [vmem:[#allocation2 + $0xd8] sm:$0xff]
        %v566 = vld [vmem:[#allocation2 + $0xe0] sm:$0xff]
        %v567 = vld [vmem:[#allocation2 + $0xe8] sm:$0xff]
        %v568 = vld [vmem:[#allocation2 + $0xf0] sm:$0xff]
        %v569 = vld [vmem:[#allocation2 + $0xf8] sm:$0xff]
        %v570 = vld [vmem:[#allocation2 + $0x100] sm:$0xff]
        %v571 = vld [vmem:[#allocation2 + $0x108] sm:$0xff]
        %v572 = vld [vmem:[#allocation2 + $0x110] sm:$0xff]
        %v573 = vld [vmem:[#allocation2 + $0x118] sm:$0xff]
        %v574 = vld [vmem:[#allocation2 + $0x120] sm:$0xff]
        %v575 = vld [vmem:[#allocation2 + $0x128] sm:$0xff]
        %v576 = vld [vmem:[#allocation2 + $0x130] sm:$0xff]
        %v577 = vld [vmem:[#allocation2 + $0x138] sm:$0xff]
        %v578 = vld [vmem:[#allocation2 + $0x140] sm:$0xff]
        %v579 = vld [vmem:[#allocation2 + $0x148] sm:$0xff]
        %v580 = vld [vmem:[#allocation2 + $0x150] sm:$0xff]
        %v581 = vld [vmem:[#allocation2 + $0x158] sm:$0xff]
        %v582 = vld [vmem:[#allocation2 + $0x160] sm:$0xff]
        %v583 = vld [vmem:[#allocation2 + $0x168] sm:$0xff]
        %v584 = vld [vmem:[#allocation2 + $0x170] sm:$0xff]
        %v585 = vld [vmem:[#allocation2 + $0x178] sm:$0xff]
        %v586 = vld [vmem:[#allocation2 + $0x180] sm:$0xff]
        %v587 = vld [vmem:[#allocation2 + $0x188] sm:$0xff]
        %v588 = vld [vmem:[#allocation2 + $0x190] sm:$0xff]
        %v589 = vld [vmem:[#allocation2 + $0x198] sm:$0xff]
        %v590 = vld [vmem:[#allocation2 + $0x1a0] sm:$0xff]
        %v591 = vld [vmem:[#allocation2 + $0x1a8] sm:$0xff]
        %v592 = vld [vmem:[#allocation2 + $0x1b0] sm:$0xff]
        %v593 = vld [vmem:[#allocation2 + $0x1b8] sm:$0xff]
        %v594 = vld [vmem:[#allocation2 + $0x1c0] sm:$0xff]
        %v595 = vld [vmem:[#allocation2 + $0x1c8] sm:$0xff]
        %v596 = vld [vmem:[#allocation2 + $0x1d0] sm:$0xff]
        %v597 = vld [vmem:[#allocation2 + $0x1d8] sm:$0xff]
        %v598 = vld [vmem:[#allocation2 + $0x1e0] sm:$0xff]
        %v599 = vld [vmem:[#allocation2 + $0x1e8] sm:$0xff]
        %v600 = vld [vmem:[#allocation2 + $0x1f0] sm:$0xff]
        %v601 = vld [vmem:[#allocation2 + $0x1f8] sm:$0xff]
        %v602 = vld [vmem:[#allocation2 + $0x200] sm:$0xff]
        %v603 = vld [vmem:[#allocation2 + $0x208] sm:$0xff]
        %v604 = vld [vmem:[#allocation2 + $0x210] sm:$0xff]
        %v605 = vld [vmem:[#allocation2 + $0x218] sm:$0xff]
        %v606 = vld [vmem:[#allocation2 + $0x220] sm:$0xff]
        %v607 = vld [vmem:[#allocation2 + $0x228] sm:$0xff]
        %v608 = vld [vmem:[#allocation2 + $0x230] sm:$0xff]
        %v609 = vld [vmem:[#allocation2 + $0x238] sm:$0xff]
        %v610 = vld [vmem:[#allocation2 + $0x240] sm:$0xff]
        %v611 = vld [vmem:[#allocation2 + $0x248] sm:$0xff]
        %v612 = vld [vmem:[#allocation2 + $0x250] sm:$0xff]
        %v613 = vld [vmem:[#allocation2 + $0x258] sm:$0xff]
        %v614 = vld [vmem:[#allocation2 + $0x260] sm:$0xff]
        %v615 = vld [vmem:[#allocation2 + $0x268] sm:$0xff]
        %v616 = vld [vmem:[#allocation2 + $0x270] sm:$0xff]
        %v617 = vld [vmem:[#allocation2 + $0x278] sm:$0xff]
        %v618 = vld [vmem:[#allocation2 + $0x280] sm:$0xff]
        %v619 = vld [vmem:[#allocation2 + $0x288] sm:$0xff]
        %v620 = vld [vmem:[#allocation2 + $0x290] sm:$0xff]
        %v621 = vld [vmem:[#allocation2 + $0x298] sm:$0xff]
        %v622 = vld [vmem:[#allocation2 + $0x2a0] sm:$0xff]
        %v623 = vld [vmem:[#allocation2 + $0x2a8] sm:$0xff]
        %v624 = vld [vmem:[#allocation2 + $0x2b0] sm:$0xff]
        %v625 = vld [vmem:[#allocation2 + $0x2b8] sm:$0xff]
        %v626 = vld [vmem:[#allocation2 + $0x2c0] sm:$0xff]
        %v627 = vld [vmem:[#allocation2 + $0x2c8] sm:$0xff]
        %v628 = vld [vmem:[#allocation2 + $0x2d0] sm:$0xff]
        %v629 = vld [vmem:[#allocation2 + $0x2d8] sm:$0xff]
        %v630 = vld [vmem:[#allocation2 + $0x2e0] sm:$0xff]
        %v631 = vld [vmem:[#allocation2 + $0x2e8] sm:$0xff]
        %v632 = vld [vmem:[#allocation2 + $0x2f0] sm:$0xff]
        %v633 = vld [vmem:[#allocation2 + $0x2f8] sm:$0xff]
        %v634 = vld [vmem:[#allocation2 + $0x300] sm:$0xff]
        %v635 = vld [vmem:[#allocation2 + $0x308] sm:$0xff]
        %v636 = vld [vmem:[#allocation2 + $0x310] sm:$0xff]
        %v637 = vld [vmem:[#allocation2 + $0x318] sm:$0xff]
        %v638 = vld [vmem:[#allocation2 + $0x320] sm:$0xff]
        %v639 = vld [vmem:[#allocation2 + $0x328] sm:$0xff]
        %v640 = vld [vmem:[#allocation2 + $0x330] sm:$0xff]
        %v641 = vld [vmem:[#allocation2 + $0x338] sm:$0xff]
        %v642 = vld [vmem:[#allocation2 + $0x340] sm:$0xff]
        %v643 = vld [vmem:[#allocation2 + $0x348] sm:$0xff]
        %v644 = vld [vmem:[#allocation2 + $0x350] sm:$0xff]
        %v645 = vld [vmem:[#allocation2 + $0x358] sm:$0xff]
        %v646 = vld [vmem:[#allocation2 + $0x360] sm:$0xff]
        %v647 = vld [vmem:[#allocation2 + $0x368] sm:$0xff]
        %v648 = vld [vmem:[#allocation2 + $0x370] sm:$0xff]
        %v649 = vld [vmem:[#allocation2 + $0x378] sm:$0xff]
        %v650 = vld [vmem:[#allocation2 + $0x380] sm:$0xff]
        %v651 = vld [vmem:[#allocation2 + $0x388] sm:$0xff]
        %v652 = vld [vmem:[#allocation2 + $0x390] sm:$0xff]
        %v653 = vld [vmem:[#allocation2 + $0x398] sm:$0xff]
        %v654 = vld [vmem:[#allocation2 + $0x3a0] sm:$0xff]
        %v655 = vld [vmem:[#allocation2 + $0x3a8] sm:$0xff]
        %v656 = vld [vmem:[#allocation2 + $0x3b0] sm:$0xff]
        %v657 = vld [vmem:[#allocation2 + $0x3b8] sm:$0xff]
        %v658 = vld [vmem:[#allocation2 + $0x3c0] sm:$0xff]
        %v659 = vld [vmem:[#allocation2 + $0x3c8] sm:$0xff]
        %v660 = vld [vmem:[#allocation2 + $0x3d0] sm:$0xff]
        %v661 = vld [vmem:[#allocation2 + $0x3d8] sm:$0xff]
        %v662 = vld [vmem:[#allocation2 + $0x3e0] sm:$0xff]
        %v663 = vld [vmem:[#allocation2 + $0x3e8] sm:$0xff]
        %v664 = vld [vmem:[#allocation2 + $0x3f0] sm:$0xff]
        %v665 = vld [vmem:[#allocation2 + $0x3f8] sm:$0xff]
        %v666 = vld [vmem:[#allocation2 + $0x400] sm:$0xff]
        %v667 = vld [vmem:[#allocation2 + $0x408] sm:$0xff]
        %v668 = vld [vmem:[#allocation2 + $0x410] sm:$0xff]
        %v669 = vld [vmem:[#allocation2 + $0x418] sm:$0xff]
        %v670 = vld [vmem:[#allocation2 + $0x420] sm:$0xff]
        %v671 = vld [vmem:[#allocation2 + $0x428] sm:$0xff]
        %v672 = vld [vmem:[#allocation2 + $0x430] sm:$0xff]
        %v673 = vld [vmem:[#allocation2 + $0x438] sm:$0xff]
        %v674 = vld [vmem:[#allocation2 + $0x440] sm:$0xff]
        %v675 = vld [vmem:[#allocation2 + $0x448] sm:$0xff]
        %v676 = vld [vmem:[#allocation2 + $0x450] sm:$0xff]
        %v677 = vld [vmem:[#allocation2 + $0x458] sm:$0xff]
        %v678 = vld [vmem:[#allocation2 + $0x460] sm:$0xff]
        %v679 = vld [vmem:[#allocation2 + $0x468] sm:$0xff]
        %v680 = vld [vmem:[#allocation2 + $0x470] sm:$0xff]
        %v681 = vld [vmem:[#allocation2 + $0x478] sm:$0xff]
        %v682 = vld [vmem:[#allocation2 + $0x480] sm:$0xff]
        %v683 = vld [vmem:[#allocation2 + $0x488] sm:$0xff]
        %v684 = vld [vmem:[#allocation2 + $0x490] sm:$0xff]
        %v685 = vld [vmem:[#allocation2 + $0x498] sm:$0xff]
        %v686 = vld [vmem:[#allocation2 + $0x4a0] sm:$0xff]
        %v687 = vld [vmem:[#allocation2 + $0x4a8] sm:$0xff]
        %v688 = vld [vmem:[#allocation2 + $0x4b0] sm:$0xff]
        %v689 = vld [vmem:[#allocation2 + $0x4b8] sm:$0xff]
        %v690 = vld [vmem:[#allocation2 + $0x4c0] sm:$0xff]
        %v691 = vld [vmem:[#allocation2 + $0x4c8] sm:$0xff]
        %v692 = vld [vmem:[#allocation2 + $0x4d0] sm:$0xff]
        %v693 = vld [vmem:[#allocation2 + $0x4d8] sm:$0xff]
        %v694 = vld [vmem:[#allocation2 + $0x4e0] sm:$0xff]
        %v695 = vld [vmem:[#allocation2 + $0x4e8] sm:$0xff]
        %v696 = vld [vmem:[#allocation2 + $0x4f0] sm:$0xff]
        %v697 = vld [vmem:[#allocation2 + $0x4f8] sm:$0xff]
        %v698 = vld [vmem:[#allocation2 + $0x500] sm:$0xff]
        %v699 = vld [vmem:[#allocation2 + $0x508] sm:$0xff]
        %v700 = vld [vmem:[#allocation2 + $0x510] sm:$0xff]
        %v701 = vld [vmem:[#allocation2 + $0x518] sm:$0xff]
        %v702 = vld [vmem:[#allocation2 + $0x520] sm:$0xff]
        %v703 = vld [vmem:[#allocation2 + $0x528] sm:$0xff]
        %v704 = vld [vmem:[#allocation2 + $0x530] sm:$0xff]
        %v705 = vld [vmem:[#allocation2 + $0x538] sm:$0xff]
        %v706 = vld [vmem:[#allocation2 + $0x540] sm:$0xff]
        %v707 = vld [vmem:[#allocation2 + $0x548] sm:$0xff]
        %v708 = vld [vmem:[#allocation2 + $0x550] sm:$0xff]
        %v709 = vld [vmem:[#allocation2 + $0x558] sm:$0xff]
        %v710 = vld [vmem:[#allocation2 + $0x560] sm:$0xff]
        %v711 = vld [vmem:[#allocation2 + $0x568] sm:$0xff]
        %v712 = vld [vmem:[#allocation2 + $0x570] sm:$0xff]
        %v713 = vld [vmem:[#allocation2 + $0x578] sm:$0xff]
        %v714 = vld [vmem:[#allocation2 + $0x580] sm:$0xff]
        %v715 = vld [vmem:[#allocation2 + $0x588] sm:$0xff]
        %v716 = vld [vmem:[#allocation2 + $0x590] sm:$0xff]
        %v717 = vld [vmem:[#allocation2 + $0x598] sm:$0xff]
        %v718 = vld [vmem:[#allocation2 + $0x5a0] sm:$0xff]
        %v719 = vld [vmem:[#allocation2 + $0x5a8] sm:$0xff]
        %v720 = vld [vmem:[#allocation2 + $0x5b0] sm:$0xff]
        %v721 = vld [vmem:[#allocation2 + $0x5b8] sm:$0xff]
        %v722 = vld [vmem:[#allocation2 + $0x5c0] sm:$0xff]
        %v723 = vld [vmem:[#allocation2 + $0x5c8] sm:$0xff]
        %v724 = vld [vmem:[#allocation2 + $0x5d0] sm:$0xff]
        %v725 = vld [vmem:[#allocation2 + $0x5d8] sm:$0xff]
        %v726 = vld [vmem:[#allocation2 + $0x5e0] sm:$0xff]
        %v727 = vld [vmem:[#allocation2 + $0x5e8] sm:$0xff]
        %v728 = vld [vmem:[#allocation2 + $0x5f0] sm:$0xff]
        %v729 = vld [vmem:[#allocation2 + $0x5f8] sm:$0xff]
        %v730 = vld [vmem:[#allocation2 + $0x600] sm:$0xff]
        %v731 = vld [vmem:[#allocation2 + $0x608] sm:$0xff]
        %v732 = vld [vmem:[#allocation2 + $0x610] sm:$0xff]
        %v733 = vld [vmem:[#allocation2 + $0x618] sm:$0xff]
        %v734 = vld [vmem:[#allocation2 + $0x620] sm:$0xff]
        %v735 = vld [vmem:[#allocation2 + $0x628] sm:$0xff]
        %v736 = vld [vmem:[#allocation2 + $0x630] sm:$0xff]
        %v737 = vld [vmem:[#allocation2 + $0x638] sm:$0xff]
        %v738 = vld [vmem:[#allocation2 + $0x640] sm:$0xff]
        %v739 = vld [vmem:[#allocation2 + $0x648] sm:$0xff]
        %v740 = vld [vmem:[#allocation2 + $0x650] sm:$0xff]
        %v741 = vld [vmem:[#allocation2 + $0x658] sm:$0xff]
        %v742 = vld [vmem:[#allocation2 + $0x660] sm:$0xff]
        %v743 = vld [vmem:[#allocation2 + $0x668] sm:$0xff]
        %v744 = vld [vmem:[#allocation2 + $0x670] sm:$0xff]
        %v745 = vld [vmem:[#allocation2 + $0x678] sm:$0xff]
        %v746 = vld [vmem:[#allocation2 + $0x680] sm:$0xff]
        %v747 = vld [vmem:[#allocation2 + $0x688] sm:$0xff]
        %v748 = vld [vmem:[#allocation2 + $0x690] sm:$0xff]
        %v749 = vld [vmem:[#allocation2 + $0x698] sm:$0xff]
        %v750 = vld [vmem:[#allocation2 + $0x6a0] sm:$0xff]
        %v751 = vld [vmem:[#allocation2 + $0x6a8] sm:$0xff]
        %v752 = vld [vmem:[#allocation2 + $0x6b0] sm:$0xff]
        %v753 = vld [vmem:[#allocation2 + $0x6b8] sm:$0xff]
        %v754 = vld [vmem:[#allocation2 + $0x6c0] sm:$0xff]
        %v755 = vld [vmem:[#allocation2 + $0x6c8] sm:$0xff]
        %v756 = vld [vmem:[#allocation2 + $0x6d0] sm:$0xff]
        %v757 = vld [vmem:[#allocation2 + $0x6d8] sm:$0xff]
        %v758 = vld [vmem:[#allocation2 + $0x6e0] sm:$0xff]
        %v759 = vld [vmem:[#allocation2 + $0x6e8] sm:$0xff]
        %v760 = vld [vmem:[#allocation2 + $0x6f0] sm:$0xff]
        %v761 = vld [vmem:[#allocation2 + $0x6f8] sm:$0xff]
        %v762 = vld [vmem:[%s3] sm:$0xf]
        %v764 = vlaneseq
        %v765 = vshrl.u32 %v764, 7
        %v766 = vsub.s32 0, %v765
        %v767 = vrot.slane %v762, %v766
        %v768 = vlaneseq
        %v769 = vshrl.u32 %v768, 7
        %v770 = vsub.s32 1, %v769
        %v771 = vrot.slane %v762, %v770
        %v772 = vlaneseq
        %v773 = vshrl.u32 %v772, 7
        %v774 = vsub.s32 2, %v773
        %v775 = vrot.slane %v762, %v774
        %v776 = vlaneseq
        %v777 = vshrl.u32 %v776, 7
        %v778 = vsub.s32 3, %v777
        %v779 = vrot.slane %v762, %v778
        %v792 = vunpack.c.l.b16 %v530
        %v793 = vunpack.c.h.b16 %v530
        %v794 = vunpack.c.l.b16 %v531
        %v795 = vunpack.c.h.b16 %v531
        %v796 = vunpack.c.l.b16 %v532
        %v797 = vunpack.c.h.b16 %v532
        %v798 = vunpack.c.l.b16 %v533
        %v799 = vunpack.c.l.b16 %v534
        %v800 = vunpack.c.h.b16 %v534
        %v801 = vunpack.c.l.b16 %v535
        %v802 = vunpack.c.h.b16 %v535
        %v803 = vunpack.c.l.b16 %v536
        %v804 = vunpack.c.h.b16 %v536
        %v805 = vunpack.c.l.b16 %v537
        %v806 = vpack.c.b16 %v799, %v792
        %v807 = vpack.c.b16 %v800, %v793
        %v808 = vpack.c.b16 %v801, %v794
        %v809 = vpack.c.b16 %v802, %v795
        %v810 = vpack.c.b16 %v803, %v796
        %v811 = vpack.c.b16 %v804, %v797
        %v812 = vpack.c.b16 %v805, %v798
        %v1044 = vunpack.c.l.b16 %v538
        %v1045 = vunpack.c.h.b16 %v538
        %v1046 = vunpack.c.l.b16 %v539
        %v1047 = vunpack.c.h.b16 %v539
        %v1048 = vunpack.c.l.b16 %v540
        %v1049 = vunpack.c.h.b16 %v540
        %v1050 = vunpack.c.l.b16 %v541
        %v1051 = vunpack.c.h.b16 %v541
        %v1052 = vunpack.c.l.b16 %v542
        %v1053 = vunpack.c.h.b16 %v542
        %v1054 = vunpack.c.l.b16 %v543
        %v1055 = vunpack.c.h.b16 %v543
        %v1056 = vunpack.c.l.b16 %v544
        %v1057 = vunpack.c.h.b16 %v544
        %v1058 = vunpack.c.l.b16 %v545
        %v1059 = vunpack.c.h.b16 %v545
        %v1060 = vunpack.c.l.b16 %v546
        %v1061 = vunpack.c.h.b16 %v546
        %v1062 = vunpack.c.l.b16 %v547
        %v1063 = vunpack.c.h.b16 %v547
        %v1064 = vunpack.c.l.b16 %v548
        %v1065 = vunpack.c.h.b16 %v548
        %v1066 = vunpack.c.l.b16 %v549
        %v1067 = vunpack.c.h.b16 %v549
        %v1068 = vunpack.c.l.b16 %v550
        %v1069 = vunpack.c.h.b16 %v550
        %v1070 = vunpack.c.l.b16 %v551
        %v1071 = vunpack.c.h.b16 %v551
        %v1072 = vunpack.c.l.b16 %v552
        %v1073 = vunpack.c.h.b16 %v552
        %v1074 = vunpack.c.l.b16 %v553
        %v1075 = vunpack.c.h.b16 %v553
        %v1076 = vunpack.c.l.b16 %v554
        %v1077 = vunpack.c.h.b16 %v554
        %v1078 = vunpack.c.l.b16 %v555
        %v1079 = vunpack.c.h.b16 %v555
        %v1080 = vunpack.c.l.b16 %v556
        %v1081 = vunpack.c.h.b16 %v556
        %v1082 = vunpack.c.l.b16 %v557
        %v1083 = vunpack.c.h.b16 %v557
        %v1084 = vunpack.c.l.b16 %v558
        %v1085 = vunpack.c.h.b16 %v558
        %v1086 = vunpack.c.l.b16 %v559
        %v1087 = vunpack.c.h.b16 %v559
        %v1088 = vunpack.c.l.b16 %v560
        %v1089 = vunpack.c.h.b16 %v560
        %v1090 = vunpack.c.l.b16 %v561
        %v1091 = vunpack.c.h.b16 %v561
        %v1092 = vunpack.c.l.b16 %v562
        %v1093 = vunpack.c.h.b16 %v562
        %v1094 = vunpack.c.l.b16 %v563
        %v1095 = vunpack.c.h.b16 %v563
        %v1096 = vunpack.c.l.b16 %v564
        %v1097 = vunpack.c.h.b16 %v564
        %v1098 = vunpack.c.l.b16 %v565
        %v1099 = vunpack.c.h.b16 %v565
        %v1100 = vunpack.c.l.b16 %v566
        %v1101 = vunpack.c.h.b16 %v566
        %v1102 = vunpack.c.l.b16 %v567
        %v1103 = vunpack.c.h.b16 %v567
        %v1104 = vunpack.c.l.b16 %v568
        %v1105 = vunpack.c.h.b16 %v568
        %v1106 = vunpack.c.l.b16 %v569
        %v1107 = vunpack.c.h.b16 %v569
        %v1108 = vunpack.c.l.b16 %v570
        %v1109 = vunpack.c.h.b16 %v570
        %v1110 = vunpack.c.l.b16 %v571
        %v1111 = vunpack.c.h.b16 %v571
        %v1112 = vunpack.c.l.b16 %v572
        %v1113 = vunpack.c.h.b16 %v572
        %v1114 = vunpack.c.l.b16 %v573
        %v1115 = vunpack.c.h.b16 %v573
        %v1116 = vunpack.c.l.b16 %v574
        %v1117 = vunpack.c.h.b16 %v574
        %v1118 = vunpack.c.l.b16 %v575
        %v1119 = vunpack.c.h.b16 %v575
        %v1120 = vunpack.c.l.b16 %v576
        %v1121 = vunpack.c.h.b16 %v576
        %v1122 = vunpack.c.l.b16 %v577
        %v1123 = vunpack.c.h.b16 %v577
        %v1124 = vunpack.c.l.b16 %v578
        %v1125 = vunpack.c.h.b16 %v578
        %v1126 = vunpack.c.l.b16 %v579
        %v1127 = vunpack.c.h.b16 %v579
        %v1128 = vunpack.c.l.b16 %v580
        %v1129 = vunpack.c.h.b16 %v580
        %v1130 = vunpack.c.l.b16 %v581
        %v1131 = vunpack.c.h.b16 %v581
        %v1132 = vunpack.c.l.b16 %v582
        %v1133 = vunpack.c.h.b16 %v582
        %v1134 = vunpack.c.l.b16 %v583
        %v1135 = vunpack.c.h.b16 %v583
        %v1136 = vunpack.c.l.b16 %v584
        %v1137 = vunpack.c.h.b16 %v584
        %v1138 = vunpack.c.l.b16 %v585
        %v1139 = vunpack.c.h.b16 %v585
        %v1140 = vunpack.c.l.b16 %v586
        %v1141 = vunpack.c.h.b16 %v586
        %v1142 = vunpack.c.l.b16 %v587
        %v1143 = vunpack.c.h.b16 %v587
        %v1144 = vunpack.c.l.b16 %v588
        %v1145 = vunpack.c.h.b16 %v588
        %v1146 = vunpack.c.l.b16 %v589
        %v1147 = vunpack.c.h.b16 %v589
        %v1148 = vunpack.c.l.b16 %v590
        %v1149 = vunpack.c.h.b16 %v590
        %v1150 = vunpack.c.l.b16 %v591
        %v1151 = vunpack.c.h.b16 %v591
        %v1152 = vunpack.c.l.b16 %v592
        %v1153 = vunpack.c.h.b16 %v592
        %v1154 = vunpack.c.l.b16 %v593
        %v1155 = vunpack.c.h.b16 %v593
        %v1156 = vunpack.c.l.b16 %v594
        %v1157 = vunpack.c.h.b16 %v594
        %v1158 = vunpack.c.l.b16 %v595
        %v1159 = vunpack.c.h.b16 %v595
        %v1160 = vunpack.c.l.b16 %v596
        %v1161 = vunpack.c.h.b16 %v596
        %v1162 = vunpack.c.l.b16 %v597
        %v1163 = vunpack.c.h.b16 %v597
        %v1164 = vunpack.c.l.b16 %v598
        %v1165 = vunpack.c.h.b16 %v598
        %v1166 = vunpack.c.l.b16 %v599
        %v1167 = vunpack.c.h.b16 %v599
        %v1168 = vunpack.c.l.b16 %v600
        %v1169 = vunpack.c.h.b16 %v600
        %v1170 = vunpack.c.l.b16 %v601
        %v1171 = vunpack.c.h.b16 %v601
        %v1172 = vunpack.c.l.b16 %v602
        %v1173 = vunpack.c.h.b16 %v602
        %v1174 = vunpack.c.l.b16 %v603
        %v1175 = vunpack.c.h.b16 %v603
        %v1176 = vunpack.c.l.b16 %v604
        %v1177 = vunpack.c.h.b16 %v604
        %v1178 = vunpack.c.l.b16 %v605
        %v1179 = vunpack.c.h.b16 %v605
        %v1180 = vunpack.c.l.b16 %v606
        %v1181 = vunpack.c.h.b16 %v606
        %v1182 = vunpack.c.l.b16 %v607
        %v1183 = vunpack.c.h.b16 %v607
        %v1184 = vunpack.c.l.b16 %v608
        %v1185 = vunpack.c.h.b16 %v608
        %v1186 = vunpack.c.l.b16 %v609
        %v1187 = vunpack.c.h.b16 %v609
        %v1188 = vunpack.c.l.b16 %v610
        %v1189 = vunpack.c.h.b16 %v610
        %v1190 = vunpack.c.l.b16 %v611
        %v1191 = vunpack.c.h.b16 %v611
        %v1192 = vunpack.c.l.b16 %v612
        %v1193 = vunpack.c.h.b16 %v612
        %v1194 = vunpack.c.l.b16 %v613
        %v1195 = vunpack.c.h.b16 %v613
        %v1196 = vunpack.c.l.b16 %v614
        %v1197 = vunpack.c.h.b16 %v614
        %v1198 = vunpack.c.l.b16 %v615
        %v1199 = vunpack.c.h.b16 %v615
        %v1200 = vunpack.c.l.b16 %v616
        %v1201 = vunpack.c.h.b16 %v616
        %v1202 = vunpack.c.l.b16 %v617
        %v1203 = vunpack.c.h.b16 %v617
        %v1204 = vunpack.c.l.b16 %v618
        %v1205 = vunpack.c.h.b16 %v618
        %v1206 = vunpack.c.l.b16 %v619
        %v1207 = vunpack.c.h.b16 %v619
        %v1208 = vunpack.c.l.b16 %v620
        %v1209 = vunpack.c.h.b16 %v620
        %v1210 = vunpack.c.l.b16 %v621
        %v1211 = vunpack.c.h.b16 %v621
        %v1212 = vunpack.c.l.b16 %v622
        %v1213 = vunpack.c.h.b16 %v622
        %v1214 = vunpack.c.l.b16 %v623
        %v1215 = vunpack.c.h.b16 %v623
        %v1216 = vunpack.c.l.b16 %v624
        %v1217 = vunpack.c.h.b16 %v624
        %v1218 = vunpack.c.l.b16 %v625
        %v1219 = vunpack.c.h.b16 %v625
        %v1220 = vunpack.c.l.b16 %v626
        %v1221 = vunpack.c.h.b16 %v626
        %v1222 = vunpack.c.l.b16 %v627
        %v1223 = vunpack.c.h.b16 %v627
        %v1224 = vunpack.c.l.b16 %v628
        %v1225 = vunpack.c.h.b16 %v628
        %v1226 = vunpack.c.l.b16 %v629
        %v1227 = vunpack.c.h.b16 %v629
        %v1228 = vunpack.c.l.b16 %v630
        %v1229 = vunpack.c.h.b16 %v630
        %v1230 = vunpack.c.l.b16 %v631
        %v1231 = vunpack.c.h.b16 %v631
        %v1232 = vunpack.c.l.b16 %v632
        %v1233 = vunpack.c.h.b16 %v632
        %v1234 = vunpack.c.l.b16 %v633
        %v1235 = vunpack.c.h.b16 %v633
        %v1236 = vunpack.c.l.b16 %v634
        %v1237 = vunpack.c.h.b16 %v634
        %v1238 = vunpack.c.l.b16 %v635
        %v1239 = vunpack.c.h.b16 %v635
        %v1240 = vunpack.c.l.b16 %v636
        %v1241 = vunpack.c.h.b16 %v636
        %v1242 = vunpack.c.l.b16 %v637
        %v1243 = vunpack.c.h.b16 %v637
        %v1244 = vunpack.c.l.b16 %v638
        %v1245 = vunpack.c.h.b16 %v638
        %v1246 = vunpack.c.l.b16 %v639
        %v1247 = vunpack.c.h.b16 %v639
        %v1248 = vunpack.c.l.b16 %v640
        %v1249 = vunpack.c.h.b16 %v640
        %v1250 = vunpack.c.l.b16 %v641
        %v1251 = vunpack.c.h.b16 %v641
        %v1252 = vunpack.c.l.b16 %v642
        %v1253 = vunpack.c.h.b16 %v642
        %v1254 = vunpack.c.l.b16 %v643
        %v1255 = vunpack.c.h.b16 %v643
        %v1256 = vunpack.c.l.b16 %v644
        %v1257 = vunpack.c.h.b16 %v644
        %v1258 = vunpack.c.l.b16 %v645
        %v1259 = vunpack.c.h.b16 %v645
        %v1260 = vunpack.c.l.b16 %v646
        %v1261 = vunpack.c.h.b16 %v646
        %v1262 = vunpack.c.l.b16 %v647
        %v1263 = vunpack.c.h.b16 %v647
        %v1264 = vunpack.c.l.b16 %v648
        %v1265 = vunpack.c.h.b16 %v648
        %v1266 = vunpack.c.l.b16 %v649
        %v1267 = vunpack.c.h.b16 %v649
        %v1268 = vunpack.c.l.b16 %v650
        %v1269 = vunpack.c.h.b16 %v650
        %v1270 = vunpack.c.l.b16 %v651
        %v1271 = vunpack.c.h.b16 %v651
        %v1272 = vunpack.c.l.b16 %v652
        %v1273 = vunpack.c.h.b16 %v652
        %v1274 = vunpack.c.l.b16 %v653
        %v1275 = vunpack.c.h.b16 %v653
        %v1276 = vunpack.c.l.b16 %v654
        %v1277 = vunpack.c.h.b16 %v654
        %v1278 = vunpack.c.l.b16 %v655
        %v1279 = vunpack.c.h.b16 %v655
        %v1280 = vunpack.c.l.b16 %v656
        %v1281 = vunpack.c.h.b16 %v656
        %v1282 = vunpack.c.l.b16 %v657
        %v1283 = vunpack.c.h.b16 %v657
        %v1284 = vunpack.c.l.b16 %v658
        %v1285 = vunpack.c.h.b16 %v658
        %v1286 = vunpack.c.l.b16 %v659
        %v1287 = vunpack.c.h.b16 %v659
        %v1288 = vunpack.c.l.b16 %v660
        %v1289 = vunpack.c.h.b16 %v660
        %v1290 = vunpack.c.l.b16 %v661
        %v1291 = vunpack.c.h.b16 %v661
        %v1292 = vunpack.c.l.b16 %v662
        %v1293 = vunpack.c.h.b16 %v662
        %v1294 = vunpack.c.l.b16 %v663
        %v1295 = vunpack.c.h.b16 %v663
        %v1296 = vunpack.c.l.b16 %v664
        %v1297 = vunpack.c.h.b16 %v664
        %v1298 = vunpack.c.l.b16 %v665
        %v1299 = vunpack.c.h.b16 %v665
        %v1300 = vunpack.c.l.b16 %v666
        %v1301 = vunpack.c.h.b16 %v666
        %v1302 = vunpack.c.l.b16 %v667
        %v1303 = vunpack.c.h.b16 %v667
        %v1304 = vunpack.c.l.b16 %v668
        %v1305 = vunpack.c.h.b16 %v668
        %v1306 = vunpack.c.l.b16 %v669
        %v1307 = vunpack.c.h.b16 %v669
        %v1308 = vunpack.c.l.b16 %v670
        %v1309 = vunpack.c.h.b16 %v670
        %v1310 = vunpack.c.l.b16 %v671
        %v1311 = vunpack.c.h.b16 %v671
        %v1312 = vunpack.c.l.b16 %v672
        %v1313 = vunpack.c.h.b16 %v672
        %v1314 = vunpack.c.l.b16 %v673
        %v1315 = vunpack.c.h.b16 %v673
        %v1316 = vunpack.c.l.b16 %v674
        %v1317 = vunpack.c.h.b16 %v674
        %v1318 = vunpack.c.l.b16 %v675
        %v1319 = vunpack.c.h.b16 %v675
        %v1320 = vunpack.c.l.b16 %v676
        %v1321 = vunpack.c.h.b16 %v676
        %v1322 = vunpack.c.l.b16 %v677
        %v1323 = vunpack.c.h.b16 %v677
        %v1324 = vunpack.c.l.b16 %v678
        %v1325 = vunpack.c.h.b16 %v678
        %v1326 = vunpack.c.l.b16 %v679
        %v1327 = vunpack.c.h.b16 %v679
        %v1328 = vunpack.c.l.b16 %v680
        %v1329 = vunpack.c.h.b16 %v680
        %v1330 = vunpack.c.l.b16 %v681
        %v1331 = vunpack.c.h.b16 %v681
        %v1332 = vunpack.c.l.b16 %v682
        %v1333 = vunpack.c.h.b16 %v682
        %v1334 = vunpack.c.l.b16 %v683
        %v1335 = vunpack.c.h.b16 %v683
        %v1336 = vunpack.c.l.b16 %v684
        %v1337 = vunpack.c.h.b16 %v684
        %v1338 = vunpack.c.l.b16 %v685
        %v1339 = vunpack.c.h.b16 %v685
        %v1340 = vunpack.c.l.b16 %v686
        %v1341 = vunpack.c.h.b16 %v686
        %v1342 = vunpack.c.l.b16 %v687
        %v1343 = vunpack.c.h.b16 %v687
        %v1344 = vunpack.c.l.b16 %v688
        %v1345 = vunpack.c.h.b16 %v688
        %v1346 = vunpack.c.l.b16 %v689
        %v1347 = vunpack.c.h.b16 %v689
        %v1348 = vunpack.c.l.b16 %v690
        %v1349 = vunpack.c.h.b16 %v690
        %v1350 = vunpack.c.l.b16 %v691
        %v1351 = vunpack.c.h.b16 %v691
        %v1352 = vunpack.c.l.b16 %v692
        %v1353 = vunpack.c.h.b16 %v692
        %v1354 = vunpack.c.l.b16 %v693
        %v1355 = vunpack.c.h.b16 %v693
        %v1356 = vunpack.c.l.b16 %v694
        %v1357 = vunpack.c.h.b16 %v694
        %v1358 = vunpack.c.l.b16 %v695
        %v1359 = vunpack.c.h.b16 %v695
        %v1360 = vunpack.c.l.b16 %v696
        %v1361 = vunpack.c.h.b16 %v696
        %v1362 = vunpack.c.l.b16 %v697
        %v1363 = vunpack.c.h.b16 %v697
        %v1364 = vunpack.c.l.b16 %v698
        %v1365 = vunpack.c.h.b16 %v698
        %v1366 = vunpack.c.l.b16 %v699
        %v1367 = vunpack.c.h.b16 %v699
        %v1368 = vunpack.c.l.b16 %v700
        %v1369 = vunpack.c.h.b16 %v700
        %v1370 = vunpack.c.l.b16 %v701
        %v1371 = vunpack.c.h.b16 %v701
        %v1372 = vunpack.c.l.b16 %v702
        %v1373 = vunpack.c.h.b16 %v702
        %v1374 = vunpack.c.l.b16 %v703
        %v1375 = vunpack.c.h.b16 %v703
        %v1376 = vunpack.c.l.b16 %v704
        %v1377 = vunpack.c.h.b16 %v704
        %v1378 = vunpack.c.l.b16 %v705
        %v1379 = vunpack.c.h.b16 %v705
        %v1380 = vunpack.c.l.b16 %v706
        %v1381 = vunpack.c.h.b16 %v706
        %v1382 = vunpack.c.l.b16 %v707
        %v1383 = vunpack.c.h.b16 %v707
        %v1384 = vunpack.c.l.b16 %v708
        %v1385 = vunpack.c.h.b16 %v708
        %v1386 = vunpack.c.l.b16 %v709
        %v1387 = vunpack.c.h.b16 %v709
        %v1388 = vunpack.c.l.b16 %v710
        %v1389 = vunpack.c.h.b16 %v710
        %v1390 = vunpack.c.l.b16 %v711
        %v1391 = vunpack.c.h.b16 %v711
        %v1392 = vunpack.c.l.b16 %v712
        %v1393 = vunpack.c.h.b16 %v712
        %v1394 = vunpack.c.l.b16 %v713
        %v1395 = vunpack.c.h.b16 %v713
        %v1396 = vunpack.c.l.b16 %v714
        %v1397 = vunpack.c.h.b16 %v714
        %v1398 = vunpack.c.l.b16 %v715
        %v1399 = vunpack.c.h.b16 %v715
        %v1400 = vunpack.c.l.b16 %v716
        %v1401 = vunpack.c.h.b16 %v716
        %v1402 = vunpack.c.l.b16 %v717
        %v1403 = vunpack.c.h.b16 %v717
        %v1404 = vunpack.c.l.b16 %v718
        %v1405 = vunpack.c.h.b16 %v718
        %v1406 = vunpack.c.l.b16 %v719
        %v1407 = vunpack.c.h.b16 %v719
        %v1408 = vunpack.c.l.b16 %v720
        %v1409 = vunpack.c.h.b16 %v720
        %v1410 = vunpack.c.l.b16 %v721
        %v1411 = vunpack.c.h.b16 %v721
        %v1412 = vunpack.c.l.b16 %v722
        %v1413 = vunpack.c.h.b16 %v722
        %v1414 = vunpack.c.l.b16 %v723
        %v1415 = vunpack.c.h.b16 %v723
        %v1416 = vunpack.c.l.b16 %v724
        %v1417 = vunpack.c.h.b16 %v724
        %v1418 = vunpack.c.l.b16 %v725
        %v1419 = vunpack.c.h.b16 %v725
        %v1420 = vunpack.c.l.b16 %v726
        %v1421 = vunpack.c.h.b16 %v726
        %v1422 = vunpack.c.l.b16 %v727
        %v1423 = vunpack.c.h.b16 %v727
        %v1424 = vunpack.c.l.b16 %v728
        %v1425 = vunpack.c.h.b16 %v728
        %v1426 = vunpack.c.l.b16 %v729
        %v1427 = vunpack.c.h.b16 %v729
        %v1428 = vunpack.c.l.b16 %v730
        %v1429 = vunpack.c.h.b16 %v730
        %v1430 = vunpack.c.l.b16 %v731
        %v1431 = vunpack.c.h.b16 %v731
        %v1432 = vunpack.c.l.b16 %v732
        %v1433 = vunpack.c.h.b16 %v732
        %v1434 = vunpack.c.l.b16 %v733
        %v1435 = vunpack.c.h.b16 %v733
        %v1436 = vunpack.c.l.b16 %v734
        %v1437 = vunpack.c.h.b16 %v734
        %v1438 = vunpack.c.l.b16 %v735
        %v1439 = vunpack.c.h.b16 %v735
        %v1440 = vunpack.c.l.b16 %v736
        %v1441 = vunpack.c.h.b16 %v736
        %v1442 = vunpack.c.l.b16 %v737
        %v1443 = vunpack.c.h.b16 %v737
        %v1444 = vunpack.c.l.b16 %v738
        %v1445 = vunpack.c.h.b16 %v738
        %v1446 = vunpack.c.l.b16 %v739
        %v1447 = vunpack.c.h.b16 %v739
        %v1448 = vunpack.c.l.b16 %v740
        %v1449 = vunpack.c.h.b16 %v740
        %v1450 = vunpack.c.l.b16 %v741
        %v1451 = vunpack.c.h.b16 %v741
        %v1452 = vunpack.c.l.b16 %v742
        %v1453 = vunpack.c.h.b16 %v742
        %v1454 = vunpack.c.l.b16 %v743
        %v1455 = vunpack.c.h.b16 %v743
        %v1456 = vunpack.c.l.b16 %v744
        %v1457 = vunpack.c.h.b16 %v744
        %v1458 = vunpack.c.l.b16 %v745
        %v1459 = vunpack.c.h.b16 %v745
        %v1460 = vunpack.c.l.b16 %v746
        %v1461 = vunpack.c.h.b16 %v746
        %v1462 = vunpack.c.l.b16 %v747
        %v1463 = vunpack.c.h.b16 %v747
        %v1464 = vunpack.c.l.b16 %v748
        %v1465 = vunpack.c.h.b16 %v748
        %v1466 = vunpack.c.l.b16 %v749
        %v1467 = vunpack.c.h.b16 %v749
        %v1468 = vunpack.c.l.b16 %v750
        %v1469 = vunpack.c.h.b16 %v750
        %v1470 = vunpack.c.l.b16 %v751
        %v1471 = vunpack.c.h.b16 %v751
        %v1472 = vunpack.c.l.b16 %v752
        %v1473 = vunpack.c.h.b16 %v752
        %v1474 = vunpack.c.l.b16 %v753
        %v1475 = vunpack.c.h.b16 %v753
        %v1476 = vunpack.c.l.b16 %v754
        %v1477 = vunpack.c.h.b16 %v754
        %v1478 = vunpack.c.l.b16 %v755
        %v1479 = vunpack.c.h.b16 %v755
        %v1480 = vunpack.c.l.b16 %v756
        %v1481 = vunpack.c.h.b16 %v756
        %v1482 = vunpack.c.l.b16 %v757
        %v1483 = vunpack.c.h.b16 %v757
        %v1484 = vunpack.c.l.b16 %v758
        %v1485 = vunpack.c.h.b16 %v758
        %v1486 = vunpack.c.l.b16 %v759
        %v1487 = vunpack.c.h.b16 %v759
        %v1488 = vunpack.c.l.b16 %v760
        %v1489 = vunpack.c.h.b16 %v760
        %v1490 = vunpack.c.l.b16 %v761
        %v1491 = vunpack.c.h.b16 %v761
        %v1492 = vpack.c.b16 %v1048, %v1044
        %v1493 = vpack.c.b16 %v1049, %v1045
        %v1494 = vpack.c.b16 %v1050, %v1046
        %v1495 = vpack.c.b16 %v1051, %v1047
        %v1496 = vpack.c.b16 %v1056, %v1052
        %v1497 = vpack.c.b16 %v1057, %v1053
        %v1498 = vpack.c.b16 %v1058, %v1054
        %v1499 = vpack.c.b16 %v1059, %v1055
        %v1500 = vpack.c.b16 %v1064, %v1060
        %v1501 = vpack.c.b16 %v1065, %v1061
        %v1502 = vpack.c.b16 %v1066, %v1062
        %v1503 = vpack.c.b16 %v1067, %v1063
        %v1504 = vpack.c.b16 %v1072, %v1068
        %v1505 = vpack.c.b16 %v1073, %v1069
        %v1506 = vpack.c.b16 %v1074, %v1070
        %v1507 = vpack.c.b16 %v1075, %v1071
        %v1508 = vpack.c.b16 %v1080, %v1076
        %v1509 = vpack.c.b16 %v1081, %v1077
        %v1510 = vpack.c.b16 %v1082, %v1078
        %v1511 = vpack.c.b16 %v1083, %v1079
        %v1512 = vpack.c.b16 %v1088, %v1084
        %v1513 = vpack.c.b16 %v1089, %v1085
        %v1514 = vpack.c.b16 %v1090, %v1086
        %v1515 = vpack.c.b16 %v1091, %v1087
        %v1516 = vpack.c.b16 %v1096, %v1092
        %v1517 = vpack.c.b16 %v1097, %v1093
        %v1518 = vpack.c.b16 %v1098, %v1094
        %v1519 = vpack.c.b16 %v1099, %v1095
        %v1520 = vpack.c.b16 %v1104, %v1100
        %v1521 = vpack.c.b16 %v1105, %v1101
        %v1522 = vpack.c.b16 %v1106, %v1102
        %v1523 = vpack.c.b16 %v1107, %v1103
        %v1524 = vpack.c.b16 %v1112, %v1108
        %v1525 = vpack.c.b16 %v1113, %v1109
        %v1526 = vpack.c.b16 %v1114, %v1110
        %v1527 = vpack.c.b16 %v1115, %v1111
        %v1528 = vpack.c.b16 %v1120, %v1116
        %v1529 = vpack.c.b16 %v1121, %v1117
        %v1530 = vpack.c.b16 %v1122, %v1118
        %v1531 = vpack.c.b16 %v1123, %v1119
        %v1532 = vpack.c.b16 %v1128, %v1124
        %v1533 = vpack.c.b16 %v1129, %v1125
        %v1534 = vpack.c.b16 %v1130, %v1126
        %v1535 = vpack.c.b16 %v1131, %v1127
        %v1536 = vpack.c.b16 %v1136, %v1132
        %v1537 = vpack.c.b16 %v1137, %v1133
        %v1538 = vpack.c.b16 %v1138, %v1134
        %v1539 = vpack.c.b16 %v1139, %v1135
        %v1540 = vpack.c.b16 %v1144, %v1140
        %v1541 = vpack.c.b16 %v1145, %v1141
        %v1542 = vpack.c.b16 %v1146, %v1142
        %v1543 = vpack.c.b16 %v1147, %v1143
        %v1544 = vpack.c.b16 %v1152, %v1148
        %v1545 = vpack.c.b16 %v1153, %v1149
        %v1546 = vpack.c.b16 %v1154, %v1150
        %v1547 = vpack.c.b16 %v1155, %v1151
        %v1548 = vpack.c.b16 %v1160, %v1156
        %v1549 = vpack.c.b16 %v1161, %v1157
        %v1550 = vpack.c.b16 %v1162, %v1158
        %v1551 = vpack.c.b16 %v1163, %v1159
        %v1552 = vpack.c.b16 %v1168, %v1164
        %v1553 = vpack.c.b16 %v1169, %v1165
        %v1554 = vpack.c.b16 %v1170, %v1166
        %v1555 = vpack.c.b16 %v1171, %v1167
        %v1556 = vpack.c.b16 %v1176, %v1172
        %v1557 = vpack.c.b16 %v1177, %v1173
        %v1558 = vpack.c.b16 %v1178, %v1174
        %v1559 = vpack.c.b16 %v1179, %v1175
        %v1560 = vpack.c.b16 %v1184, %v1180
        %v1561 = vpack.c.b16 %v1185, %v1181
        %v1562 = vpack.c.b16 %v1186, %v1182
        %v1563 = vpack.c.b16 %v1187, %v1183
        %v1564 = vpack.c.b16 %v1192, %v1188
        %v1565 = vpack.c.b16 %v1193, %v1189
        %v1566 = vpack.c.b16 %v1194, %v1190
        %v1567 = vpack.c.b16 %v1195, %v1191
        %v1568 = vpack.c.b16 %v1200, %v1196
        %v1569 = vpack.c.b16 %v1201, %v1197
        %v1570 = vpack.c.b16 %v1202, %v1198
        %v1571 = vpack.c.b16 %v1203, %v1199
        %v1572 = vpack.c.b16 %v1208, %v1204
        %v1573 = vpack.c.b16 %v1209, %v1205
        %v1574 = vpack.c.b16 %v1210, %v1206
        %v1575 = vpack.c.b16 %v1211, %v1207
        %v1576 = vpack.c.b16 %v1216, %v1212
        %v1577 = vpack.c.b16 %v1217, %v1213
        %v1578 = vpack.c.b16 %v1218, %v1214
        %v1579 = vpack.c.b16 %v1219, %v1215
        %v1580 = vpack.c.b16 %v1224, %v1220
        %v1581 = vpack.c.b16 %v1225, %v1221
        %v1582 = vpack.c.b16 %v1226, %v1222
        %v1583 = vpack.c.b16 %v1227, %v1223
        %v1584 = vpack.c.b16 %v1232, %v1228
        %v1585 = vpack.c.b16 %v1233, %v1229
        %v1586 = vpack.c.b16 %v1234, %v1230
        %v1587 = vpack.c.b16 %v1235, %v1231
        %v1588 = vpack.c.b16 %v1240, %v1236
        %v1589 = vpack.c.b16 %v1241, %v1237
        %v1590 = vpack.c.b16 %v1242, %v1238
        %v1591 = vpack.c.b16 %v1243, %v1239
        %v1592 = vpack.c.b16 %v1248, %v1244
        %v1593 = vpack.c.b16 %v1249, %v1245
        %v1594 = vpack.c.b16 %v1250, %v1246
        %v1595 = vpack.c.b16 %v1251, %v1247
        %v1596 = vpack.c.b16 %v1256, %v1252
        %v1597 = vpack.c.b16 %v1257, %v1253
        %v1598 = vpack.c.b16 %v1258, %v1254
        %v1599 = vpack.c.b16 %v1259, %v1255
        %v1600 = vpack.c.b16 %v1264, %v1260
        %v1601 = vpack.c.b16 %v1265, %v1261
        %v1602 = vpack.c.b16 %v1266, %v1262
        %v1603 = vpack.c.b16 %v1267, %v1263
        %v1604 = vpack.c.b16 %v1272, %v1268
        %v1605 = vpack.c.b16 %v1273, %v1269
        %v1606 = vpack.c.b16 %v1274, %v1270
        %v1607 = vpack.c.b16 %v1275, %v1271
        %v1608 = vpack.c.b16 %v1280, %v1276
        %v1609 = vpack.c.b16 %v1281, %v1277
        %v1610 = vpack.c.b16 %v1282, %v1278
        %v1611 = vpack.c.b16 %v1283, %v1279
        %v1612 = vpack.c.b16 %v1288, %v1284
        %v1613 = vpack.c.b16 %v1289, %v1285
        %v1614 = vpack.c.b16 %v1290, %v1286
        %v1615 = vpack.c.b16 %v1291, %v1287
        %v1616 = vpack.c.b16 %v1296, %v1292
        %v1617 = vpack.c.b16 %v1297, %v1293
        %v1618 = vpack.c.b16 %v1298, %v1294
        %v1619 = vpack.c.b16 %v1299, %v1295
        %v1620 = vpack.c.b16 %v1304, %v1300
        %v1621 = vpack.c.b16 %v1305, %v1301
        %v1622 = vpack.c.b16 %v1306, %v1302
        %v1623 = vpack.c.b16 %v1307, %v1303
        %v1624 = vpack.c.b16 %v1312, %v1308
        %v1625 = vpack.c.b16 %v1313, %v1309
        %v1626 = vpack.c.b16 %v1314, %v1310
        %v1627 = vpack.c.b16 %v1315, %v1311
        %v1628 = vpack.c.b16 %v1320, %v1316
        %v1629 = vpack.c.b16 %v1321, %v1317
        %v1630 = vpack.c.b16 %v1322, %v1318
        %v1631 = vpack.c.b16 %v1323, %v1319
        %v1632 = vpack.c.b16 %v1328, %v1324
        %v1633 = vpack.c.b16 %v1329, %v1325
        %v1634 = vpack.c.b16 %v1330, %v1326
        %v1635 = vpack.c.b16 %v1331, %v1327
        %v1636 = vpack.c.b16 %v1336, %v1332
        %v1637 = vpack.c.b16 %v1337, %v1333
        %v1638 = vpack.c.b16 %v1338, %v1334
        %v1639 = vpack.c.b16 %v1339, %v1335
        %v1640 = vpack.c.b16 %v1344, %v1340
        %v1641 = vpack.c.b16 %v1345, %v1341
        %v1642 = vpack.c.b16 %v1346, %v1342
        %v1643 = vpack.c.b16 %v1347, %v1343
        %v1644 = vpack.c.b16 %v1352, %v1348
        %v1645 = vpack.c.b16 %v1353, %v1349
        %v1646 = vpack.c.b16 %v1354, %v1350
        %v1647 = vpack.c.b16 %v1355, %v1351
        %v1648 = vpack.c.b16 %v1360, %v1356
        %v1649 = vpack.c.b16 %v1361, %v1357
        %v1650 = vpack.c.b16 %v1362, %v1358
        %v1651 = vpack.c.b16 %v1363, %v1359
        %v1652 = vpack.c.b16 %v1368, %v1364
        %v1653 = vpack.c.b16 %v1369, %v1365
        %v1654 = vpack.c.b16 %v1370, %v1366
        %v1655 = vpack.c.b16 %v1371, %v1367
        %v1656 = vpack.c.b16 %v1376, %v1372
        %v1657 = vpack.c.b16 %v1377, %v1373
        %v1658 = vpack.c.b16 %v1378, %v1374
        %v1659 = vpack.c.b16 %v1379, %v1375
        %v1660 = vpack.c.b16 %v1384, %v1380
        %v1661 = vpack.c.b16 %v1385, %v1381
        %v1662 = vpack.c.b16 %v1386, %v1382
        %v1663 = vpack.c.b16 %v1387, %v1383
        %v1664 = vpack.c.b16 %v1392, %v1388
        %v1665 = vpack.c.b16 %v1393, %v1389
        %v1666 = vpack.c.b16 %v1394, %v1390
        %v1667 = vpack.c.b16 %v1395, %v1391
        %v1668 = vpack.c.b16 %v1400, %v1396
        %v1669 = vpack.c.b16 %v1401, %v1397
        %v1670 = vpack.c.b16 %v1402, %v1398
        %v1671 = vpack.c.b16 %v1403, %v1399
        %v1672 = vpack.c.b16 %v1408, %v1404
        %v1673 = vpack.c.b16 %v1409, %v1405
        %v1674 = vpack.c.b16 %v1410, %v1406
        %v1675 = vpack.c.b16 %v1411, %v1407
        %v1676 = vpack.c.b16 %v1416, %v1412
        %v1677 = vpack.c.b16 %v1417, %v1413
        %v1678 = vpack.c.b16 %v1418, %v1414
        %v1679 = vpack.c.b16 %v1419, %v1415
        %v1680 = vpack.c.b16 %v1424, %v1420
        %v1681 = vpack.c.b16 %v1425, %v1421
        %v1682 = vpack.c.b16 %v1426, %v1422
        %v1683 = vpack.c.b16 %v1427, %v1423
        %v1684 = vpack.c.b16 %v1432, %v1428
        %v1685 = vpack.c.b16 %v1433, %v1429
        %v1686 = vpack.c.b16 %v1434, %v1430
        %v1687 = vpack.c.b16 %v1435, %v1431
        %v1688 = vpack.c.b16 %v1440, %v1436
        %v1689 = vpack.c.b16 %v1441, %v1437
        %v1690 = vpack.c.b16 %v1442, %v1438
        %v1691 = vpack.c.b16 %v1443, %v1439
        %v1692 = vpack.c.b16 %v1448, %v1444
        %v1693 = vpack.c.b16 %v1449, %v1445
        %v1694 = vpack.c.b16 %v1450, %v1446
        %v1695 = vpack.c.b16 %v1451, %v1447
        %v1696 = vpack.c.b16 %v1456, %v1452
        %v1697 = vpack.c.b16 %v1457, %v1453
        %v1698 = vpack.c.b16 %v1458, %v1454
        %v1699 = vpack.c.b16 %v1459, %v1455
        %v1700 = vpack.c.b16 %v1464, %v1460
        %v1701 = vpack.c.b16 %v1465, %v1461
        %v1702 = vpack.c.b16 %v1466, %v1462
        %v1703 = vpack.c.b16 %v1467, %v1463
        %v1704 = vpack.c.b16 %v1472, %v1468
        %v1705 = vpack.c.b16 %v1473, %v1469
        %v1706 = vpack.c.b16 %v1474, %v1470
        %v1707 = vpack.c.b16 %v1475, %v1471
        %v1708 = vpack.c.b16 %v1480, %v1476
        %v1709 = vpack.c.b16 %v1481, %v1477
        %v1710 = vpack.c.b16 %v1482, %v1478
        %v1711 = vpack.c.b16 %v1483, %v1479
        %v1712 = vpack.c.b16 %v1488, %v1484
        %v1713 = vpack.c.b16 %v1489, %v1485
        %v1714 = vpack.c.b16 %v1490, %v1486
        %v1715 = vpack.c.b16 %v1491, %v1487
        %1940 = vmatprep.subr.bf16.mxu0 %v1521
        %1941 = vmatpush1.bf16.msra.mxu0 %v1520
        %1942 = vmatprep.subr.bf16.mxu0 %v1517
        %1943 = vmatpush1.bf16.msra.mxu0 %v1516
        %1944 = vmatprep.subr.bf16.mxu0 %v1513
        %1945 = vmatpush1.bf16.msra.mxu0 %v1512
        %1946 = vmatprep.subr.bf16.mxu0 %v1509
        %1947 = vmatpush1.bf16.msra.mxu0 %v1508
        %1948 = vmatprep.subr.bf16.mxu0 %v1505
        %1949 = vmatpush1.bf16.msra.mxu0 %v1504
        %1950 = vmatprep.subr.bf16.mxu0 %v1501
        %1951 = vmatpush1.bf16.msra.mxu0 %v1500
        %1952 = vmatprep.subr.bf16.mxu0 %v1497
        %1953 = vmatpush1.bf16.msra.mxu0 %v1496
        %1954 = vmatprep.subr.bf16.mxu0 %v1493
        %1955 = vmatpush1.bf16.msra.mxu0 %v1492
        %1956 = vmatprep.subr.bf16.mxu0 %v1553
        %1957 = vmatpush2.bf16.msra.mxu0 %v1552
        %1958 = vmatprep.subr.bf16.mxu0 %v1549
        %1959 = vmatpush2.bf16.msra.mxu0 %v1548
        %1960 = vmatprep.subr.bf16.mxu0 %v1545
        %1961 = vmatpush2.bf16.msra.mxu0 %v1544
        %1962 = vmatprep.subr.bf16.mxu0 %v1541
        %1963 = vmatpush2.bf16.msra.mxu0 %v1540
        %1964 = vmatprep.subr.bf16.mxu0 %v1537
        %1965 = vmatpush2.bf16.msra.mxu0 %v1536
        %1966 = vmatprep.subr.bf16.mxu0 %v1533
        %1967 = vmatpush2.bf16.msra.mxu0 %v1532
        %1968 = vmatprep.subr.bf16.mxu0 %v1529
        %1969 = vmatpush2.bf16.msra.mxu0 %v1528
        %1970 = vmatprep.subr.bf16.mxu0 %v1525
        %1971 = vmatpush2.bf16.msra.mxu0 %v1524
        %1972 = vmatprep.mubr.bf16.mxu0 %v807
        %1973 = vmatmul.mubr.bf16.gmra.mxu0 %v806
        %v1974 = vpop.f32.mrf.mxu0
        %v1975 = vadd.f32 %v767, %v1974
        %v1976 = vpop.f32.mrf.mxu0
        %v1977 = vadd.f32 %v771, %v1976
        %v1978 = vpop.f32.mrf.mxu0
        %v1979 = vadd.f32 %v767, %v1978
        %v1980 = vpop.f32.mrf.mxu0
        %v1981 = vadd.f32 %v771, %v1980
        %1982 = vdwg.mxu0
        %1983 = vmatprep.subr.bf16.mxu0 %v1585
        %1984 = vmatpush1.bf16.msra.mxu0 %v1584
        %1985 = vmatprep.subr.bf16.mxu0 %v1581
        %1986 = vmatpush1.bf16.msra.mxu0 %v1580
        %1987 = vmatprep.subr.bf16.mxu0 %v1577
        %1988 = vmatpush1.bf16.msra.mxu0 %v1576
        %1989 = vmatprep.subr.bf16.mxu0 %v1573
        %1990 = vmatpush1.bf16.msra.mxu0 %v1572
        %1991 = vmatprep.subr.bf16.mxu0 %v1569
        %1992 = vmatpush1.bf16.msra.mxu0 %v1568
        %1993 = vmatprep.subr.bf16.mxu0 %v1565
        %1994 = vmatpush1.bf16.msra.mxu0 %v1564
        %1995 = vmatprep.subr.bf16.mxu0 %v1561
        %1996 = vmatpush1.bf16.msra.mxu0 %v1560
        %1997 = vmatprep.subr.bf16.mxu0 %v1557
        %1998 = vmatpush1.bf16.msra.mxu0 %v1556
        %1999 = vmatprep.subr.bf16.mxu0 %v1617
        %2000 = vmatpush2.bf16.msra.mxu0 %v1616
        %2001 = vmatprep.subr.bf16.mxu0 %v1613
        %2002 = vmatpush2.bf16.msra.mxu0 %v1612
        %2003 = vmatprep.subr.bf16.mxu0 %v1609
        %2004 = vmatpush2.bf16.msra.mxu0 %v1608
        %2005 = vmatprep.subr.bf16.mxu0 %v1605
        %2006 = vmatpush2.bf16.msra.mxu0 %v1604
        %2007 = vmatprep.subr.bf16.mxu0 %v1601
        %2008 = vmatpush2.bf16.msra.mxu0 %v1600
        %2009 = vmatprep.subr.bf16.mxu0 %v1597
        %2010 = vmatpush2.bf16.msra.mxu0 %v1596
        %2011 = vmatprep.subr.bf16.mxu0 %v1593
        %2012 = vmatpush2.bf16.msra.mxu0 %v1592
        %2013 = vmatprep.subr.bf16.mxu0 %v1589
        %2014 = vmatpush2.bf16.msra.mxu0 %v1588
        %2015 = vmatprep.mubr.bf16.mxu0 %v809
        %2016 = vmatmul.mubr.bf16.gmra.mxu0 %v808
        %v2017 = vpop.f32.mrf.mxu0
        %v2018 = vadd.f32 %v1975, %v2017
        %v2019 = vpop.f32.mrf.mxu0
        %v2020 = vadd.f32 %v1977, %v2019
        %v2021 = vpop.f32.mrf.mxu0
        %v2022 = vadd.f32 %v1979, %v2021
        %v2023 = vpop.f32.mrf.mxu0
        %v2024 = vadd.f32 %v1981, %v2023
        %2025 = vdwg.mxu0
        %2026 = vmatprep.subr.bf16.mxu0 %v1649
        %2027 = vmatpush1.bf16.msra.mxu0 %v1648
        %2028 = vmatprep.subr.bf16.mxu0 %v1645
        %2029 = vmatpush1.bf16.msra.mxu0 %v1644
        %2030 = vmatprep.subr.bf16.mxu0 %v1641
        %2031 = vmatpush1.bf16.msra.mxu0 %v1640
        %2032 = vmatprep.subr.bf16.mxu0 %v1637
        %2033 = vmatpush1.bf16.msra.mxu0 %v1636
        %2034 = vmatprep.subr.bf16.mxu0 %v1633
        %2035 = vmatpush1.bf16.msra.mxu0 %v1632
        %2036 = vmatprep.subr.bf16.mxu0 %v1629
        %2037 = vmatpush1.bf16.msra.mxu0 %v1628
        %2038 = vmatprep.subr.bf16.mxu0 %v1625
        %2039 = vmatpush1.bf16.msra.mxu0 %v1624
        %2040 = vmatprep.subr.bf16.mxu0 %v1621
        %2041 = vmatpush1.bf16.msra.mxu0 %v1620
        %2042 = vmatprep.subr.bf16.mxu0 %v1681
        %2043 = vmatpush2.bf16.msra.mxu0 %v1680
        %2044 = vmatprep.subr.bf16.mxu0 %v1677
        %2045 = vmatpush2.bf16.msra.mxu0 %v1676
        %2046 = vmatprep.subr.bf16.mxu0 %v1673
        %2047 = vmatpush2.bf16.msra.mxu0 %v1672
        %2048 = vmatprep.subr.bf16.mxu0 %v1669
        %2049 = vmatpush2.bf16.msra.mxu0 %v1668
        %2050 = vmatprep.subr.bf16.mxu0 %v1665
        %2051 = vmatpush2.bf16.msra.mxu0 %v1664
        %2052 = vmatprep.subr.bf16.mxu0 %v1661
        %2053 = vmatpush2.bf16.msra.mxu0 %v1660
        %2054 = vmatprep.subr.bf16.mxu0 %v1657
        %2055 = vmatpush2.bf16.msra.mxu0 %v1656
        %2056 = vmatprep.subr.bf16.mxu0 %v1653
        %2057 = vmatpush2.bf16.msra.mxu0 %v1652
        %2058 = vmatprep.mubr.bf16.mxu0 %v811
        %2059 = vmatmul.mubr.bf16.gmra.mxu0 %v810
        %v2060 = vpop.f32.mrf.mxu0
        %v2061 = vadd.f32 %v2018, %v2060
        %v2062 = vpop.f32.mrf.mxu0
        %v2063 = vadd.f32 %v2020, %v2062
        %v2064 = vpop.f32.mrf.mxu0
        %v2065 = vadd.f32 %v2022, %v2064
        %v2066 = vpop.f32.mrf.mxu0
        %v2067 = vadd.f32 %v2024, %v2066
        %2068 = vdwg.mxu0
        %2069 = vmatprep.subr.bf16.mxu0 %v1713
        %2070 = vmatpush1.bf16.msra.mxu0 %v1712
        %2071 = vmatprep.subr.bf16.mxu0 %v1709
        %2072 = vmatpush1.bf16.msra.mxu0 %v1708
        %2073 = vmatprep.subr.bf16.mxu0 %v1705
        %2074 = vmatpush1.bf16.msra.mxu0 %v1704
        %2075 = vmatprep.subr.bf16.mxu0 %v1701
        %2076 = vmatpush1.bf16.msra.mxu0 %v1700
        %2077 = vmatprep.subr.bf16.mxu0 %v1697
        %2078 = vmatpush1.bf16.msra.mxu0 %v1696
        %2079 = vmatprep.subr.bf16.mxu0 %v1693
        %2080 = vmatpush1.bf16.msra.mxu0 %v1692
        %2081 = vmatprep.subr.bf16.mxu0 %v1689
        %2082 = vmatpush1.bf16.msra.mxu0 %v1688
        %2083 = vmatprep.subr.bf16.mxu0 %v1685
        %2084 = vmatpush1.bf16.msra.mxu0 %v1684
        %2085 = vmatprep.subr.bf16.mxu0 0
        %2086 = vmatpush2.bf16.msra.mxu0 0
        %2087 = vmatprep.subr.bf16.mxu0 0
        %2088 = vmatpush2.bf16.msra.mxu0 0
        %2089 = vmatprep.subr.bf16.mxu0 0
        %2090 = vmatpush2.bf16.msra.mxu0 0
        %2091 = vmatprep.subr.bf16.mxu0 0
        %2092 = vmatpush2.bf16.msra.mxu0 0
        %2093 = vmatprep.subr.bf16.mxu0 0
        %2094 = vmatpush2.bf16.msra.mxu0 0
        %2095 = vmatprep.subr.bf16.mxu0 0
        %2096 = vmatpush2.bf16.msra.mxu0 0
        %2097 = vmatprep.subr.bf16.mxu0 0
        %2098 = vmatpush2.bf16.msra.mxu0 0
        %2099 = vmatprep.subr.bf16.mxu0 0
        %2100 = vmatpush2.bf16.msra.mxu0 0
        %2101 = vmatprep.mubr.bf16.mxu0 0
        %2102 = vmatmul.mubr.bf16.gmra.mxu0 %v812
        %v2103 = vpop.f32.mrf.mxu0
        %v2104 = vadd.f32 %v2061, %v2103
        %v2105 = vpop.f32.mrf.mxu0
        %v2106 = vadd.f32 %v2063, %v2105
        %v2107 = vpop.f32.mrf.mxu0
        %v2108 = vadd.f32 %v2065, %v2107
        %v2109 = vpop.f32.mrf.mxu0
        %v2110 = vadd.f32 %v2067, %v2109
        %2111 = vdwg.mxu0
        %2112 = vmatprep.subr.bf16.mxu0 %v1523
        %2113 = vmatpush1.bf16.msra.mxu0 %v1522
        %2114 = vmatprep.subr.bf16.mxu0 %v1519
        %2115 = vmatpush1.bf16.msra.mxu0 %v1518
        %2116 = vmatprep.subr.bf16.mxu0 %v1515
        %2117 = vmatpush1.bf16.msra.mxu0 %v1514
        %2118 = vmatprep.subr.bf16.mxu0 %v1511
        %2119 = vmatpush1.bf16.msra.mxu0 %v1510
        %2120 = vmatprep.subr.bf16.mxu0 %v1507
        %2121 = vmatpush1.bf16.msra.mxu0 %v1506
        %2122 = vmatprep.subr.bf16.mxu0 %v1503
        %2123 = vmatpush1.bf16.msra.mxu0 %v1502
        %2124 = vmatprep.subr.bf16.mxu0 %v1499
        %2125 = vmatpush1.bf16.msra.mxu0 %v1498
        %2126 = vmatprep.subr.bf16.mxu0 %v1495
        %2127 = vmatpush1.bf16.msra.mxu0 %v1494
        %2128 = vmatprep.subr.bf16.mxu0 %v1555
        %2129 = vmatpush2.bf16.msra.mxu0 %v1554
        %2130 = vmatprep.subr.bf16.mxu0 %v1551
        %2131 = vmatpush2.bf16.msra.mxu0 %v1550
        %2132 = vmatprep.subr.bf16.mxu0 %v1547
        %2133 = vmatpush2.bf16.msra.mxu0 %v1546
        %2134 = vmatprep.subr.bf16.mxu0 %v1543
        %2135 = vmatpush2.bf16.msra.mxu0 %v1542
        %2136 = vmatprep.subr.bf16.mxu0 %v1539
        %2137 = vmatpush2.bf16.msra.mxu0 %v1538
        %2138 = vmatprep.subr.bf16.mxu0 %v1535
        %2139 = vmatpush2.bf16.msra.mxu0 %v1534
        %2140 = vmatprep.subr.bf16.mxu0 %v1531
        %2141 = vmatpush2.bf16.msra.mxu0 %v1530
        %2142 = vmatprep.subr.bf16.mxu0 %v1527
        %2143 = vmatpush2.bf16.msra.mxu0 %v1526
        %2144 = vmatprep.mubr.bf16.mxu0 %v807
        %2145 = vmatmul.mubr.bf16.gmra.mxu0 %v806
        %v2146 = vpop.f32.mrf.mxu0
        %v2147 = vadd.f32 %v775, %v2146
        %v2148 = vpop.f32.mrf.mxu0
        %v2149 = vadd.f32 %v779, %v2148
        %v2150 = vpop.f32.mrf.mxu0
        %v2151 = vadd.f32 %v775, %v2150
        %v2152 = vpop.f32.mrf.mxu0
        %v2153 = vadd.f32 %v779, %v2152
        %2154 = vdwg.mxu0
        %2155 = vmatprep.subr.bf16.mxu0 %v1587
        %2156 = vmatpush1.bf16.msra.mxu0 %v1586
        %2157 = vmatprep.subr.bf16.mxu0 %v1583
        %2158 = vmatpush1.bf16.msra.mxu0 %v1582
        %2159 = vmatprep.subr.bf16.mxu0 %v1579
        %2160 = vmatpush1.bf16.msra.mxu0 %v1578
        %2161 = vmatprep.subr.bf16.mxu0 %v1575
        %2162 = vmatpush1.bf16.msra.mxu0 %v1574
        %2163 = vmatprep.subr.bf16.mxu0 %v1571
        %2164 = vmatpush1.bf16.msra.mxu0 %v1570
        %2165 = vmatprep.subr.bf16.mxu0 %v1567
        %2166 = vmatpush1.bf16.msra.mxu0 %v1566
        %2167 = vmatprep.subr.bf16.mxu0 %v1563
        %2168 = vmatpush1.bf16.msra.mxu0 %v1562
        %2169 = vmatprep.subr.bf16.mxu0 %v1559
        %2170 = vmatpush1.bf16.msra.mxu0 %v1558
        %2171 = vmatprep.subr.bf16.mxu0 %v1619
        %2172 = vmatpush2.bf16.msra.mxu0 %v1618
        %2173 = vmatprep.subr.bf16.mxu0 %v1615
        %2174 = vmatpush2.bf16.msra.mxu0 %v1614
        %2175 = vmatprep.subr.bf16.mxu0 %v1611
        %2176 = vmatpush2.bf16.msra.mxu0 %v1610
        %2177 = vmatprep.subr.bf16.mxu0 %v1607
        %2178 = vmatpush2.bf16.msra.mxu0 %v1606
        %2179 = vmatprep.subr.bf16.mxu0 %v1603
        %2180 = vmatpush2.bf16.msra.mxu0 %v1602
        %2181 = vmatprep.subr.bf16.mxu0 %v1599
        %2182 = vmatpush2.bf16.msra.mxu0 %v1598
        %2183 = vmatprep.subr.bf16.mxu0 %v1595
        %2184 = vmatpush2.bf16.msra.mxu0 %v1594
        %2185 = vmatprep.subr.bf16.mxu0 %v1591
        %2186 = vmatpush2.bf16.msra.mxu0 %v1590
        %2187 = vmatprep.mubr.bf16.mxu0 %v809
        %2188 = vmatmul.mubr.bf16.gmra.mxu0 %v808
        %v2189 = vpop.f32.mrf.mxu0
        %v2190 = vadd.f32 %v2147, %v2189
        %v2191 = vpop.f32.mrf.mxu0
        %v2192 = vadd.f32 %v2149, %v2191
        %v2193 = vpop.f32.mrf.mxu0
        %v2194 = vadd.f32 %v2151, %v2193
        %v2195 = vpop.f32.mrf.mxu0
        %v2196 = vadd.f32 %v2153, %v2195
        %2197 = vdwg.mxu0
        %2198 = vmatprep.subr.bf16.mxu0 %v1651
        %2199 = vmatpush1.bf16.msra.mxu0 %v1650
        %2200 = vmatprep.subr.bf16.mxu0 %v1647
        %2201 = vmatpush1.bf16.msra.mxu0 %v1646
        %2202 = vmatprep.subr.bf16.mxu0 %v1643
        %2203 = vmatpush1.bf16.msra.mxu0 %v1642
        %2204 = vmatprep.subr.bf16.mxu0 %v1639
        %2205 = vmatpush1.bf16.msra.mxu0 %v1638
        %2206 = vmatprep.subr.bf16.mxu0 %v1635
        %2207 = vmatpush1.bf16.msra.mxu0 %v1634
        %2208 = vmatprep.subr.bf16.mxu0 %v1631
        %2209 = vmatpush1.bf16.msra.mxu0 %v1630
        %2210 = vmatprep.subr.bf16.mxu0 %v1627
        %2211 = vmatpush1.bf16.msra.mxu0 %v1626
        %2212 = vmatprep.subr.bf16.mxu0 %v1623
        %2213 = vmatpush1.bf16.msra.mxu0 %v1622
        %2214 = vmatprep.subr.bf16.mxu0 %v1683
        %2215 = vmatpush2.bf16.msra.mxu0 %v1682
        %2216 = vmatprep.subr.bf16.mxu0 %v1679
        %2217 = vmatpush2.bf16.msra.mxu0 %v1678
        %2218 = vmatprep.subr.bf16.mxu0 %v1675
        %2219 = vmatpush2.bf16.msra.mxu0 %v1674
        %2220 = vmatprep.subr.bf16.mxu0 %v1671
        %2221 = vmatpush2.bf16.msra.mxu0 %v1670
        %2222 = vmatprep.subr.bf16.mxu0 %v1667
        %2223 = vmatpush2.bf16.msra.mxu0 %v1666
        %2224 = vmatprep.subr.bf16.mxu0 %v1663
        %2225 = vmatpush2.bf16.msra.mxu0 %v1662
        %2226 = vmatprep.subr.bf16.mxu0 %v1659
        %2227 = vmatpush2.bf16.msra.mxu0 %v1658
        %2228 = vmatprep.subr.bf16.mxu0 %v1655
        %2229 = vmatpush2.bf16.msra.mxu0 %v1654
        %2230 = vmatprep.mubr.bf16.mxu0 %v811
        %2231 = vmatmul.mubr.bf16.gmra.mxu0 %v810
        %v2232 = vpop.f32.mrf.mxu0
        %v2233 = vadd.f32 %v2190, %v2232
        %v2234 = vpop.f32.mrf.mxu0
        %v2235 = vadd.f32 %v2192, %v2234
        %v2236 = vpop.f32.mrf.mxu0
        %v2237 = vadd.f32 %v2194, %v2236
        %v2238 = vpop.f32.mrf.mxu0
        %v2239 = vadd.f32 %v2196, %v2238
        %2240 = vdwg.mxu0
        %2241 = vmatprep.subr.bf16.mxu0 %v1715
        %2242 = vmatpush1.bf16.msra.mxu0 %v1714
        %2243 = vmatprep.subr.bf16.mxu0 %v1711
        %2244 = vmatpush1.bf16.msra.mxu0 %v1710
        %2245 = vmatprep.subr.bf16.mxu0 %v1707
        %2246 = vmatpush1.bf16.msra.mxu0 %v1706
        %2247 = vmatprep.subr.bf16.mxu0 %v1703
        %2248 = vmatpush1.bf16.msra.mxu0 %v1702
        %2249 = vmatprep.subr.bf16.mxu0 %v1699
        %2250 = vmatpush1.bf16.msra.mxu0 %v1698
        %2251 = vmatprep.subr.bf16.mxu0 %v1695
        %2252 = vmatpush1.bf16.msra.mxu0 %v1694
        %2253 = vmatprep.subr.bf16.mxu0 %v1691
        %2254 = vmatpush1.bf16.msra.mxu0 %v1690
        %2255 = vmatprep.subr.bf16.mxu0 %v1687
        %2256 = vmatpush1.bf16.msra.mxu0 %v1686
        %2257 = vmatprep.subr.bf16.mxu0 0
        %2258 = vmatpush2.bf16.msra.mxu0 0
        %2259 = vmatprep.subr.bf16.mxu0 0
        %2260 = vmatpush2.bf16.msra.mxu0 0
        %2261 = vmatprep.subr.bf16.mxu0 0
        %2262 = vmatpush2.bf16.msra.mxu0 0
        %2263 = vmatprep.subr.bf16.mxu0 0
        %2264 = vmatpush2.bf16.msra.mxu0 0
        %2265 = vmatprep.subr.bf16.mxu0 0
        %2266 = vmatpush2.bf16.msra.mxu0 0
        %2267 = vmatprep.subr.bf16.mxu0 0
        %2268 = vmatpush2.bf16.msra.mxu0 0
        %2269 = vmatprep.subr.bf16.mxu0 0
        %2270 = vmatpush2.bf16.msra.mxu0 0
        %2271 = vmatprep.subr.bf16.mxu0 0
        %2272 = vmatpush2.bf16.msra.mxu0 0
        %2273 = vmatprep.mubr.bf16.mxu0 0
        %2274 = vmatmul.mubr.bf16.gmra.mxu0 %v812
        %v2275 = vpop.f32.mrf.mxu0
        %v2276 = vadd.f32 %v2233, %v2275
        %v2277 = vpop.f32.mrf.mxu0
        %v2278 = vadd.f32 %v2235, %v2277
        %v2279 = vpop.f32.mrf.mxu0
        %v2280 = vadd.f32 %v2237, %v2279
        %v2281 = vpop.f32.mrf.mxu0
        %v2282 = vadd.f32 %v2239, %v2281
        %2283 = vdwg.mxu0
        %v2284 = vmax.f32 %v2104, 0.0
        %v2285 = vmax.f32 %v2106, 0.0
        %v2286 = vmax.f32 %v2276, 0.0
        %v2287 = vmax.f32 %v2278, 0.0
        %v2288 = vmax.f32 %v2108, 0.0
        %v2289 = vmax.f32 %v2110, 0.0
        %v2290 = vmax.f32 %v2280, 0.0
        %v2291 = vmax.f32 %v2282, 0.0
        %v2292 = vpack.c.bf16 %v2288, %v2284
        %v2293 = vpack.c.bf16 %v2289, %v2285
        %v2294 = vpack.c.bf16 %v2290, %v2286
        %v2295 = vpack.c.bf16 %v2291, %v2287
        %v2296 = vld [vmem:[#allocation4] sm:$0xff]
        %v2297 = vld [vmem:[#allocation4 + $0x8] sm:$0xff]
        %v2298 = vld [vmem:[#allocation4 + $0x10] sm:$0xff]
        %v2299 = vld [vmem:[#allocation4 + $0x18] sm:$0xff]
        %v2300 = vld [vmem:[#allocation4 + $0x20] sm:$0xff]
        %v2301 = vld [vmem:[#allocation4 + $0x28] sm:$0xff]
        %v2302 = vld [vmem:[#allocation4 + $0x30] sm:$0xff]
        %v2303 = vld [vmem:[#allocation4 + $0x38] sm:$0xff]
        %v2304 = vld [vmem:[#allocation4 + $0x40] sm:$0xff]
        %v2305 = vld [vmem:[#allocation4 + $0x48] sm:$0xff]
        %v2306 = vld [vmem:[#allocation4 + $0x50] sm:$0xff]
        %v2307 = vld [vmem:[#allocation4 + $0x58] sm:$0xff]
        %v2308 = vld [vmem:[#allocation4 + $0x60] sm:$0xff]
        %v2309 = vld [vmem:[#allocation4 + $0x68] sm:$0xff]
        %v2310 = vld [vmem:[#allocation4 + $0x70] sm:$0xff]
        %v2311 = vld [vmem:[#allocation4 + $0x78] sm:$0xff]
        %v2312 = vld [vmem:[#allocation4 + $0x80] sm:$0xff]
        %v2313 = vld [vmem:[#allocation4 + $0x88] sm:$0xff]
        %v2314 = vld [vmem:[#allocation4 + $0x90] sm:$0xff]
        %v2315 = vld [vmem:[#allocation4 + $0x98] sm:$0xff]
        %v2316 = vld [vmem:[#allocation4 + $0xa0] sm:$0xff]
        %v2317 = vld [vmem:[#allocation4 + $0xa8] sm:$0xff]
        %v2318 = vld [vmem:[#allocation4 + $0xb0] sm:$0xff]
        %v2319 = vld [vmem:[#allocation4 + $0xb8] sm:$0xff]
        %v2320 = vld [vmem:[#allocation4 + $0xc0] sm:$0xff]
        %v2321 = vld [vmem:[#allocation4 + $0xc8] sm:$0xff]
        %v2322 = vld [vmem:[#allocation4 + $0xd0] sm:$0xff]
        %v2323 = vld [vmem:[#allocation4 + $0xd8] sm:$0xff]
        %v2324 = vld [vmem:[#allocation4 + $0xe0] sm:$0xff]
        %v2325 = vld [vmem:[#allocation4 + $0xe8] sm:$0xff]
        %v2326 = vld [vmem:[#allocation4 + $0xf0] sm:$0xff]
        %v2327 = vld [vmem:[#allocation4 + $0xf8] sm:$0xff]
        %v2328 = vld [vmem:[#allocation4 + $0x100] sm:$0xff]
        %v2329 = vld [vmem:[#allocation4 + $0x108] sm:$0xff]
        %v2330 = vld [vmem:[#allocation4 + $0x110] sm:$0xff]
        %v2331 = vld [vmem:[#allocation4 + $0x118] sm:$0xff]
        %v2332 = vld [vmem:[#allocation4 + $0x120] sm:$0xff]
        %v2333 = vld [vmem:[#allocation4 + $0x128] sm:$0xff]
        %v2334 = vld [vmem:[#allocation4 + $0x130] sm:$0xff]
        %v2335 = vld [vmem:[#allocation4 + $0x138] sm:$0xff]
        %v2336 = vld [vmem:[#allocation4 + $0x140] sm:$0xff]
        %v2337 = vld [vmem:[#allocation4 + $0x148] sm:$0xff]
        %v2338 = vld [vmem:[#allocation4 + $0x150] sm:$0xff]
        %v2339 = vld [vmem:[#allocation4 + $0x158] sm:$0xff]
        %v2340 = vld [vmem:[#allocation4 + $0x160] sm:$0xff]
        %v2341 = vld [vmem:[#allocation4 + $0x168] sm:$0xff]
        %v2342 = vld [vmem:[#allocation4 + $0x170] sm:$0xff]
        %v2343 = vld [vmem:[#allocation4 + $0x178] sm:$0xff]
        %v2344 = vld [vmem:[#allocation4 + $0x180] sm:$0xff]
        %v2345 = vld [vmem:[#allocation4 + $0x188] sm:$0xff]
        %v2346 = vld [vmem:[#allocation4 + $0x190] sm:$0xff]
        %v2347 = vld [vmem:[#allocation4 + $0x198] sm:$0xff]
        %v2348 = vld [vmem:[#allocation4 + $0x1a0] sm:$0xff]
        %v2349 = vld [vmem:[#allocation4 + $0x1a8] sm:$0xff]
        %v2350 = vld [vmem:[#allocation4 + $0x1b0] sm:$0xff]
        %v2351 = vld [vmem:[#allocation4 + $0x1b8] sm:$0xff]
        %v2352 = vld [vmem:[#allocation4 + $0x1c0] sm:$0xff]
        %v2353 = vld [vmem:[#allocation4 + $0x1c8] sm:$0xff]
        %v2354 = vld [vmem:[#allocation4 + $0x1d0] sm:$0xff]
        %v2355 = vld [vmem:[#allocation4 + $0x1d8] sm:$0xff]
        %v2356 = vld [vmem:[#allocation4 + $0x1e0] sm:$0xff]
        %v2357 = vld [vmem:[#allocation4 + $0x1e8] sm:$0xff]
        %v2358 = vld [vmem:[#allocation4 + $0x1f0] sm:$0xff]
        %v2359 = vld [vmem:[#allocation4 + $0x1f8] sm:$0xff]
        %v2360 = vld [vmem:[#allocation4 + $0x200] sm:$0xff]
        %v2361 = vld [vmem:[#allocation4 + $0x208] sm:$0xff]
        %v2362 = vld [vmem:[#allocation4 + $0x210] sm:$0xff]
        %v2363 = vld [vmem:[#allocation4 + $0x218] sm:$0xff]
        %v2364 = vld [vmem:[#allocation4 + $0x220] sm:$0xff]
        %v2365 = vld [vmem:[#allocation4 + $0x228] sm:$0xff]
        %v2366 = vld [vmem:[#allocation4 + $0x230] sm:$0xff]
        %v2367 = vld [vmem:[#allocation4 + $0x238] sm:$0xff]
        %v2368 = vld [vmem:[#allocation4 + $0x240] sm:$0xff]
        %v2369 = vld [vmem:[#allocation4 + $0x248] sm:$0xff]
        %v2370 = vld [vmem:[#allocation4 + $0x250] sm:$0xff]
        %v2371 = vld [vmem:[#allocation4 + $0x258] sm:$0xff]
        %v2372 = vld [vmem:[#allocation4 + $0x260] sm:$0xff]
        %v2373 = vld [vmem:[#allocation4 + $0x268] sm:$0xff]
        %v2374 = vld [vmem:[#allocation4 + $0x270] sm:$0xff]
        %v2375 = vld [vmem:[#allocation4 + $0x278] sm:$0xff]
        %v2376 = vld [vmem:[#allocation4 + $0x280] sm:$0xff]
        %v2377 = vld [vmem:[#allocation4 + $0x288] sm:$0xff]
        %v2378 = vld [vmem:[#allocation4 + $0x290] sm:$0xff]
        %v2379 = vld [vmem:[#allocation4 + $0x298] sm:$0xff]
        %v2380 = vld [vmem:[#allocation4 + $0x2a0] sm:$0xff]
        %v2381 = vld [vmem:[#allocation4 + $0x2a8] sm:$0xff]
        %v2382 = vld [vmem:[#allocation4 + $0x2b0] sm:$0xff]
        %v2383 = vld [vmem:[#allocation4 + $0x2b8] sm:$0xff]
        %v2384 = vld [vmem:[#allocation4 + $0x2c0] sm:$0xff]
        %v2385 = vld [vmem:[#allocation4 + $0x2c8] sm:$0xff]
        %v2386 = vld [vmem:[#allocation4 + $0x2d0] sm:$0xff]
        %v2387 = vld [vmem:[#allocation4 + $0x2d8] sm:$0xff]
        %v2388 = vld [vmem:[#allocation4 + $0x2e0] sm:$0xff]
        %v2389 = vld [vmem:[#allocation4 + $0x2e8] sm:$0xff]
        %v2390 = vld [vmem:[#allocation4 + $0x2f0] sm:$0xff]
        %v2391 = vld [vmem:[#allocation4 + $0x2f8] sm:$0xff]
        %v2392 = vld [vmem:[#allocation4 + $0x300] sm:$0xff]
        %v2393 = vld [vmem:[#allocation4 + $0x308] sm:$0xff]
        %v2394 = vld [vmem:[#allocation4 + $0x310] sm:$0xff]
        %v2395 = vld [vmem:[#allocation4 + $0x318] sm:$0xff]
        %v2396 = vld [vmem:[#allocation4 + $0x320] sm:$0xff]
        %v2397 = vld [vmem:[#allocation4 + $0x328] sm:$0xff]
        %v2398 = vld [vmem:[#allocation4 + $0x330] sm:$0xff]
        %v2399 = vld [vmem:[#allocation4 + $0x338] sm:$0xff]
        %v2400 = vld [vmem:[#allocation4 + $0x340] sm:$0xff]
        %v2401 = vld [vmem:[#allocation4 + $0x348] sm:$0xff]
        %v2402 = vld [vmem:[#allocation4 + $0x350] sm:$0xff]
        %v2403 = vld [vmem:[#allocation4 + $0x358] sm:$0xff]
        %v2404 = vld [vmem:[#allocation4 + $0x360] sm:$0xff]
        %v2405 = vld [vmem:[#allocation4 + $0x368] sm:$0xff]
        %v2406 = vld [vmem:[#allocation4 + $0x370] sm:$0xff]
        %v2407 = vld [vmem:[#allocation4 + $0x378] sm:$0xff]
        %v2408 = vld [vmem:[#allocation4 + $0x380] sm:$0xff]
        %v2409 = vld [vmem:[#allocation4 + $0x388] sm:$0xff]
        %v2410 = vld [vmem:[#allocation4 + $0x390] sm:$0xff]
        %v2411 = vld [vmem:[#allocation4 + $0x398] sm:$0xff]
        %v2412 = vld [vmem:[#allocation4 + $0x3a0] sm:$0xff]
        %v2413 = vld [vmem:[#allocation4 + $0x3a8] sm:$0xff]
        %v2414 = vld [vmem:[#allocation4 + $0x3b0] sm:$0xff]
        %v2415 = vld [vmem:[#allocation4 + $0x3b8] sm:$0xff]
        %v2416 = vld [vmem:[#allocation4 + $0x3c0] sm:$0xff]
        %v2417 = vld [vmem:[#allocation4 + $0x3c8] sm:$0xff]
        %v2418 = vld [vmem:[#allocation4 + $0x3d0] sm:$0xff]
        %v2419 = vld [vmem:[#allocation4 + $0x3d8] sm:$0xff]
        %v2420 = vld [vmem:[#allocation4 + $0x3e0] sm:$0xff]
        %v2421 = vld [vmem:[#allocation4 + $0x3e8] sm:$0xff]
        %v2422 = vld [vmem:[#allocation4 + $0x3f0] sm:$0xff]
        %v2423 = vld [vmem:[#allocation4 + $0x3f8] sm:$0xff]
        %v2424 = vld [vmem:[%s5] sm:$0xf]
        %v2426 = vlaneseq
        %v2427 = vshrl.u32 %v2426, 7
        %v2428 = vsub.s32 0, %v2427
        %v2429 = vrot.slane %v2424, %v2428
        %v2430 = vlaneseq
        %v2431 = vshrl.u32 %v2430, 7
        %v2432 = vsub.s32 1, %v2431
        %v2433 = vrot.slane %v2424, %v2432
        %v2434 = vlaneseq
        %v2435 = vshrl.u32 %v2434, 7
        %v2436 = vsub.s32 2, %v2435
        %v2437 = vrot.slane %v2424, %v2436
        %v2438 = vlaneseq
        %v2439 = vshrl.u32 %v2438, 7
        %v2440 = vsub.s32 3, %v2439
        %v2441 = vrot.slane %v2424, %v2440
        %v2574 = vunpack.c.l.b16 %v2296
        %v2575 = vunpack.c.h.b16 %v2296
        %v2576 = vunpack.c.l.b16 %v2297
        %v2577 = vunpack.c.h.b16 %v2297
        %v2578 = vunpack.c.l.b16 %v2298
        %v2579 = vunpack.c.h.b16 %v2298
        %v2580 = vunpack.c.l.b16 %v2299
        %v2581 = vunpack.c.h.b16 %v2299
        %v2582 = vunpack.c.l.b16 %v2300
        %v2583 = vunpack.c.h.b16 %v2300
        %v2584 = vunpack.c.l.b16 %v2301
        %v2585 = vunpack.c.h.b16 %v2301
        %v2586 = vunpack.c.l.b16 %v2302
        %v2587 = vunpack.c.h.b16 %v2302
        %v2588 = vunpack.c.l.b16 %v2303
        %v2589 = vunpack.c.h.b16 %v2303
        %v2590 = vunpack.c.l.b16 %v2304
        %v2591 = vunpack.c.h.b16 %v2304
        %v2592 = vunpack.c.l.b16 %v2305
        %v2593 = vunpack.c.h.b16 %v2305
        %v2594 = vunpack.c.l.b16 %v2306
        %v2595 = vunpack.c.h.b16 %v2306
        %v2596 = vunpack.c.l.b16 %v2307
        %v2597 = vunpack.c.h.b16 %v2307
        %v2598 = vunpack.c.l.b16 %v2308
        %v2599 = vunpack.c.h.b16 %v2308
        %v2600 = vunpack.c.l.b16 %v2309
        %v2601 = vunpack.c.h.b16 %v2309
        %v2602 = vunpack.c.l.b16 %v2310
        %v2603 = vunpack.c.h.b16 %v2310
        %v2604 = vunpack.c.l.b16 %v2311
        %v2605 = vunpack.c.h.b16 %v2311
        %v2606 = vunpack.c.l.b16 %v2312
        %v2607 = vunpack.c.h.b16 %v2312
        %v2608 = vunpack.c.l.b16 %v2313
        %v2609 = vunpack.c.h.b16 %v2313
        %v2610 = vunpack.c.l.b16 %v2314
        %v2611 = vunpack.c.h.b16 %v2314
        %v2612 = vunpack.c.l.b16 %v2315
        %v2613 = vunpack.c.h.b16 %v2315
        %v2614 = vunpack.c.l.b16 %v2316
        %v2615 = vunpack.c.h.b16 %v2316
        %v2616 = vunpack.c.l.b16 %v2317
        %v2617 = vunpack.c.h.b16 %v2317
        %v2618 = vunpack.c.l.b16 %v2318
        %v2619 = vunpack.c.h.b16 %v2318
        %v2620 = vunpack.c.l.b16 %v2319
        %v2621 = vunpack.c.h.b16 %v2319
        %v2622 = vunpack.c.l.b16 %v2320
        %v2623 = vunpack.c.h.b16 %v2320
        %v2624 = vunpack.c.l.b16 %v2321
        %v2625 = vunpack.c.h.b16 %v2321
        %v2626 = vunpack.c.l.b16 %v2322
        %v2627 = vunpack.c.h.b16 %v2322
        %v2628 = vunpack.c.l.b16 %v2323
        %v2629 = vunpack.c.h.b16 %v2323
        %v2630 = vunpack.c.l.b16 %v2324
        %v2631 = vunpack.c.h.b16 %v2324
        %v2632 = vunpack.c.l.b16 %v2325
        %v2633 = vunpack.c.h.b16 %v2325
        %v2634 = vunpack.c.l.b16 %v2326
        %v2635 = vunpack.c.h.b16 %v2326
        %v2636 = vunpack.c.l.b16 %v2327
        %v2637 = vunpack.c.h.b16 %v2327
        %v2638 = vunpack.c.l.b16 %v2328
        %v2639 = vunpack.c.h.b16 %v2328
        %v2640 = vunpack.c.l.b16 %v2329
        %v2641 = vunpack.c.h.b16 %v2329
        %v2642 = vunpack.c.l.b16 %v2330
        %v2643 = vunpack.c.h.b16 %v2330
        %v2644 = vunpack.c.l.b16 %v2331
        %v2645 = vunpack.c.h.b16 %v2331
        %v2646 = vunpack.c.l.b16 %v2332
        %v2647 = vunpack.c.h.b16 %v2332
        %v2648 = vunpack.c.l.b16 %v2333
        %v2649 = vunpack.c.h.b16 %v2333
        %v2650 = vunpack.c.l.b16 %v2334
        %v2651 = vunpack.c.h.b16 %v2334
        %v2652 = vunpack.c.l.b16 %v2335
        %v2653 = vunpack.c.h.b16 %v2335
        %v2654 = vunpack.c.l.b16 %v2336
        %v2655 = vunpack.c.h.b16 %v2336
        %v2656 = vunpack.c.l.b16 %v2337
        %v2657 = vunpack.c.h.b16 %v2337
        %v2658 = vunpack.c.l.b16 %v2338
        %v2659 = vunpack.c.h.b16 %v2338
        %v2660 = vunpack.c.l.b16 %v2339
        %v2661 = vunpack.c.h.b16 %v2339
        %v2662 = vunpack.c.l.b16 %v2340
        %v2663 = vunpack.c.h.b16 %v2340
        %v2664 = vunpack.c.l.b16 %v2341
        %v2665 = vunpack.c.h.b16 %v2341
        %v2666 = vunpack.c.l.b16 %v2342
        %v2667 = vunpack.c.h.b16 %v2342
        %v2668 = vunpack.c.l.b16 %v2343
        %v2669 = vunpack.c.h.b16 %v2343
        %v2670 = vunpack.c.l.b16 %v2344
        %v2671 = vunpack.c.h.b16 %v2344
        %v2672 = vunpack.c.l.b16 %v2345
        %v2673 = vunpack.c.h.b16 %v2345
        %v2674 = vunpack.c.l.b16 %v2346
        %v2675 = vunpack.c.h.b16 %v2346
        %v2676 = vunpack.c.l.b16 %v2347
        %v2677 = vunpack.c.h.b16 %v2347
        %v2678 = vunpack.c.l.b16 %v2348
        %v2679 = vunpack.c.h.b16 %v2348
        %v2680 = vunpack.c.l.b16 %v2349
        %v2681 = vunpack.c.h.b16 %v2349
        %v2682 = vunpack.c.l.b16 %v2350
        %v2683 = vunpack.c.h.b16 %v2350
        %v2684 = vunpack.c.l.b16 %v2351
        %v2685 = vunpack.c.h.b16 %v2351
        %v2686 = vunpack.c.l.b16 %v2352
        %v2687 = vunpack.c.h.b16 %v2352
        %v2688 = vunpack.c.l.b16 %v2353
        %v2689 = vunpack.c.h.b16 %v2353
        %v2690 = vunpack.c.l.b16 %v2354
        %v2691 = vunpack.c.h.b16 %v2354
        %v2692 = vunpack.c.l.b16 %v2355
        %v2693 = vunpack.c.h.b16 %v2355
        %v2694 = vunpack.c.l.b16 %v2356
        %v2695 = vunpack.c.h.b16 %v2356
        %v2696 = vunpack.c.l.b16 %v2357
        %v2697 = vunpack.c.h.b16 %v2357
        %v2698 = vunpack.c.l.b16 %v2358
        %v2699 = vunpack.c.h.b16 %v2358
        %v2700 = vunpack.c.l.b16 %v2359
        %v2701 = vunpack.c.h.b16 %v2359
        %v2702 = vunpack.c.l.b16 %v2360
        %v2703 = vunpack.c.h.b16 %v2360
        %v2704 = vunpack.c.l.b16 %v2361
        %v2705 = vunpack.c.h.b16 %v2361
        %v2706 = vunpack.c.l.b16 %v2362
        %v2707 = vunpack.c.h.b16 %v2362
        %v2708 = vunpack.c.l.b16 %v2363
        %v2709 = vunpack.c.h.b16 %v2363
        %v2710 = vunpack.c.l.b16 %v2364
        %v2711 = vunpack.c.h.b16 %v2364
        %v2712 = vunpack.c.l.b16 %v2365
        %v2713 = vunpack.c.h.b16 %v2365
        %v2714 = vunpack.c.l.b16 %v2366
        %v2715 = vunpack.c.h.b16 %v2366
        %v2716 = vunpack.c.l.b16 %v2367
        %v2717 = vunpack.c.h.b16 %v2367
        %v2718 = vunpack.c.l.b16 %v2368
        %v2719 = vunpack.c.h.b16 %v2368
        %v2720 = vunpack.c.l.b16 %v2369
        %v2721 = vunpack.c.h.b16 %v2369
        %v2722 = vunpack.c.l.b16 %v2370
        %v2723 = vunpack.c.h.b16 %v2370
        %v2724 = vunpack.c.l.b16 %v2371
        %v2725 = vunpack.c.h.b16 %v2371
        %v2726 = vunpack.c.l.b16 %v2372
        %v2727 = vunpack.c.h.b16 %v2372
        %v2728 = vunpack.c.l.b16 %v2373
        %v2729 = vunpack.c.h.b16 %v2373
        %v2730 = vunpack.c.l.b16 %v2374
        %v2731 = vunpack.c.h.b16 %v2374
        %v2732 = vunpack.c.l.b16 %v2375
        %v2733 = vunpack.c.h.b16 %v2375
        %v2734 = vunpack.c.l.b16 %v2376
        %v2735 = vunpack.c.h.b16 %v2376
        %v2736 = vunpack.c.l.b16 %v2377
        %v2737 = vunpack.c.h.b16 %v2377
        %v2738 = vunpack.c.l.b16 %v2378
        %v2739 = vunpack.c.h.b16 %v2378
        %v2740 = vunpack.c.l.b16 %v2379
        %v2741 = vunpack.c.h.b16 %v2379
        %v2742 = vunpack.c.l.b16 %v2380
        %v2743 = vunpack.c.h.b16 %v2380
        %v2744 = vunpack.c.l.b16 %v2381
        %v2745 = vunpack.c.h.b16 %v2381
        %v2746 = vunpack.c.l.b16 %v2382
        %v2747 = vunpack.c.h.b16 %v2382
        %v2748 = vunpack.c.l.b16 %v2383
        %v2749 = vunpack.c.h.b16 %v2383
        %v2750 = vunpack.c.l.b16 %v2384
        %v2751 = vunpack.c.h.b16 %v2384
        %v2752 = vunpack.c.l.b16 %v2385
        %v2753 = vunpack.c.h.b16 %v2385
        %v2754 = vunpack.c.l.b16 %v2386
        %v2755 = vunpack.c.h.b16 %v2386
        %v2756 = vunpack.c.l.b16 %v2387
        %v2757 = vunpack.c.h.b16 %v2387
        %v2758 = vunpack.c.l.b16 %v2388
        %v2759 = vunpack.c.h.b16 %v2388
        %v2760 = vunpack.c.l.b16 %v2389
        %v2761 = vunpack.c.h.b16 %v2389
        %v2762 = vunpack.c.l.b16 %v2390
        %v2763 = vunpack.c.h.b16 %v2390
        %v2764 = vunpack.c.l.b16 %v2391
        %v2765 = vunpack.c.h.b16 %v2391
        %v2766 = vunpack.c.l.b16 %v2392
        %v2767 = vunpack.c.h.b16 %v2392
        %v2768 = vunpack.c.l.b16 %v2393
        %v2769 = vunpack.c.h.b16 %v2393
        %v2770 = vunpack.c.l.b16 %v2394
        %v2771 = vunpack.c.h.b16 %v2394
        %v2772 = vunpack.c.l.b16 %v2395
        %v2773 = vunpack.c.h.b16 %v2395
        %v2774 = vunpack.c.l.b16 %v2396
        %v2775 = vunpack.c.h.b16 %v2396
        %v2776 = vunpack.c.l.b16 %v2397
        %v2777 = vunpack.c.h.b16 %v2397
        %v2778 = vunpack.c.l.b16 %v2398
        %v2779 = vunpack.c.h.b16 %v2398
        %v2780 = vunpack.c.l.b16 %v2399
        %v2781 = vunpack.c.h.b16 %v2399
        %v2782 = vunpack.c.l.b16 %v2400
        %v2783 = vunpack.c.h.b16 %v2400
        %v2784 = vunpack.c.l.b16 %v2401
        %v2785 = vunpack.c.h.b16 %v2401
        %v2786 = vunpack.c.l.b16 %v2402
        %v2787 = vunpack.c.h.b16 %v2402
        %v2788 = vunpack.c.l.b16 %v2403
        %v2789 = vunpack.c.h.b16 %v2403
        %v2790 = vunpack.c.l.b16 %v2404
        %v2791 = vunpack.c.h.b16 %v2404
        %v2792 = vunpack.c.l.b16 %v2405
        %v2793 = vunpack.c.h.b16 %v2405
        %v2794 = vunpack.c.l.b16 %v2406
        %v2795 = vunpack.c.h.b16 %v2406
        %v2796 = vunpack.c.l.b16 %v2407
        %v2797 = vunpack.c.h.b16 %v2407
        %v2798 = vunpack.c.l.b16 %v2408
        %v2799 = vunpack.c.h.b16 %v2408
        %v2800 = vunpack.c.l.b16 %v2409
        %v2801 = vunpack.c.h.b16 %v2409
        %v2802 = vunpack.c.l.b16 %v2410
        %v2803 = vunpack.c.h.b16 %v2410
        %v2804 = vunpack.c.l.b16 %v2411
        %v2805 = vunpack.c.h.b16 %v2411
        %v2806 = vunpack.c.l.b16 %v2412
        %v2807 = vunpack.c.h.b16 %v2412
        %v2808 = vunpack.c.l.b16 %v2413
        %v2809 = vunpack.c.h.b16 %v2413
        %v2810 = vunpack.c.l.b16 %v2414
        %v2811 = vunpack.c.h.b16 %v2414
        %v2812 = vunpack.c.l.b16 %v2415
        %v2813 = vunpack.c.h.b16 %v2415
        %v2814 = vunpack.c.l.b16 %v2416
        %v2815 = vunpack.c.h.b16 %v2416
        %v2816 = vunpack.c.l.b16 %v2417
        %v2817 = vunpack.c.h.b16 %v2417
        %v2818 = vunpack.c.l.b16 %v2418
        %v2819 = vunpack.c.h.b16 %v2418
        %v2820 = vunpack.c.l.b16 %v2419
        %v2821 = vunpack.c.h.b16 %v2419
        %v2822 = vunpack.c.l.b16 %v2420
        %v2823 = vunpack.c.h.b16 %v2420
        %v2824 = vunpack.c.l.b16 %v2421
        %v2825 = vunpack.c.h.b16 %v2421
        %v2826 = vunpack.c.l.b16 %v2422
        %v2827 = vunpack.c.h.b16 %v2422
        %v2828 = vunpack.c.l.b16 %v2423
        %v2829 = vunpack.c.h.b16 %v2423
        %v2830 = vpack.c.b16 %v2578, %v2574
        %v2831 = vpack.c.b16 %v2579, %v2575
        %v2832 = vpack.c.b16 %v2580, %v2576
        %v2833 = vpack.c.b16 %v2581, %v2577
        %v2834 = vpack.c.b16 %v2586, %v2582
        %v2835 = vpack.c.b16 %v2587, %v2583
        %v2836 = vpack.c.b16 %v2588, %v2584
        %v2837 = vpack.c.b16 %v2589, %v2585
        %v2838 = vpack.c.b16 %v2594, %v2590
        %v2839 = vpack.c.b16 %v2595, %v2591
        %v2840 = vpack.c.b16 %v2596, %v2592
        %v2841 = vpack.c.b16 %v2597, %v2593
        %v2842 = vpack.c.b16 %v2602, %v2598
        %v2843 = vpack.c.b16 %v2603, %v2599
        %v2844 = vpack.c.b16 %v2604, %v2600
        %v2845 = vpack.c.b16 %v2605, %v2601
        %v2846 = vpack.c.b16 %v2610, %v2606
        %v2847 = vpack.c.b16 %v2611, %v2607
        %v2848 = vpack.c.b16 %v2612, %v2608
        %v2849 = vpack.c.b16 %v2613, %v2609
        %v2850 = vpack.c.b16 %v2618, %v2614
        %v2851 = vpack.c.b16 %v2619, %v2615
        %v2852 = vpack.c.b16 %v2620, %v2616
        %v2853 = vpack.c.b16 %v2621, %v2617
        %v2854 = vpack.c.b16 %v2626, %v2622
        %v2855 = vpack.c.b16 %v2627, %v2623
        %v2856 = vpack.c.b16 %v2628, %v2624
        %v2857 = vpack.c.b16 %v2629, %v2625
        %v2858 = vpack.c.b16 %v2634, %v2630
        %v2859 = vpack.c.b16 %v2635, %v2631
        %v2860 = vpack.c.b16 %v2636, %v2632
        %v2861 = vpack.c.b16 %v2637, %v2633
        %v2862 = vpack.c.b16 %v2642, %v2638
        %v2863 = vpack.c.b16 %v2643, %v2639
        %v2864 = vpack.c.b16 %v2644, %v2640
        %v2865 = vpack.c.b16 %v2645, %v2641
        %v2866 = vpack.c.b16 %v2650, %v2646
        %v2867 = vpack.c.b16 %v2651, %v2647
        %v2868 = vpack.c.b16 %v2652, %v2648
        %v2869 = vpack.c.b16 %v2653, %v2649
        %v2870 = vpack.c.b16 %v2658, %v2654
        %v2871 = vpack.c.b16 %v2659, %v2655
        %v2872 = vpack.c.b16 %v2660, %v2656
        %v2873 = vpack.c.b16 %v2661, %v2657
        %v2874 = vpack.c.b16 %v2666, %v2662
        %v2875 = vpack.c.b16 %v2667, %v2663
        %v2876 = vpack.c.b16 %v2668, %v2664
        %v2877 = vpack.c.b16 %v2669, %v2665
        %v2878 = vpack.c.b16 %v2674, %v2670
        %v2879 = vpack.c.b16 %v2675, %v2671
        %v2880 = vpack.c.b16 %v2676, %v2672
        %v2881 = vpack.c.b16 %v2677, %v2673
        %v2882 = vpack.c.b16 %v2682, %v2678
        %v2883 = vpack.c.b16 %v2683, %v2679
        %v2884 = vpack.c.b16 %v2684, %v2680
        %v2885 = vpack.c.b16 %v2685, %v2681
        %v2886 = vpack.c.b16 %v2690, %v2686
        %v2887 = vpack.c.b16 %v2691, %v2687
        %v2888 = vpack.c.b16 %v2692, %v2688
        %v2889 = vpack.c.b16 %v2693, %v2689
        %v2890 = vpack.c.b16 %v2698, %v2694
        %v2891 = vpack.c.b16 %v2699, %v2695
        %v2892 = vpack.c.b16 %v2700, %v2696
        %v2893 = vpack.c.b16 %v2701, %v2697
        %v2894 = vpack.c.b16 %v2706, %v2702
        %v2895 = vpack.c.b16 %v2707, %v2703
        %v2896 = vpack.c.b16 %v2708, %v2704
        %v2897 = vpack.c.b16 %v2709, %v2705
        %v2898 = vpack.c.b16 %v2714, %v2710
        %v2899 = vpack.c.b16 %v2715, %v2711
        %v2900 = vpack.c.b16 %v2716, %v2712
        %v2901 = vpack.c.b16 %v2717, %v2713
        %v2902 = vpack.c.b16 %v2722, %v2718
        %v2903 = vpack.c.b16 %v2723, %v2719
        %v2904 = vpack.c.b16 %v2724, %v2720
        %v2905 = vpack.c.b16 %v2725, %v2721
        %v2906 = vpack.c.b16 %v2730, %v2726
        %v2907 = vpack.c.b16 %v2731, %v2727
        %v2908 = vpack.c.b16 %v2732, %v2728
        %v2909 = vpack.c.b16 %v2733, %v2729
        %v2910 = vpack.c.b16 %v2738, %v2734
        %v2911 = vpack.c.b16 %v2739, %v2735
        %v2912 = vpack.c.b16 %v2740, %v2736
        %v2913 = vpack.c.b16 %v2741, %v2737
        %v2914 = vpack.c.b16 %v2746, %v2742
        %v2915 = vpack.c.b16 %v2747, %v2743
        %v2916 = vpack.c.b16 %v2748, %v2744
        %v2917 = vpack.c.b16 %v2749, %v2745
        %v2918 = vpack.c.b16 %v2754, %v2750
        %v2919 = vpack.c.b16 %v2755, %v2751
        %v2920 = vpack.c.b16 %v2756, %v2752
        %v2921 = vpack.c.b16 %v2757, %v2753
        %v2922 = vpack.c.b16 %v2762, %v2758
        %v2923 = vpack.c.b16 %v2763, %v2759
        %v2924 = vpack.c.b16 %v2764, %v2760
        %v2925 = vpack.c.b16 %v2765, %v2761
        %v2926 = vpack.c.b16 %v2770, %v2766
        %v2927 = vpack.c.b16 %v2771, %v2767
        %v2928 = vpack.c.b16 %v2772, %v2768
        %v2929 = vpack.c.b16 %v2773, %v2769
        %v2930 = vpack.c.b16 %v2778, %v2774
        %v2931 = vpack.c.b16 %v2779, %v2775
        %v2932 = vpack.c.b16 %v2780, %v2776
        %v2933 = vpack.c.b16 %v2781, %v2777
        %v2934 = vpack.c.b16 %v2786, %v2782
        %v2935 = vpack.c.b16 %v2787, %v2783
        %v2936 = vpack.c.b16 %v2788, %v2784
        %v2937 = vpack.c.b16 %v2789, %v2785
        %v2938 = vpack.c.b16 %v2794, %v2790
        %v2939 = vpack.c.b16 %v2795, %v2791
        %v2940 = vpack.c.b16 %v2796, %v2792
        %v2941 = vpack.c.b16 %v2797, %v2793
        %v2942 = vpack.c.b16 %v2802, %v2798
        %v2943 = vpack.c.b16 %v2803, %v2799
        %v2944 = vpack.c.b16 %v2804, %v2800
        %v2945 = vpack.c.b16 %v2805, %v2801
        %v2946 = vpack.c.b16 %v2810, %v2806
        %v2947 = vpack.c.b16 %v2811, %v2807
        %v2948 = vpack.c.b16 %v2812, %v2808
        %v2949 = vpack.c.b16 %v2813, %v2809
        %v2950 = vpack.c.b16 %v2818, %v2814
        %v2951 = vpack.c.b16 %v2819, %v2815
        %v2952 = vpack.c.b16 %v2820, %v2816
        %v2953 = vpack.c.b16 %v2821, %v2817
        %v2954 = vpack.c.b16 %v2826, %v2822
        %v2955 = vpack.c.b16 %v2827, %v2823
        %v2956 = vpack.c.b16 %v2828, %v2824
        %v2957 = vpack.c.b16 %v2829, %v2825
        %3086 = vmatprep.subr.bf16.mxu0 %v2859
        %3087 = vmatpush1.bf16.msra.mxu0 %v2858
        %3088 = vmatprep.subr.bf16.mxu0 %v2855
        %3089 = vmatpush1.bf16.msra.mxu0 %v2854
        %3090 = vmatprep.subr.bf16.mxu0 %v2851
        %3091 = vmatpush1.bf16.msra.mxu0 %v2850
        %3092 = vmatprep.subr.bf16.mxu0 %v2847
        %3093 = vmatpush1.bf16.msra.mxu0 %v2846
        %3094 = vmatprep.subr.bf16.mxu0 %v2843
        %3095 = vmatpush1.bf16.msra.mxu0 %v2842
        %3096 = vmatprep.subr.bf16.mxu0 %v2839
        %3097 = vmatpush1.bf16.msra.mxu0 %v2838
        %3098 = vmatprep.subr.bf16.mxu0 %v2835
        %3099 = vmatpush1.bf16.msra.mxu0 %v2834
        %3100 = vmatprep.subr.bf16.mxu0 %v2831
        %3101 = vmatpush1.bf16.msra.mxu0 %v2830
        %3102 = vmatprep.subr.bf16.mxu0 %v2891
        %3103 = vmatpush2.bf16.msra.mxu0 %v2890
        %3104 = vmatprep.subr.bf16.mxu0 %v2887
        %3105 = vmatpush2.bf16.msra.mxu0 %v2886
        %3106 = vmatprep.subr.bf16.mxu0 %v2883
        %3107 = vmatpush2.bf16.msra.mxu0 %v2882
        %3108 = vmatprep.subr.bf16.mxu0 %v2879
        %3109 = vmatpush2.bf16.msra.mxu0 %v2878
        %3110 = vmatprep.subr.bf16.mxu0 %v2875
        %3111 = vmatpush2.bf16.msra.mxu0 %v2874
        %3112 = vmatprep.subr.bf16.mxu0 %v2871
        %3113 = vmatpush2.bf16.msra.mxu0 %v2870
        %3114 = vmatprep.subr.bf16.mxu0 %v2867
        %3115 = vmatpush2.bf16.msra.mxu0 %v2866
        %3116 = vmatprep.subr.bf16.mxu0 %v2863
        %3117 = vmatpush2.bf16.msra.mxu0 %v2862
        %3118 = vmatprep.mubr.bf16.mxu0 %v2293
        %3119 = vmatmul.mubr.bf16.gmra.mxu0 %v2292
        %v3120 = vpop.f32.mrf.mxu0
        %v3121 = vadd.f32 %v2429, %v3120
        %v3122 = vpop.f32.mrf.mxu0
        %v3123 = vadd.f32 %v2433, %v3122
        %v3124 = vpop.f32.mrf.mxu0
        %v3125 = vadd.f32 %v2429, %v3124
        %v3126 = vpop.f32.mrf.mxu0
        %v3127 = vadd.f32 %v2433, %v3126
        %3128 = vdwg.mxu0
        %3129 = vmatprep.subr.bf16.mxu0 %v2923
        %3130 = vmatpush1.bf16.msra.mxu0 %v2922
        %3131 = vmatprep.subr.bf16.mxu0 %v2919
        %3132 = vmatpush1.bf16.msra.mxu0 %v2918
        %3133 = vmatprep.subr.bf16.mxu0 %v2915
        %3134 = vmatpush1.bf16.msra.mxu0 %v2914
        %3135 = vmatprep.subr.bf16.mxu0 %v2911
        %3136 = vmatpush1.bf16.msra.mxu0 %v2910
        %3137 = vmatprep.subr.bf16.mxu0 %v2907
        %3138 = vmatpush1.bf16.msra.mxu0 %v2906
        %3139 = vmatprep.subr.bf16.mxu0 %v2903
        %3140 = vmatpush1.bf16.msra.mxu0 %v2902
        %3141 = vmatprep.subr.bf16.mxu0 %v2899
        %3142 = vmatpush1.bf16.msra.mxu0 %v2898
        %3143 = vmatprep.subr.bf16.mxu0 %v2895
        %3144 = vmatpush1.bf16.msra.mxu0 %v2894
        %3145 = vmatprep.subr.bf16.mxu0 %v2955
        %3146 = vmatpush2.bf16.msra.mxu0 %v2954
        %3147 = vmatprep.subr.bf16.mxu0 %v2951
        %3148 = vmatpush2.bf16.msra.mxu0 %v2950
        %3149 = vmatprep.subr.bf16.mxu0 %v2947
        %3150 = vmatpush2.bf16.msra.mxu0 %v2946
        %3151 = vmatprep.subr.bf16.mxu0 %v2943
        %3152 = vmatpush2.bf16.msra.mxu0 %v2942
        %3153 = vmatprep.subr.bf16.mxu0 %v2939
        %3154 = vmatpush2.bf16.msra.mxu0 %v2938
        %3155 = vmatprep.subr.bf16.mxu0 %v2935
        %3156 = vmatpush2.bf16.msra.mxu0 %v2934
        %3157 = vmatprep.subr.bf16.mxu0 %v2931
        %3158 = vmatpush2.bf16.msra.mxu0 %v2930
        %3159 = vmatprep.subr.bf16.mxu0 %v2927
        %3160 = vmatpush2.bf16.msra.mxu0 %v2926
        %3161 = vmatprep.mubr.bf16.mxu0 %v2295
        %3162 = vmatmul.mubr.bf16.gmra.mxu0 %v2294
        %v3163 = vpop.f32.mrf.mxu0
        %v3164 = vadd.f32 %v3121, %v3163
        %v3165 = vpop.f32.mrf.mxu0
        %v3166 = vadd.f32 %v3123, %v3165
        %v3167 = vpop.f32.mrf.mxu0
        %v3168 = vadd.f32 %v3125, %v3167
        %v3169 = vpop.f32.mrf.mxu0
        %v3170 = vadd.f32 %v3127, %v3169
        %3171 = vdwg.mxu0
        %3172 = vmatprep.subr.bf16.mxu0 %v2861
        %3173 = vmatpush1.bf16.msra.mxu0 %v2860
        %3174 = vmatprep.subr.bf16.mxu0 %v2857
        %3175 = vmatpush1.bf16.msra.mxu0 %v2856
        %3176 = vmatprep.subr.bf16.mxu0 %v2853
        %3177 = vmatpush1.bf16.msra.mxu0 %v2852
        %3178 = vmatprep.subr.bf16.mxu0 %v2849
        %3179 = vmatpush1.bf16.msra.mxu0 %v2848
        %3180 = vmatprep.subr.bf16.mxu0 %v2845
        %3181 = vmatpush1.bf16.msra.mxu0 %v2844
        %3182 = vmatprep.subr.bf16.mxu0 %v2841
        %3183 = vmatpush1.bf16.msra.mxu0 %v2840
        %3184 = vmatprep.subr.bf16.mxu0 %v2837
        %3185 = vmatpush1.bf16.msra.mxu0 %v2836
        %3186 = vmatprep.subr.bf16.mxu0 %v2833
        %3187 = vmatpush1.bf16.msra.mxu0 %v2832
        %3188 = vmatprep.subr.bf16.mxu0 %v2893
        %3189 = vmatpush2.bf16.msra.mxu0 %v2892
        %3190 = vmatprep.subr.bf16.mxu0 %v2889
        %3191 = vmatpush2.bf16.msra.mxu0 %v2888
        %3192 = vmatprep.subr.bf16.mxu0 %v2885
        %3193 = vmatpush2.bf16.msra.mxu0 %v2884
        %3194 = vmatprep.subr.bf16.mxu0 %v2881
        %3195 = vmatpush2.bf16.msra.mxu0 %v2880
        %3196 = vmatprep.subr.bf16.mxu0 %v2877
        %3197 = vmatpush2.bf16.msra.mxu0 %v2876
        %3198 = vmatprep.subr.bf16.mxu0 %v2873
        %3199 = vmatpush2.bf16.msra.mxu0 %v2872
        %3200 = vmatprep.subr.bf16.mxu0 %v2869
        %3201 = vmatpush2.bf16.msra.mxu0 %v2868
        %3202 = vmatprep.subr.bf16.mxu0 %v2865
        %3203 = vmatpush2.bf16.msra.mxu0 %v2864
        %3204 = vmatprep.mubr.bf16.mxu0 %v2293
        %3205 = vmatmul.mubr.bf16.gmra.mxu0 %v2292
        %v3206 = vpop.f32.mrf.mxu0
        %v3207 = vadd.f32 %v2437, %v3206
        %v3208 = vpop.f32.mrf.mxu0
        %v3209 = vadd.f32 %v2441, %v3208
        %v3210 = vpop.f32.mrf.mxu0
        %v3211 = vadd.f32 %v2437, %v3210
        %v3212 = vpop.f32.mrf.mxu0
        %v3213 = vadd.f32 %v2441, %v3212
        %3214 = vdwg.mxu0
        %3215 = vmatprep.subr.bf16.mxu0 %v2925
        %3216 = vmatpush1.bf16.msra.mxu0 %v2924
        %3217 = vmatprep.subr.bf16.mxu0 %v2921
        %3218 = vmatpush1.bf16.msra.mxu0 %v2920
        %3219 = vmatprep.subr.bf16.mxu0 %v2917
        %3220 = vmatpush1.bf16.msra.mxu0 %v2916
        %3221 = vmatprep.subr.bf16.mxu0 %v2913
        %3222 = vmatpush1.bf16.msra.mxu0 %v2912
        %3223 = vmatprep.subr.bf16.mxu0 %v2909
        %3224 = vmatpush1.bf16.msra.mxu0 %v2908
        %3225 = vmatprep.subr.bf16.mxu0 %v2905
        %3226 = vmatpush1.bf16.msra.mxu0 %v2904
        %3227 = vmatprep.subr.bf16.mxu0 %v2901
        %3228 = vmatpush1.bf16.msra.mxu0 %v2900
        %3229 = vmatprep.subr.bf16.mxu0 %v2897
        %3230 = vmatpush1.bf16.msra.mxu0 %v2896
        %3231 = vmatprep.subr.bf16.mxu0 %v2957
        %3232 = vmatpush2.bf16.msra.mxu0 %v2956
        %3233 = vmatprep.subr.bf16.mxu0 %v2953
        %3234 = vmatpush2.bf16.msra.mxu0 %v2952
        %3235 = vmatprep.subr.bf16.mxu0 %v2949
        %3236 = vmatpush2.bf16.msra.mxu0 %v2948
        %3237 = vmatprep.subr.bf16.mxu0 %v2945
        %3238 = vmatpush2.bf16.msra.mxu0 %v2944
        %3239 = vmatprep.subr.bf16.mxu0 %v2941
        %3240 = vmatpush2.bf16.msra.mxu0 %v2940
        %3241 = vmatprep.subr.bf16.mxu0 %v2937
        %3242 = vmatpush2.bf16.msra.mxu0 %v2936
        %3243 = vmatprep.subr.bf16.mxu0 %v2933
        %3244 = vmatpush2.bf16.msra.mxu0 %v2932
        %3245 = vmatprep.subr.bf16.mxu0 %v2929
        %3246 = vmatpush2.bf16.msra.mxu0 %v2928
        %3247 = vmatprep.mubr.bf16.mxu0 %v2295
        %3248 = vmatmul.mubr.bf16.gmra.mxu0 %v2294
        %v3249 = vpop.f32.mrf.mxu0
        %v3250 = vadd.f32 %v3207, %v3249
        %v3251 = vpop.f32.mrf.mxu0
        %v3252 = vadd.f32 %v3209, %v3251
        %v3253 = vpop.f32.mrf.mxu0
        %v3254 = vadd.f32 %v3211, %v3253
        %v3255 = vpop.f32.mrf.mxu0
        %v3256 = vadd.f32 %v3213, %v3255
        %3257 = vdwg.mxu0
        %v3258 = vmax.f32 %v3164, 0.0
        %v3259 = vmax.f32 %v3166, 0.0
        %v3260 = vmax.f32 %v3250, 0.0
        %v3261 = vmax.f32 %v3252, 0.0
        %v3262 = vmax.f32 %v3168, 0.0
        %v3263 = vmax.f32 %v3170, 0.0
        %v3264 = vmax.f32 %v3254, 0.0
        %v3265 = vmax.f32 %v3256, 0.0
        %v3266 = vpack.c.bf16 %v3262, %v3258
        %v3267 = vpack.c.bf16 %v3263, %v3259
        %v3268 = vpack.c.bf16 %v3264, %v3260
        %v3269 = vpack.c.bf16 %v3265, %v3261
        %v3270 = vld [vmem:[%s6] sm:$0xf]
        %v3271 = vld [vmem:[%s6 + $0x4] sm:$0xf]
        %v3272 = vld [vmem:[%s6 + $0x8] sm:$0xf]
        %v3273 = vld [vmem:[%s6 + $0xc] sm:$0xf]
        %v3274 = vld [vmem:[%s6 + $0x10] sm:$0xf]
        %v3275 = vld [vmem:[%s6 + $0x14] sm:$0xf]
        %v3276 = vld [vmem:[%s6 + $0x18] sm:$0xf]
        %v3277 = vld [vmem:[%s6 + $0x1c] sm:$0xf]
        %v3278 = vld [vmem:[%s6 + $0x20] sm:$0xf]
        %v3279 = vld [vmem:[%s6 + $0x24] sm:$0xf]
        %v3280 = vld [vmem:[%s6 + $0x28] sm:$0xf]
        %v3281 = vld [vmem:[%s6 + $0x2c] sm:$0xf]
        %v3282 = vld [vmem:[%s6 + $0x30] sm:$0xf]
        %v3283 = vld [vmem:[%s6 + $0x34] sm:$0xf]
        %v3284 = vld [vmem:[%s6 + $0x38] sm:$0xf]
        %v3285 = vld [vmem:[%s6 + $0x3c] sm:$0xf]
        %v3286 = vld [vmem:[%s6 + $0x40] sm:$0xf]
        %v3287 = vld [vmem:[%s6 + $0x44] sm:$0xf]
        %v3288 = vld [vmem:[%s6 + $0x48] sm:$0xf]
        %v3289 = vld [vmem:[%s6 + $0x4c] sm:$0xf]
        %v3290 = vld [vmem:[%s6 + $0x50] sm:$0xf]
        %v3291 = vld [vmem:[%s6 + $0x54] sm:$0xf]
        %v3292 = vld [vmem:[%s6 + $0x58] sm:$0xf]
        %v3293 = vld [vmem:[%s6 + $0x5c] sm:$0xf]
        %v3294 = vld [vmem:[%s6 + $0x60] sm:$0xf]
        %v3295 = vld [vmem:[%s6 + $0x64] sm:$0xf]
        %v3296 = vld [vmem:[%s6 + $0x68] sm:$0xf]
        %v3297 = vld [vmem:[%s6 + $0x6c] sm:$0xf]
        %v3298 = vld [vmem:[%s6 + $0x70] sm:$0xf]
        %v3299 = vld [vmem:[%s6 + $0x74] sm:$0xf]
        %v3300 = vld [vmem:[%s6 + $0x78] sm:$0xf]
        %v3301 = vld [vmem:[%s6 + $0x7c] sm:$0xf]
        %v3302 = vld [vmem:[%s6 + $0x80] sm:$0xf]
        %v3303 = vld [vmem:[%s6 + $0x84] sm:$0xf]
        %v3304 = vld [vmem:[%s6 + $0x88] sm:$0xf]
        %v3305 = vld [vmem:[%s6 + $0x8c] sm:$0xf]
        %v3306 = vld [vmem:[%s6 + $0x90] sm:$0xf]
        %v3307 = vld [vmem:[%s6 + $0x94] sm:$0xf]
        %v3308 = vld [vmem:[%s6 + $0x98] sm:$0xf]
        %v3309 = vld [vmem:[%s6 + $0x9c] sm:$0xf]
        %v3310 = vld [vmem:[%s6 + $0xa0] sm:$0xf]
        %v3311 = vld [vmem:[%s6 + $0xa4] sm:$0xf]
        %v3312 = vld [vmem:[%s6 + $0xa8] sm:$0xf]
        %v3313 = vld [vmem:[%s6 + $0xac] sm:$0xf]
        %v3314 = vld [vmem:[%s6 + $0xb0] sm:$0xf]
        %v3315 = vld [vmem:[%s6 + $0xb4] sm:$0xf]
        %v3316 = vld [vmem:[%s6 + $0xb8] sm:$0xf]
        %v3317 = vld [vmem:[%s6 + $0xbc] sm:$0xf]
        %v3318 = vld [vmem:[%s6 + $0xc0] sm:$0xf]
        %v3319 = vld [vmem:[%s6 + $0xc4] sm:$0xf]
        %v3320 = vld [vmem:[%s6 + $0xc8] sm:$0xf]
        %v3321 = vld [vmem:[%s6 + $0xcc] sm:$0xf]
        %v3322 = vld [vmem:[%s6 + $0xd0] sm:$0xf]
        %v3323 = vld [vmem:[%s6 + $0xd4] sm:$0xf]
        %v3324 = vld [vmem:[%s6 + $0xd8] sm:$0xf]
        %v3325 = vld [vmem:[%s6 + $0xdc] sm:$0xf]
        %v3326 = vld [vmem:[%s6 + $0xe0] sm:$0xf]
        %v3327 = vld [vmem:[%s6 + $0xe4] sm:$0xf]
        %v3328 = vld [vmem:[%s6 + $0xe8] sm:$0xf]
        %v3329 = vld [vmem:[%s6 + $0xec] sm:$0xf]
        %v3330 = vld [vmem:[%s6 + $0xf0] sm:$0xf]
        %v3331 = vld [vmem:[%s6 + $0xf4] sm:$0xf]
        %v3332 = vld [vmem:[%s6 + $0xf8] sm:$0xf]
        %v3333 = vld [vmem:[%s6 + $0xfc] sm:$0xf]
        %v3334 = vld [vmem:[%s7] sm:$0x1]
        %v3336 = vlaneseq
        %v3337 = vshrl.u32 %v3336, 7
        %v3338 = vsub.s32 0, %v3337
        %v3339 = vrot.slane %v3334, %v3338
        %v3405 = vunpack.c.l.b16 %v3270
        %v3406 = vunpack.c.l.b16 %v3271
        %v3407 = vunpack.c.l.b16 %v3272
        %v3408 = vunpack.c.l.b16 %v3273
        %v3409 = vunpack.c.l.b16 %v3274
        %v3410 = vunpack.c.l.b16 %v3275
        %v3411 = vunpack.c.l.b16 %v3276
        %v3412 = vunpack.c.l.b16 %v3277
        %v3413 = vunpack.c.l.b16 %v3278
        %v3414 = vunpack.c.l.b16 %v3279
        %v3415 = vunpack.c.l.b16 %v3280
        %v3416 = vunpack.c.l.b16 %v3281
        %v3417 = vunpack.c.l.b16 %v3282
        %v3418 = vunpack.c.l.b16 %v3283
        %v3419 = vunpack.c.l.b16 %v3284
        %v3420 = vunpack.c.l.b16 %v3285
        %v3421 = vunpack.c.l.b16 %v3286
        %v3422 = vunpack.c.l.b16 %v3287
        %v3423 = vunpack.c.l.b16 %v3288
        %v3424 = vunpack.c.l.b16 %v3289
        %v3425 = vunpack.c.l.b16 %v3290
        %v3426 = vunpack.c.l.b16 %v3291
        %v3427 = vunpack.c.l.b16 %v3292
        %v3428 = vunpack.c.l.b16 %v3293
        %v3429 = vunpack.c.l.b16 %v3294
        %v3430 = vunpack.c.l.b16 %v3295
        %v3431 = vunpack.c.l.b16 %v3296
        %v3432 = vunpack.c.l.b16 %v3297
        %v3433 = vunpack.c.l.b16 %v3298
        %v3434 = vunpack.c.l.b16 %v3299
        %v3435 = vunpack.c.l.b16 %v3300
        %v3436 = vunpack.c.l.b16 %v3301
        %v3437 = vunpack.c.l.b16 %v3302
        %v3438 = vunpack.c.l.b16 %v3303
        %v3439 = vunpack.c.l.b16 %v3304
        %v3440 = vunpack.c.l.b16 %v3305
        %v3441 = vunpack.c.l.b16 %v3306
        %v3442 = vunpack.c.l.b16 %v3307
        %v3443 = vunpack.c.l.b16 %v3308
        %v3444 = vunpack.c.l.b16 %v3309
        %v3445 = vunpack.c.l.b16 %v3310
        %v3446 = vunpack.c.l.b16 %v3311
        %v3447 = vunpack.c.l.b16 %v3312
        %v3448 = vunpack.c.l.b16 %v3313
        %v3449 = vunpack.c.l.b16 %v3314
        %v3450 = vunpack.c.l.b16 %v3315
        %v3451 = vunpack.c.l.b16 %v3316
        %v3452 = vunpack.c.l.b16 %v3317
        %v3453 = vunpack.c.l.b16 %v3318
        %v3454 = vunpack.c.l.b16 %v3319
        %v3455 = vunpack.c.l.b16 %v3320
        %v3456 = vunpack.c.l.b16 %v3321
        %v3457 = vunpack.c.l.b16 %v3322
        %v3458 = vunpack.c.l.b16 %v3323
        %v3459 = vunpack.c.l.b16 %v3324
        %v3460 = vunpack.c.l.b16 %v3325
        %v3461 = vunpack.c.l.b16 %v3326
        %v3462 = vunpack.c.l.b16 %v3327
        %v3463 = vunpack.c.l.b16 %v3328
        %v3464 = vunpack.c.l.b16 %v3329
        %v3465 = vunpack.c.l.b16 %v3330
        %v3466 = vunpack.c.l.b16 %v3331
        %v3467 = vunpack.c.l.b16 %v3332
        %v3468 = vunpack.c.l.b16 %v3333
        %v3469 = vpack.c.b16 %v3406, %v3405
        %v3470 = vpack.c.b16 %v3408, %v3407
        %v3471 = vpack.c.b16 %v3410, %v3409
        %v3472 = vpack.c.b16 %v3412, %v3411
        %v3473 = vpack.c.b16 %v3414, %v3413
        %v3474 = vpack.c.b16 %v3416, %v3415
        %v3475 = vpack.c.b16 %v3418, %v3417
        %v3476 = vpack.c.b16 %v3420, %v3419
        %v3477 = vpack.c.b16 %v3422, %v3421
        %v3478 = vpack.c.b16 %v3424, %v3423
        %v3479 = vpack.c.b16 %v3426, %v3425
        %v3480 = vpack.c.b16 %v3428, %v3427
        %v3481 = vpack.c.b16 %v3430, %v3429
        %v3482 = vpack.c.b16 %v3432, %v3431
        %v3483 = vpack.c.b16 %v3434, %v3433
        %v3484 = vpack.c.b16 %v3436, %v3435
        %v3485 = vpack.c.b16 %v3438, %v3437
        %v3486 = vpack.c.b16 %v3440, %v3439
        %v3487 = vpack.c.b16 %v3442, %v3441
        %v3488 = vpack.c.b16 %v3444, %v3443
        %v3489 = vpack.c.b16 %v3446, %v3445
        %v3490 = vpack.c.b16 %v3448, %v3447
        %v3491 = vpack.c.b16 %v3450, %v3449
        %v3492 = vpack.c.b16 %v3452, %v3451
        %v3493 = vpack.c.b16 %v3454, %v3453
        %v3494 = vpack.c.b16 %v3456, %v3455
        %v3495 = vpack.c.b16 %v3458, %v3457
        %v3496 = vpack.c.b16 %v3460, %v3459
        %v3497 = vpack.c.b16 %v3462, %v3461
        %v3498 = vpack.c.b16 %v3464, %v3463
        %v3499 = vpack.c.b16 %v3466, %v3465
        %v3500 = vpack.c.b16 %v3468, %v3467
        %3533 = vmatprep.subr.bf16.mxu0 0
        %3534 = vmatpush1.bf16.msra.mxu0 %v3476
        %3535 = vmatprep.subr.bf16.mxu0 0
        %3536 = vmatpush1.bf16.msra.mxu0 %v3475
        %3537 = vmatprep.subr.bf16.mxu0 0
        %3538 = vmatpush1.bf16.msra.mxu0 %v3474
        %3539 = vmatprep.subr.bf16.mxu0 0
        %3540 = vmatpush1.bf16.msra.mxu0 %v3473
        %3541 = vmatprep.subr.bf16.mxu0 0
        %3542 = vmatpush1.bf16.msra.mxu0 %v3472
        %3543 = vmatprep.subr.bf16.mxu0 0
        %3544 = vmatpush1.bf16.msra.mxu0 %v3471
        %3545 = vmatprep.subr.bf16.mxu0 0
        %3546 = vmatpush1.bf16.msra.mxu0 %v3470
        %3547 = vmatprep.subr.bf16.mxu0 0
        %3548 = vmatpush1.bf16.msra.mxu0 %v3469
        %3549 = vmatprep.subr.bf16.mxu0 0
        %3550 = vmatpush2.bf16.msra.mxu0 %v3484
        %3551 = vmatprep.subr.bf16.mxu0 0
        %3552 = vmatpush2.bf16.msra.mxu0 %v3483
        %3553 = vmatprep.subr.bf16.mxu0 0
        %3554 = vmatpush2.bf16.msra.mxu0 %v3482
        %3555 = vmatprep.subr.bf16.mxu0 0
        %3556 = vmatpush2.bf16.msra.mxu0 %v3481
        %3557 = vmatprep.subr.bf16.mxu0 0
        %3558 = vmatpush2.bf16.msra.mxu0 %v3480
        %3559 = vmatprep.subr.bf16.mxu0 0
        %3560 = vmatpush2.bf16.msra.mxu0 %v3479
        %3561 = vmatprep.subr.bf16.mxu0 0
        %3562 = vmatpush2.bf16.msra.mxu0 %v3478
        %3563 = vmatprep.subr.bf16.mxu0 0
        %3564 = vmatpush2.bf16.msra.mxu0 %v3477
        %3565 = vmatprep.mubr.bf16.mxu0 %v3267
        %3566 = vmatmul.mubr.bf16.gmra.mxu0 %v3266
        %v3567 = vpop.f32.mrf.mxu0
        %v3568 = vadd.f32 %v3339, %v3567
        %v3569 = vpop.f32.mrf.mxu0
        %v3570 = vpop.f32.mrf.mxu0
        %v3571 = vadd.f32 %v3339, %v3570
        %v3572 = vpop.f32.mrf.mxu0
        %3573 = vdwg.mxu0
        %3574 = vmatprep.subr.bf16.mxu0 0
        %3575 = vmatpush1.bf16.msra.mxu0 %v3492
        %3576 = vmatprep.subr.bf16.mxu0 0
        %3577 = vmatpush1.bf16.msra.mxu0 %v3491
        %3578 = vmatprep.subr.bf16.mxu0 0
        %3579 = vmatpush1.bf16.msra.mxu0 %v3490
        %3580 = vmatprep.subr.bf16.mxu0 0
        %3581 = vmatpush1.bf16.msra.mxu0 %v3489
        %3582 = vmatprep.subr.bf16.mxu0 0
        %3583 = vmatpush1.bf16.msra.mxu0 %v3488
        %3584 = vmatprep.subr.bf16.mxu0 0
        %3585 = vmatpush1.bf16.msra.mxu0 %v3487
        %3586 = vmatprep.subr.bf16.mxu0 0
        %3587 = vmatpush1.bf16.msra.mxu0 %v3486
        %3588 = vmatprep.subr.bf16.mxu0 0
        %3589 = vmatpush1.bf16.msra.mxu0 %v3485
        %3590 = vmatprep.subr.bf16.mxu0 0
        %3591 = vmatpush2.bf16.msra.mxu0 %v3500
        %3592 = vmatprep.subr.bf16.mxu0 0
        %3593 = vmatpush2.bf16.msra.mxu0 %v3499
        %3594 = vmatprep.subr.bf16.mxu0 0
        %3595 = vmatpush2.bf16.msra.mxu0 %v3498
        %3596 = vmatprep.subr.bf16.mxu0 0
        %3597 = vmatpush2.bf16.msra.mxu0 %v3497
        %3598 = vmatprep.subr.bf16.mxu0 0
        %3599 = vmatpush2.bf16.msra.mxu0 %v3496
        %3600 = vmatprep.subr.bf16.mxu0 0
        %3601 = vmatpush2.bf16.msra.mxu0 %v3495
        %3602 = vmatprep.subr.bf16.mxu0 0
        %3603 = vmatpush2.bf16.msra.mxu0 %v3494
        %3604 = vmatprep.subr.bf16.mxu0 0
        %3605 = vmatpush2.bf16.msra.mxu0 %v3493
        %3606 = vmatprep.mubr.bf16.mxu0 %v3269
        %3607 = vmatmul.mubr.bf16.gmra.mxu0 %v3268
        %v3608 = vpop.f32.mrf.mxu0
        %v3609 = vadd.f32 %v3568, %v3608
        %v3610 = vpop.f32.mrf.mxu0
        %v3611 = vpop.f32.mrf.mxu0
        %v3612 = vadd.f32 %v3571, %v3611
        %v3613 = vpop.f32.mrf.mxu0
        %3614 = vdwg.mxu0
        %v3615 = vlaneseq
        %v3616 = vand.u32 %v3615, 127
        %vm3617 = vcmp.lt.s32.totalorder %v3616, 64
        %v3618 = vmul.f32 %v3609, 1.442695
        %v3619 = vpow.pop %v3618
        %v3620 = vmul.f32 %v3612, 1.442695
        %v3621 = vpow.pop %v3620
        %v3622 = vsel %vm3617, %v3609, %v3619
        %v3623 = vsel %vm3617, %v3612, %v3621
        %3624 = vst [vmem:[%s527] sm:$0xff] %v3622
        %3625 = vst [vmem:[%s527 + $0x8] sm:$0xff] %v3623
        %v3626 = vld [vmem:[%s514] sm:$0xff]
        %v3627 = vld [vmem:[%s514 + $0x8] sm:$0xff]
        %v3628 = vmul.f32 %v3622, %v3626
        %v3629 = vmul.f32 %v3623, %v3627
        %3630 = vrot.lane.b32.xlu0 %v3628, 64
        %v3631 = vpop.permute.xlu0 %3630
        %3632 = vrot.lane.b32.xlu0 %v3629, 64
        %v3633 = vpop.permute.xlu0 %3632
        %v3634 = vadd.f32 %v3622, %v3631
        %v3635 = vadd.f32 %v3623, %v3633
        %v3636 = vpack.c.bf16 %v3635, %v3634
        %v3637 = vld [vmem:[%s8] sm:$0xff]
        %v3638 = vld [vmem:[%s8 + $0x8] sm:$0xff]
        %v3639 = vld [vmem:[%s8 + $0x10] sm:$0xff]
        %v3640 = vld [vmem:[%s8 + $0x18] sm:$0xff]
        %v3641 = vld [vmem:[%s8 + $0x20] sm:$0xff]
        %v3642 = vld [vmem:[%s8 + $0x28] sm:$0xff]
        %v3643 = vld [vmem:[%s8 + $0x30] sm:$0xff]
        %v3644 = vld [vmem:[%s8 + $0x38] sm:$0xff]
        %v3645 = vld [vmem:[%s8 + $0x40] sm:$0xff]
        %v3646 = vld [vmem:[%s8 + $0x48] sm:$0xff]
        %v3647 = vld [vmem:[%s8 + $0x50] sm:$0xff]
        %v3648 = vld [vmem:[%s8 + $0x58] sm:$0xff]
        %v3649 = vld [vmem:[%s8 + $0x60] sm:$0xff]
        %v3650 = vld [vmem:[%s8 + $0x68] sm:$0xff]
        %v3651 = vld [vmem:[%s8 + $0x70] sm:$0xff]
        %v3652 = vld [vmem:[%s8 + $0x78] sm:$0xff]
        %v3653 = vld [vmem:[%s8 + $0x80] sm:$0xff]
        %v3654 = vld [vmem:[%s8 + $0x88] sm:$0xff]
        %v3655 = vld [vmem:[%s8 + $0x90] sm:$0xff]
        %v3656 = vld [vmem:[%s8 + $0x98] sm:$0xff]
        %v3657 = vld [vmem:[%s8 + $0xa0] sm:$0xff]
        %v3658 = vld [vmem:[%s8 + $0xa8] sm:$0xff]
        %v3659 = vld [vmem:[%s8 + $0xb0] sm:$0xff]
        %v3660 = vld [vmem:[%s8 + $0xb8] sm:$0xff]
        %v3661 = vld [vmem:[%s8 + $0xc0] sm:$0xff]
        %v3662 = vld [vmem:[%s8 + $0xc8] sm:$0xff]
        %v3663 = vld [vmem:[%s8 + $0xd0] sm:$0xff]
        %v3664 = vld [vmem:[%s8 + $0xd8] sm:$0xff]
        %v3665 = vld [vmem:[%s8 + $0xe0] sm:$0xff]
        %v3666 = vld [vmem:[%s8 + $0xe8] sm:$0xff]
        %v3667 = vld [vmem:[%s8 + $0xf0] sm:$0xff]
        %v3668 = vld [vmem:[%s8 + $0xf8] sm:$0xff]
        %v3669 = vld [vmem:[%s9] sm:$0xf]
        %v3671 = vlaneseq
        %v3672 = vshrl.u32 %v3671, 7
        %v3673 = vsub.s32 0, %v3672
        %v3674 = vrot.slane %v3669, %v3673
        %v3675 = vlaneseq
        %v3676 = vshrl.u32 %v3675, 7
        %v3677 = vsub.s32 1, %v3676
        %v3678 = vrot.slane %v3669, %v3677
        %v3679 = vlaneseq
        %v3680 = vshrl.u32 %v3679, 7
        %v3681 = vsub.s32 2, %v3680
        %v3682 = vrot.slane %v3669, %v3681
        %v3683 = vlaneseq
        %v3684 = vshrl.u32 %v3683, 7
        %v3685 = vsub.s32 3, %v3684
        %v3686 = vrot.slane %v3669, %v3685
        %v3723 = vunpack.c.l.b16 %v3637
        %v3724 = vunpack.c.h.b16 %v3637
        %v3725 = vunpack.c.l.b16 %v3638
        %v3726 = vunpack.c.h.b16 %v3638
        %v3727 = vunpack.c.l.b16 %v3639
        %v3728 = vunpack.c.h.b16 %v3639
        %v3729 = vunpack.c.l.b16 %v3640
        %v3730 = vunpack.c.h.b16 %v3640
        %v3731 = vunpack.c.l.b16 %v3641
        %v3732 = vunpack.c.h.b16 %v3641
        %v3733 = vunpack.c.l.b16 %v3642
        %v3734 = vunpack.c.h.b16 %v3642
        %v3735 = vunpack.c.l.b16 %v3643
        %v3736 = vunpack.c.h.b16 %v3643
        %v3737 = vunpack.c.l.b16 %v3644
        %v3738 = vunpack.c.h.b16 %v3644
        %v3739 = vunpack.c.l.b16 %v3645
        %v3740 = vunpack.c.h.b16 %v3645
        %v3741 = vunpack.c.l.b16 %v3646
        %v3742 = vunpack.c.h.b16 %v3646
        %v3743 = vunpack.c.l.b16 %v3647
        %v3744 = vunpack.c.h.b16 %v3647
        %v3745 = vunpack.c.l.b16 %v3648
        %v3746 = vunpack.c.h.b16 %v3648
        %v3747 = vunpack.c.l.b16 %v3649
        %v3748 = vunpack.c.h.b16 %v3649
        %v3749 = vunpack.c.l.b16 %v3650
        %v3750 = vunpack.c.h.b16 %v3650
        %v3751 = vunpack.c.l.b16 %v3651
        %v3752 = vunpack.c.h.b16 %v3651
        %v3753 = vunpack.c.l.b16 %v3652
        %v3754 = vunpack.c.h.b16 %v3652
        %v3755 = vunpack.c.l.b16 %v3653
        %v3756 = vunpack.c.h.b16 %v3653
        %v3757 = vunpack.c.l.b16 %v3654
        %v3758 = vunpack.c.h.b16 %v3654
        %v3759 = vunpack.c.l.b16 %v3655
        %v3760 = vunpack.c.h.b16 %v3655
        %v3761 = vunpack.c.l.b16 %v3656
        %v3762 = vunpack.c.h.b16 %v3656
        %v3763 = vunpack.c.l.b16 %v3657
        %v3764 = vunpack.c.h.b16 %v3657
        %v3765 = vunpack.c.l.b16 %v3658
        %v3766 = vunpack.c.h.b16 %v3658
        %v3767 = vunpack.c.l.b16 %v3659
        %v3768 = vunpack.c.h.b16 %v3659
        %v3769 = vunpack.c.l.b16 %v3660
        %v3770 = vunpack.c.h.b16 %v3660
        %v3771 = vunpack.c.l.b16 %v3661
        %v3772 = vunpack.c.h.b16 %v3661
        %v3773 = vunpack.c.l.b16 %v3662
        %v3774 = vunpack.c.h.b16 %v3662
        %v3775 = vunpack.c.l.b16 %v3663
        %v3776 = vunpack.c.h.b16 %v3663
        %v3777 = vunpack.c.l.b16 %v3664
        %v3778 = vunpack.c.h.b16 %v3664
        %v3779 = vunpack.c.l.b16 %v3665
        %v3780 = vunpack.c.h.b16 %v3665
        %v3781 = vunpack.c.l.b16 %v3666
        %v3782 = vunpack.c.h.b16 %v3666
        %v3783 = vunpack.c.l.b16 %v3667
        %v3784 = vunpack.c.h.b16 %v3667
        %v3785 = vunpack.c.l.b16 %v3668
        %v3786 = vunpack.c.h.b16 %v3668
        %v3787 = vpack.c.b16 %v3727, %v3723
        %v3788 = vpack.c.b16 %v3728, %v3724
        %v3789 = vpack.c.b16 %v3729, %v3725
        %v3790 = vpack.c.b16 %v3730, %v3726
        %v3791 = vpack.c.b16 %v3735, %v3731
        %v3792 = vpack.c.b16 %v3736, %v3732
        %v3793 = vpack.c.b16 %v3737, %v3733
        %v3794 = vpack.c.b16 %v3738, %v3734
        %v3795 = vpack.c.b16 %v3743, %v3739
        %v3796 = vpack.c.b16 %v3744, %v3740
        %v3797 = vpack.c.b16 %v3745, %v3741
        %v3798 = vpack.c.b16 %v3746, %v3742
        %v3799 = vpack.c.b16 %v3751, %v3747
        %v3800 = vpack.c.b16 %v3752, %v3748
        %v3801 = vpack.c.b16 %v3753, %v3749
        %v3802 = vpack.c.b16 %v3754, %v3750
        %v3803 = vpack.c.b16 %v3759, %v3755
        %v3804 = vpack.c.b16 %v3760, %v3756
        %v3805 = vpack.c.b16 %v3761, %v3757
        %v3806 = vpack.c.b16 %v3762, %v3758
        %v3807 = vpack.c.b16 %v3767, %v3763
        %v3808 = vpack.c.b16 %v3768, %v3764
        %v3809 = vpack.c.b16 %v3769, %v3765
        %v3810 = vpack.c.b16 %v3770, %v3766
        %v3811 = vpack.c.b16 %v3775, %v3771
        %v3812 = vpack.c.b16 %v3776, %v3772
        %v3813 = vpack.c.b16 %v3777, %v3773
        %v3814 = vpack.c.b16 %v3778, %v3774
        %v3815 = vpack.c.b16 %v3783, %v3779
        %v3816 = vpack.c.b16 %v3784, %v3780
        %v3817 = vpack.c.b16 %v3785, %v3781
        %v3818 = vpack.c.b16 %v3786, %v3782
        %3851 = vmatprep.subr.bf16.mxu0 %v3816
        %3852 = vmatpush1.bf16.msra.mxu0 %v3815
        %3853 = vmatprep.subr.bf16.mxu0 %v3812
        %3854 = vmatpush1.bf16.msra.mxu0 %v3811
        %3855 = vmatprep.subr.bf16.mxu0 %v3808
        %3856 = vmatpush1.bf16.msra.mxu0 %v3807
        %3857 = vmatprep.subr.bf16.mxu0 %v3804
        %3858 = vmatpush1.bf16.msra.mxu0 %v3803
        %3859 = vmatprep.subr.bf16.mxu0 %v3800
        %3860 = vmatpush1.bf16.msra.mxu0 %v3799
        %3861 = vmatprep.subr.bf16.mxu0 %v3796
        %3862 = vmatpush1.bf16.msra.mxu0 %v3795
        %3863 = vmatprep.subr.bf16.mxu0 %v3792
        %3864 = vmatpush1.bf16.msra.mxu0 %v3791
        %3865 = vmatprep.subr.bf16.mxu0 %v3788
        %3866 = vmatpush1.bf16.msra.mxu0 %v3787
        %3867 = vmatprep.subr.bf16.mxu0 0
        %3868 = vmatpush2.bf16.msra.mxu0 0
        %3869 = vmatprep.subr.bf16.mxu0 0
        %3870 = vmatpush2.bf16.msra.mxu0 0
        %3871 = vmatprep.subr.bf16.mxu0 0
        %3872 = vmatpush2.bf16.msra.mxu0 0
        %3873 = vmatprep.subr.bf16.mxu0 0
        %3874 = vmatpush2.bf16.msra.mxu0 0
        %3875 = vmatprep.subr.bf16.mxu0 0
        %3876 = vmatpush2.bf16.msra.mxu0 0
        %3877 = vmatprep.subr.bf16.mxu0 0
        %3878 = vmatpush2.bf16.msra.mxu0 0
        %3879 = vmatprep.subr.bf16.mxu0 0
        %3880 = vmatpush2.bf16.msra.mxu0 0
        %3881 = vmatprep.subr.bf16.mxu0 0
        %3882 = vmatpush2.bf16.msra.mxu0 0
        %3883 = vmatprep.mubr.bf16.mxu0 0
        %3884 = vmatmul.mubr.bf16.gmra.mxu0 %v3636
        %v3885 = vpop.f32.mrf.mxu0
        %v3886 = vadd.f32 %v3674, %v3885
        %v3887 = vpop.f32.mrf.mxu0
        %v3888 = vadd.f32 %v3678, %v3887
        %v3889 = vpop.f32.mrf.mxu0
        %v3890 = vadd.f32 %v3674, %v3889
        %v3891 = vpop.f32.mrf.mxu0
        %v3892 = vadd.f32 %v3678, %v3891
        %3893 = vdwg.mxu0
        %3894 = vmatprep.subr.bf16.mxu0 %v3818
        %3895 = vmatpush1.bf16.msra.mxu0 %v3817
        %3896 = vmatprep.subr.bf16.mxu0 %v3814
        %3897 = vmatpush1.bf16.msra.mxu0 %v3813
        %3898 = vmatprep.subr.bf16.mxu0 %v3810
        %3899 = vmatpush1.bf16.msra.mxu0 %v3809
        %3900 = vmatprep.subr.bf16.mxu0 %v3806
        %3901 = vmatpush1.bf16.msra.mxu0 %v3805
        %3902 = vmatprep.subr.bf16.mxu0 %v3802
        %3903 = vmatpush1.bf16.msra.mxu0 %v3801
        %3904 = vmatprep.subr.bf16.mxu0 %v3798
        %3905 = vmatpush1.bf16.msra.mxu0 %v3797
        %3906 = vmatprep.subr.bf16.mxu0 %v3794
        %3907 = vmatpush1.bf16.msra.mxu0 %v3793
        %3908 = vmatprep.subr.bf16.mxu0 %v3790
        %3909 = vmatpush1.bf16.msra.mxu0 %v3789
        %3910 = vmatprep.subr.bf16.mxu0 0
        %3911 = vmatpush2.bf16.msra.mxu0 0
        %3912 = vmatprep.subr.bf16.mxu0 0
        %3913 = vmatpush2.bf16.msra.mxu0 0
        %3914 = vmatprep.subr.bf16.mxu0 0
        %3915 = vmatpush2.bf16.msra.mxu0 0
        %3916 = vmatprep.subr.bf16.mxu0 0
        %3917 = vmatpush2.bf16.msra.mxu0 0
        %3918 = vmatprep.subr.bf16.mxu0 0
        %3919 = vmatpush2.bf16.msra.mxu0 0
        %3920 = vmatprep.subr.bf16.mxu0 0
        %3921 = vmatpush2.bf16.msra.mxu0 0
        %3922 = vmatprep.subr.bf16.mxu0 0
        %3923 = vmatpush2.bf16.msra.mxu0 0
        %3924 = vmatprep.subr.bf16.mxu0 0
        %3925 = vmatpush2.bf16.msra.mxu0 0
        %3926 = vmatprep.mubr.bf16.mxu0 0
        %3927 = vmatmul.mubr.bf16.gmra.mxu0 %v3636
        %v3928 = vpop.f32.mrf.mxu0
        %v3929 = vadd.f32 %v3682, %v3928
        %v3930 = vpop.f32.mrf.mxu0
        %v3931 = vadd.f32 %v3686, %v3930
        %v3932 = vpop.f32.mrf.mxu0
        %v3933 = vadd.f32 %v3682, %v3932
        %v3934 = vpop.f32.mrf.mxu0
        %v3935 = vadd.f32 %v3686, %v3934
        %3936 = vdwg.mxu0
        %v3937 = vmax.f32 %v3886, 0.0
        %v3938 = vmax.f32 %v3888, 0.0
        %v3939 = vmax.f32 %v3929, 0.0
        %v3940 = vmax.f32 %v3931, 0.0
        %v3941 = vmax.f32 %v3890, 0.0
        %v3942 = vmax.f32 %v3892, 0.0
        %v3943 = vmax.f32 %v3933, 0.0
        %v3944 = vmax.f32 %v3935, 0.0
        %v3945 = vpack.c.bf16 %v3941, %v3937
        %v3946 = vpack.c.bf16 %v3942, %v3938
        %v3947 = vpack.c.bf16 %v3943, %v3939
        %v3948 = vpack.c.bf16 %v3944, %v3940
        %v3949 = vld [vmem:[#allocation6] sm:$0xff]
        %v3950 = vld [vmem:[#allocation6 + $0x8] sm:$0xff]
        %v3951 = vld [vmem:[#allocation6 + $0x10] sm:$0xff]
        %v3952 = vld [vmem:[#allocation6 + $0x18] sm:$0xf]
        %v3953 = vld [vmem:[#allocation6 + $0x1c] sm:$0xff]
        %v3954 = vld [vmem:[#allocation6 + $0x24] sm:$0xff]
        %v3955 = vld [vmem:[#allocation6 + $0x2c] sm:$0xff]
        %v3956 = vld [vmem:[#allocation6 + $0x34] sm:$0xf]
        %v3957 = vld [vmem:[#allocation6 + $0x38] sm:$0xff]
        %v3958 = vld [vmem:[#allocation6 + $0x40] sm:$0xff]
        %v3959 = vld [vmem:[#allocation6 + $0x48] sm:$0xff]
        %v3960 = vld [vmem:[#allocation6 + $0x50] sm:$0xf]
        %v3961 = vld [vmem:[#allocation6 + $0x54] sm:$0xff]
        %v3962 = vld [vmem:[#allocation6 + $0x5c] sm:$0xff]
        %v3963 = vld [vmem:[#allocation6 + $0x64] sm:$0xff]
        %v3964 = vld [vmem:[#allocation6 + $0x6c] sm:$0xf]
        %v3965 = vld [vmem:[#allocation6 + $0x70] sm:$0xff]
        %v3966 = vld [vmem:[#allocation6 + $0x78] sm:$0xff]
        %v3967 = vld [vmem:[#allocation6 + $0x80] sm:$0xff]
        %v3968 = vld [vmem:[#allocation6 + $0x88] sm:$0xf]
        %v3969 = vld [vmem:[#allocation6 + $0x8c] sm:$0xff]
        %v3970 = vld [vmem:[#allocation6 + $0x94] sm:$0xff]
        %v3971 = vld [vmem:[#allocation6 + $0x9c] sm:$0xff]
        %v3972 = vld [vmem:[#allocation6 + $0xa4] sm:$0xf]
        %v3973 = vld [vmem:[#allocation6 + $0xa8] sm:$0xff]
        %v3974 = vld [vmem:[#allocation6 + $0xb0] sm:$0xff]
        %v3975 = vld [vmem:[#allocation6 + $0xb8] sm:$0xff]
        %v3976 = vld [vmem:[#allocation6 + $0xc0] sm:$0xf]
        %v3977 = vld [vmem:[#allocation6 + $0xc4] sm:$0xff]
        %v3978 = vld [vmem:[#allocation6 + $0xcc] sm:$0xff]
        %v3979 = vld [vmem:[#allocation6 + $0xd4] sm:$0xff]
        %v3980 = vld [vmem:[#allocation6 + $0xdc] sm:$0xf]
        %v3981 = vld [vmem:[#allocation6 + $0xe0] sm:$0xff]
        %v3982 = vld [vmem:[#allocation6 + $0xe8] sm:$0xff]
        %v3983 = vld [vmem:[#allocation6 + $0xf0] sm:$0xff]
        %v3984 = vld [vmem:[#allocation6 + $0xf8] sm:$0xf]
        %v3985 = vld [vmem:[#allocation6 + $0xfc] sm:$0xff]
        %v3986 = vld [vmem:[#allocation6 + $0x104] sm:$0xff]
        %v3987 = vld [vmem:[#allocation6 + $0x10c] sm:$0xff]
        %v3988 = vld [vmem:[#allocation6 + $0x114] sm:$0xf]
        %v3989 = vld [vmem:[#allocation6 + $0x118] sm:$0xff]
        %v3990 = vld [vmem:[#allocation6 + $0x120] sm:$0xff]
        %v3991 = vld [vmem:[#allocation6 + $0x128] sm:$0xff]
        %v3992 = vld [vmem:[#allocation6 + $0x130] sm:$0xf]
        %v3993 = vld [vmem:[#allocation6 + $0x134] sm:$0xff]
        %v3994 = vld [vmem:[#allocation6 + $0x13c] sm:$0xff]
        %v3995 = vld [vmem:[#allocation6 + $0x144] sm:$0xff]
        %v3996 = vld [vmem:[#allocation6 + $0x14c] sm:$0xf]
        %v3997 = vld [vmem:[#allocation6 + $0x150] sm:$0xff]
        %v3998 = vld [vmem:[#allocation6 + $0x158] sm:$0xff]
        %v3999 = vld [vmem:[#allocation6 + $0x160] sm:$0xff]
        %v4000 = vld [vmem:[#allocation6 + $0x168] sm:$0xf]
        %v4001 = vld [vmem:[#allocation6 + $0x16c] sm:$0xff]
        %v4002 = vld [vmem:[#allocation6 + $0x174] sm:$0xff]
        %v4003 = vld [vmem:[#allocation6 + $0x17c] sm:$0xff]
        %v4004 = vld [vmem:[#allocation6 + $0x184] sm:$0xf]
        %v4005 = vld [vmem:[#allocation6 + $0x188] sm:$0xff]
        %v4006 = vld [vmem:[#allocation6 + $0x190] sm:$0xff]
        %v4007 = vld [vmem:[#allocation6 + $0x198] sm:$0xff]
        %v4008 = vld [vmem:[#allocation6 + $0x1a0] sm:$0xf]
        %v4009 = vld [vmem:[#allocation6 + $0x1a4] sm:$0xff]
        %v4010 = vld [vmem:[#allocation6 + $0x1ac] sm:$0xff]
        %v4011 = vld [vmem:[#allocation6 + $0x1b4] sm:$0xff]
        %v4012 = vld [vmem:[#allocation6 + $0x1bc] sm:$0xf]
        %v4013 = vld [vmem:[#allocation6 + $0x1c0] sm:$0xff]
        %v4014 = vld [vmem:[#allocation6 + $0x1c8] sm:$0xff]
        %v4015 = vld [vmem:[#allocation6 + $0x1d0] sm:$0xff]
        %v4016 = vld [vmem:[#allocation6 + $0x1d8] sm:$0xf]
        %v4017 = vld [vmem:[#allocation6 + $0x1dc] sm:$0xff]
        %v4018 = vld [vmem:[#allocation6 + $0x1e4] sm:$0xff]
        %v4019 = vld [vmem:[#allocation6 + $0x1ec] sm:$0xff]
        %v4020 = vld [vmem:[#allocation6 + $0x1f4] sm:$0xf]
        %v4021 = vld [vmem:[#allocation6 + $0x1f8] sm:$0xff]
        %v4022 = vld [vmem:[#allocation6 + $0x200] sm:$0xff]
        %v4023 = vld [vmem:[#allocation6 + $0x208] sm:$0xff]
        %v4024 = vld [vmem:[#allocation6 + $0x210] sm:$0xf]
        %v4025 = vld [vmem:[#allocation6 + $0x214] sm:$0xff]
        %v4026 = vld [vmem:[#allocation6 + $0x21c] sm:$0xff]
        %v4027 = vld [vmem:[#allocation6 + $0x224] sm:$0xff]
        %v4028 = vld [vmem:[#allocation6 + $0x22c] sm:$0xf]
        %v4029 = vld [vmem:[#allocation6 + $0x230] sm:$0xff]
        %v4030 = vld [vmem:[#allocation6 + $0x238] sm:$0xff]
        %v4031 = vld [vmem:[#allocation6 + $0x240] sm:$0xff]
        %v4032 = vld [vmem:[#allocation6 + $0x248] sm:$0xf]
        %v4033 = vld [vmem:[#allocation6 + $0x24c] sm:$0xff]
        %v4034 = vld [vmem:[#allocation6 + $0x254] sm:$0xff]
        %v4035 = vld [vmem:[#allocation6 + $0x25c] sm:$0xff]
        %v4036 = vld [vmem:[#allocation6 + $0x264] sm:$0xf]
        %v4037 = vld [vmem:[#allocation6 + $0x268] sm:$0xff]
        %v4038 = vld [vmem:[#allocation6 + $0x270] sm:$0xff]
        %v4039 = vld [vmem:[#allocation6 + $0x278] sm:$0xff]
        %v4040 = vld [vmem:[#allocation6 + $0x280] sm:$0xf]
        %v4041 = vld [vmem:[#allocation6 + $0x284] sm:$0xff]
        %v4042 = vld [vmem:[#allocation6 + $0x28c] sm:$0xff]
        %v4043 = vld [vmem:[#allocation6 + $0x294] sm:$0xff]
        %v4044 = vld [vmem:[#allocation6 + $0x29c] sm:$0xf]
        %v4045 = vld [vmem:[#allocation6 + $0x2a0] sm:$0xff]
        %v4046 = vld [vmem:[#allocation6 + $0x2a8] sm:$0xff]
        %v4047 = vld [vmem:[#allocation6 + $0x2b0] sm:$0xff]
        %v4048 = vld [vmem:[#allocation6 + $0x2b8] sm:$0xf]
        %v4049 = vld [vmem:[#allocation6 + $0x2bc] sm:$0xff]
        %v4050 = vld [vmem:[#allocation6 + $0x2c4] sm:$0xff]
        %v4051 = vld [vmem:[#allocation6 + $0x2cc] sm:$0xff]
        %v4052 = vld [vmem:[#allocation6 + $0x2d4] sm:$0xf]
        %v4053 = vld [vmem:[#allocation6 + $0x2d8] sm:$0xff]
        %v4054 = vld [vmem:[#allocation6 + $0x2e0] sm:$0xff]
        %v4055 = vld [vmem:[#allocation6 + $0x2e8] sm:$0xff]
        %v4056 = vld [vmem:[#allocation6 + $0x2f0] sm:$0xf]
        %v4057 = vld [vmem:[#allocation6 + $0x2f4] sm:$0xff]
        %v4058 = vld [vmem:[#allocation6 + $0x2fc] sm:$0xff]
        %v4059 = vld [vmem:[#allocation6 + $0x304] sm:$0xff]
        %v4060 = vld [vmem:[#allocation6 + $0x30c] sm:$0xf]
        %v4061 = vld [vmem:[#allocation6 + $0x310] sm:$0xff]
        %v4062 = vld [vmem:[#allocation6 + $0x318] sm:$0xff]
        %v4063 = vld [vmem:[#allocation6 + $0x320] sm:$0xff]
        %v4064 = vld [vmem:[#allocation6 + $0x328] sm:$0xf]
        %v4065 = vld [vmem:[#allocation6 + $0x32c] sm:$0xff]
        %v4066 = vld [vmem:[#allocation6 + $0x334] sm:$0xff]
        %v4067 = vld [vmem:[#allocation6 + $0x33c] sm:$0xff]
        %v4068 = vld [vmem:[#allocation6 + $0x344] sm:$0xf]
        %v4069 = vld [vmem:[#allocation6 + $0x348] sm:$0xff]
        %v4070 = vld [vmem:[#allocation6 + $0x350] sm:$0xff]
        %v4071 = vld [vmem:[#allocation6 + $0x358] sm:$0xff]
        %v4072 = vld [vmem:[#allocation6 + $0x360] sm:$0xf]
        %v4073 = vld [vmem:[#allocation6 + $0x364] sm:$0xff]
        %v4074 = vld [vmem:[#allocation6 + $0x36c] sm:$0xff]
        %v4075 = vld [vmem:[#allocation6 + $0x374] sm:$0xff]
        %v4076 = vld [vmem:[#allocation6 + $0x37c] sm:$0xf]
        %v4077 = vld [vmem:[#allocation6 + $0x380] sm:$0xff]
        %v4078 = vld [vmem:[#allocation6 + $0x388] sm:$0xff]
        %v4079 = vld [vmem:[#allocation6 + $0x390] sm:$0xff]
        %v4080 = vld [vmem:[#allocation6 + $0x398] sm:$0xf]
        %v4081 = vld [vmem:[#allocation6 + $0x39c] sm:$0xff]
        %v4082 = vld [vmem:[#allocation6 + $0x3a4] sm:$0xff]
        %v4083 = vld [vmem:[#allocation6 + $0x3ac] sm:$0xff]
        %v4084 = vld [vmem:[#allocation6 + $0x3b4] sm:$0xf]
        %v4085 = vld [vmem:[#allocation6 + $0x3b8] sm:$0xff]
        %v4086 = vld [vmem:[#allocation6 + $0x3c0] sm:$0xff]
        %v4087 = vld [vmem:[#allocation6 + $0x3c8] sm:$0xff]
        %v4088 = vld [vmem:[#allocation6 + $0x3d0] sm:$0xf]
        %v4089 = vld [vmem:[#allocation6 + $0x3d4] sm:$0xff]
        %v4090 = vld [vmem:[#allocation6 + $0x3dc] sm:$0xff]
        %v4091 = vld [vmem:[#allocation6 + $0x3e4] sm:$0xff]
        %v4092 = vld [vmem:[#allocation6 + $0x3ec] sm:$0xf]
        %v4093 = vld [vmem:[#allocation6 + $0x3f0] sm:$0xff]
        %v4094 = vld [vmem:[#allocation6 + $0x3f8] sm:$0xff]
        %v4095 = vld [vmem:[#allocation6 + $0x400] sm:$0xff]
        %v4096 = vld [vmem:[#allocation6 + $0x408] sm:$0xf]
        %v4097 = vld [vmem:[#allocation6 + $0x40c] sm:$0xff]
        %v4098 = vld [vmem:[#allocation6 + $0x414] sm:$0xff]
        %v4099 = vld [vmem:[#allocation6 + $0x41c] sm:$0xff]
        %v4100 = vld [vmem:[#allocation6 + $0x424] sm:$0xf]
        %v4101 = vld [vmem:[#allocation6 + $0x428] sm:$0xff]
        %v4102 = vld [vmem:[#allocation6 + $0x430] sm:$0xff]
        %v4103 = vld [vmem:[#allocation6 + $0x438] sm:$0xff]
        %v4104 = vld [vmem:[#allocation6 + $0x440] sm:$0xf]
        %v4105 = vld [vmem:[#allocation6 + $0x444] sm:$0xff]
        %v4106 = vld [vmem:[#allocation6 + $0x44c] sm:$0xff]
        %v4107 = vld [vmem:[#allocation6 + $0x454] sm:$0xff]
        %v4108 = vld [vmem:[#allocation6 + $0x45c] sm:$0xf]
        %v4109 = vld [vmem:[#allocation6 + $0x460] sm:$0xff]
        %v4110 = vld [vmem:[#allocation6 + $0x468] sm:$0xff]
        %v4111 = vld [vmem:[#allocation6 + $0x470] sm:$0xff]
        %v4112 = vld [vmem:[#allocation6 + $0x478] sm:$0xf]
        %v4113 = vld [vmem:[#allocation6 + $0x47c] sm:$0xff]
        %v4114 = vld [vmem:[#allocation6 + $0x484] sm:$0xff]
        %v4115 = vld [vmem:[#allocation6 + $0x48c] sm:$0xff]
        %v4116 = vld [vmem:[#allocation6 + $0x494] sm:$0xf]
        %v4117 = vld [vmem:[#allocation6 + $0x498] sm:$0xff]
        %v4118 = vld [vmem:[#allocation6 + $0x4a0] sm:$0xff]
        %v4119 = vld [vmem:[#allocation6 + $0x4a8] sm:$0xff]
        %v4120 = vld [vmem:[#allocation6 + $0x4b0] sm:$0xf]
        %v4121 = vld [vmem:[#allocation6 + $0x4b4] sm:$0xff]
        %v4122 = vld [vmem:[#allocation6 + $0x4bc] sm:$0xff]
        %v4123 = vld [vmem:[#allocation6 + $0x4c4] sm:$0xff]
        %v4124 = vld [vmem:[#allocation6 + $0x4cc] sm:$0xf]
        %v4125 = vld [vmem:[#allocation6 + $0x4d0] sm:$0xff]
        %v4126 = vld [vmem:[#allocation6 + $0x4d8] sm:$0xff]
        %v4127 = vld [vmem:[#allocation6 + $0x4e0] sm:$0xff]
        %v4128 = vld [vmem:[#allocation6 + $0x4e8] sm:$0xf]
        %v4129 = vld [vmem:[#allocation6 + $0x4ec] sm:$0xff]
        %v4130 = vld [vmem:[#allocation6 + $0x4f4] sm:$0xff]
        %v4131 = vld [vmem:[#allocation6 + $0x4fc] sm:$0xff]
        %v4132 = vld [vmem:[#allocation6 + $0x504] sm:$0xf]
        %v4133 = vld [vmem:[#allocation6 + $0x508] sm:$0xff]
        %v4134 = vld [vmem:[#allocation6 + $0x510] sm:$0xff]
        %v4135 = vld [vmem:[#allocation6 + $0x518] sm:$0xff]
        %v4136 = vld [vmem:[#allocation6 + $0x520] sm:$0xf]
        %v4137 = vld [vmem:[#allocation6 + $0x524] sm:$0xff]
        %v4138 = vld [vmem:[#allocation6 + $0x52c] sm:$0xff]
        %v4139 = vld [vmem:[#allocation6 + $0x534] sm:$0xff]
        %v4140 = vld [vmem:[#allocation6 + $0x53c] sm:$0xf]
        %v4141 = vld [vmem:[#allocation6 + $0x540] sm:$0xff]
        %v4142 = vld [vmem:[#allocation6 + $0x548] sm:$0xff]
        %v4143 = vld [vmem:[#allocation6 + $0x550] sm:$0xff]
        %v4144 = vld [vmem:[#allocation6 + $0x558] sm:$0xf]
        %v4145 = vld [vmem:[#allocation6 + $0x55c] sm:$0xff]
        %v4146 = vld [vmem:[#allocation6 + $0x564] sm:$0xff]
        %v4147 = vld [vmem:[#allocation6 + $0x56c] sm:$0xff]
        %v4148 = vld [vmem:[#allocation6 + $0x574] sm:$0xf]
        %v4149 = vld [vmem:[#allocation6 + $0x578] sm:$0xff]
        %v4150 = vld [vmem:[#allocation6 + $0x580] sm:$0xff]
        %v4151 = vld [vmem:[#allocation6 + $0x588] sm:$0xff]
        %v4152 = vld [vmem:[#allocation6 + $0x590] sm:$0xf]
        %v4153 = vld [vmem:[#allocation6 + $0x594] sm:$0xff]
        %v4154 = vld [vmem:[#allocation6 + $0x59c] sm:$0xff]
        %v4155 = vld [vmem:[#allocation6 + $0x5a4] sm:$0xff]
        %v4156 = vld [vmem:[#allocation6 + $0x5ac] sm:$0xf]
        %v4157 = vld [vmem:[#allocation6 + $0x5b0] sm:$0xff]
        %v4158 = vld [vmem:[#allocation6 + $0x5b8] sm:$0xff]
        %v4159 = vld [vmem:[#allocation6 + $0x5c0] sm:$0xff]
        %v4160 = vld [vmem:[#allocation6 + $0x5c8] sm:$0xf]
        %v4161 = vld [vmem:[#allocation6 + $0x5cc] sm:$0xff]
        %v4162 = vld [vmem:[#allocation6 + $0x5d4] sm:$0xff]
        %v4163 = vld [vmem:[#allocation6 + $0x5dc] sm:$0xff]
        %v4164 = vld [vmem:[#allocation6 + $0x5e4] sm:$0xf]
        %v4165 = vld [vmem:[#allocation6 + $0x5e8] sm:$0xff]
        %v4166 = vld [vmem:[#allocation6 + $0x5f0] sm:$0xff]
        %v4167 = vld [vmem:[#allocation6 + $0x5f8] sm:$0xff]
        %v4168 = vld [vmem:[#allocation6 + $0x600] sm:$0xf]
        %v4169 = vld [vmem:[#allocation6 + $0x604] sm:$0xff]
        %v4170 = vld [vmem:[#allocation6 + $0x60c] sm:$0xff]
        %v4171 = vld [vmem:[#allocation6 + $0x614] sm:$0xff]
        %v4172 = vld [vmem:[#allocation6 + $0x61c] sm:$0xf]
        %v4173 = vld [vmem:[#allocation6 + $0x620] sm:$0xff]
        %v4174 = vld [vmem:[#allocation6 + $0x628] sm:$0xff]
        %v4175 = vld [vmem:[#allocation6 + $0x630] sm:$0xff]
        %v4176 = vld [vmem:[#allocation6 + $0x638] sm:$0xf]
        %v4177 = vld [vmem:[#allocation6 + $0x63c] sm:$0xff]
        %v4178 = vld [vmem:[#allocation6 + $0x644] sm:$0xff]
        %v4179 = vld [vmem:[#allocation6 + $0x64c] sm:$0xff]
        %v4180 = vld [vmem:[#allocation6 + $0x654] sm:$0xf]
        %v4181 = vld [vmem:[#allocation6 + $0x658] sm:$0xff]
        %v4182 = vld [vmem:[#allocation6 + $0x660] sm:$0xff]
        %v4183 = vld [vmem:[#allocation6 + $0x668] sm:$0xff]
        %v4184 = vld [vmem:[#allocation6 + $0x670] sm:$0xf]
        %v4185 = vld [vmem:[#allocation6 + $0x674] sm:$0xff]
        %v4186 = vld [vmem:[#allocation6 + $0x67c] sm:$0xff]
        %v4187 = vld [vmem:[#allocation6 + $0x684] sm:$0xff]
        %v4188 = vld [vmem:[#allocation6 + $0x68c] sm:$0xf]
        %v4189 = vld [vmem:[#allocation6 + $0x690] sm:$0xff]
        %v4190 = vld [vmem:[#allocation6 + $0x698] sm:$0xff]
        %v4191 = vld [vmem:[#allocation6 + $0x6a0] sm:$0xff]
        %v4192 = vld [vmem:[#allocation6 + $0x6a8] sm:$0xf]
        %v4193 = vld [vmem:[#allocation6 + $0x6ac] sm:$0xff]
        %v4194 = vld [vmem:[#allocation6 + $0x6b4] sm:$0xff]
        %v4195 = vld [vmem:[#allocation6 + $0x6bc] sm:$0xff]
        %v4196 = vld [vmem:[#allocation6 + $0x6c4] sm:$0xf]
        %v4197 = vld [vmem:[#allocation6 + $0x6c8] sm:$0xff]
        %v4198 = vld [vmem:[#allocation6 + $0x6d0] sm:$0xff]
        %v4199 = vld [vmem:[#allocation6 + $0x6d8] sm:$0xff]
        %v4200 = vld [vmem:[#allocation6 + $0x6e0] sm:$0xf]
        %v4201 = vld [vmem:[#allocation6 + $0x6e4] sm:$0xff]
        %v4202 = vld [vmem:[#allocation6 + $0x6ec] sm:$0xff]
        %v4203 = vld [vmem:[#allocation6 + $0x6f4] sm:$0xff]
        %v4204 = vld [vmem:[#allocation6 + $0x6fc] sm:$0xf]
        %v4205 = vld [vmem:[%s11] sm:$0xff]
        %v4207 = vlaneseq
        %v4208 = vshrl.u32 %v4207, 7
        %v4209 = vsub.s32 0, %v4208
        %v4210 = vrot.slane %v4205, %v4209
        %v4211 = vlaneseq
        %v4212 = vshrl.u32 %v4211, 7
        %v4213 = vsub.s32 1, %v4212
        %v4214 = vrot.slane %v4205, %v4213
        %v4215 = vlaneseq
        %v4216 = vshrl.u32 %v4215, 7
        %v4217 = vsub.s32 2, %v4216
        %v4218 = vrot.slane %v4205, %v4217
        %v4219 = vlaneseq
        %v4220 = vshrl.u32 %v4219, 7
        %v4221 = vsub.s32 3, %v4220
        %v4222 = vrot.slane %v4205, %v4221
        %v4223 = vlaneseq
        %v4224 = vshrl.u32 %v4223, 7
        %v4225 = vsub.s32 4, %v4224
        %v4226 = vrot.slane %v4205, %v4225
        %v4227 = vlaneseq
        %v4228 = vshrl.u32 %v4227, 7
        %v4229 = vsub.s32 5, %v4228
        %v4230 = vrot.slane %v4205, %v4229
        %v4231 = vlaneseq
        %v4232 = vshrl.u32 %v4231, 7
        %v4233 = vsub.s32 6, %v4232
        %v4234 = vrot.slane %v4205, %v4233
        %v4498 = vunpack.c.l.b16 %v3949
        %v4499 = vunpack.c.h.b16 %v3949
        %v4500 = vunpack.c.l.b16 %v3950
        %v4501 = vunpack.c.h.b16 %v3950
        %v4502 = vunpack.c.l.b16 %v3951
        %v4503 = vunpack.c.h.b16 %v3951
        %v4504 = vunpack.c.l.b16 %v3952
        %v4505 = vunpack.c.l.b16 %v3953
        %v4506 = vunpack.c.h.b16 %v3953
        %v4507 = vunpack.c.l.b16 %v3954
        %v4508 = vunpack.c.h.b16 %v3954
        %v4509 = vunpack.c.l.b16 %v3955
        %v4510 = vunpack.c.h.b16 %v3955
        %v4511 = vunpack.c.l.b16 %v3956
        %v4512 = vunpack.c.l.b16 %v3957
        %v4513 = vunpack.c.h.b16 %v3957
        %v4514 = vunpack.c.l.b16 %v3958
        %v4515 = vunpack.c.h.b16 %v3958
        %v4516 = vunpack.c.l.b16 %v3959
        %v4517 = vunpack.c.h.b16 %v3959
        %v4518 = vunpack.c.l.b16 %v3960
        %v4519 = vunpack.c.l.b16 %v3961
        %v4520 = vunpack.c.h.b16 %v3961
        %v4521 = vunpack.c.l.b16 %v3962
        %v4522 = vunpack.c.h.b16 %v3962
        %v4523 = vunpack.c.l.b16 %v3963
        %v4524 = vunpack.c.h.b16 %v3963
        %v4525 = vunpack.c.l.b16 %v3964
        %v4526 = vunpack.c.l.b16 %v3965
        %v4527 = vunpack.c.h.b16 %v3965
        %v4528 = vunpack.c.l.b16 %v3966
        %v4529 = vunpack.c.h.b16 %v3966
        %v4530 = vunpack.c.l.b16 %v3967
        %v4531 = vunpack.c.h.b16 %v3967
        %v4532 = vunpack.c.l.b16 %v3968
        %v4533 = vunpack.c.l.b16 %v3969
        %v4534 = vunpack.c.h.b16 %v3969
        %v4535 = vunpack.c.l.b16 %v3970
        %v4536 = vunpack.c.h.b16 %v3970
        %v4537 = vunpack.c.l.b16 %v3971
        %v4538 = vunpack.c.h.b16 %v3971
        %v4539 = vunpack.c.l.b16 %v3972
        %v4540 = vunpack.c.l.b16 %v3973
        %v4541 = vunpack.c.h.b16 %v3973
        %v4542 = vunpack.c.l.b16 %v3974
        %v4543 = vunpack.c.h.b16 %v3974
        %v4544 = vunpack.c.l.b16 %v3975
        %v4545 = vunpack.c.h.b16 %v3975
        %v4546 = vunpack.c.l.b16 %v3976
        %v4547 = vunpack.c.l.b16 %v3977
        %v4548 = vunpack.c.h.b16 %v3977
        %v4549 = vunpack.c.l.b16 %v3978
        %v4550 = vunpack.c.h.b16 %v3978
        %v4551 = vunpack.c.l.b16 %v3979
        %v4552 = vunpack.c.h.b16 %v3979
        %v4553 = vunpack.c.l.b16 %v3980
        %v4554 = vunpack.c.l.b16 %v3981
        %v4555 = vunpack.c.h.b16 %v3981
        %v4556 = vunpack.c.l.b16 %v3982
        %v4557 = vunpack.c.h.b16 %v3982
        %v4558 = vunpack.c.l.b16 %v3983
        %v4559 = vunpack.c.h.b16 %v3983
        %v4560 = vunpack.c.l.b16 %v3984
        %v4561 = vunpack.c.l.b16 %v3985
        %v4562 = vunpack.c.h.b16 %v3985
        %v4563 = vunpack.c.l.b16 %v3986
        %v4564 = vunpack.c.h.b16 %v3986
        %v4565 = vunpack.c.l.b16 %v3987
        %v4566 = vunpack.c.h.b16 %v3987
        %v4567 = vunpack.c.l.b16 %v3988
        %v4568 = vunpack.c.l.b16 %v3989
        %v4569 = vunpack.c.h.b16 %v3989
        %v4570 = vunpack.c.l.b16 %v3990
        %v4571 = vunpack.c.h.b16 %v3990
        %v4572 = vunpack.c.l.b16 %v3991
        %v4573 = vunpack.c.h.b16 %v3991
        %v4574 = vunpack.c.l.b16 %v3992
        %v4575 = vunpack.c.l.b16 %v3993
        %v4576 = vunpack.c.h.b16 %v3993
        %v4577 = vunpack.c.l.b16 %v3994
        %v4578 = vunpack.c.h.b16 %v3994
        %v4579 = vunpack.c.l.b16 %v3995
        %v4580 = vunpack.c.h.b16 %v3995
        %v4581 = vunpack.c.l.b16 %v3996
        %v4582 = vunpack.c.l.b16 %v3997
        %v4583 = vunpack.c.h.b16 %v3997
        %v4584 = vunpack.c.l.b16 %v3998
        %v4585 = vunpack.c.h.b16 %v3998
        %v4586 = vunpack.c.l.b16 %v3999
        %v4587 = vunpack.c.h.b16 %v3999
        %v4588 = vunpack.c.l.b16 %v4000
        %v4589 = vunpack.c.l.b16 %v4001
        %v4590 = vunpack.c.h.b16 %v4001
        %v4591 = vunpack.c.l.b16 %v4002
        %v4592 = vunpack.c.h.b16 %v4002
        %v4593 = vunpack.c.l.b16 %v4003
        %v4594 = vunpack.c.h.b16 %v4003
        %v4595 = vunpack.c.l.b16 %v4004
        %v4596 = vunpack.c.l.b16 %v4005
        %v4597 = vunpack.c.h.b16 %v4005
        %v4598 = vunpack.c.l.b16 %v4006
        %v4599 = vunpack.c.h.b16 %v4006
        %v4600 = vunpack.c.l.b16 %v4007
        %v4601 = vunpack.c.h.b16 %v4007
        %v4602 = vunpack.c.l.b16 %v4008
        %v4603 = vunpack.c.l.b16 %v4009
        %v4604 = vunpack.c.h.b16 %v4009
        %v4605 = vunpack.c.l.b16 %v4010
        %v4606 = vunpack.c.h.b16 %v4010
        %v4607 = vunpack.c.l.b16 %v4011
        %v4608 = vunpack.c.h.b16 %v4011
        %v4609 = vunpack.c.l.b16 %v4012
        %v4610 = vunpack.c.l.b16 %v4013
        %v4611 = vunpack.c.h.b16 %v4013
        %v4612 = vunpack.c.l.b16 %v4014
        %v4613 = vunpack.c.h.b16 %v4014
        %v4614 = vunpack.c.l.b16 %v4015
        %v4615 = vunpack.c.h.b16 %v4015
        %v4616 = vunpack.c.l.b16 %v4016
        %v4617 = vunpack.c.l.b16 %v4017
        %v4618 = vunpack.c.h.b16 %v4017
        %v4619 = vunpack.c.l.b16 %v4018
        %v4620 = vunpack.c.h.b16 %v4018
        %v4621 = vunpack.c.l.b16 %v4019
        %v4622 = vunpack.c.h.b16 %v4019
        %v4623 = vunpack.c.l.b16 %v4020
        %v4624 = vunpack.c.l.b16 %v4021
        %v4625 = vunpack.c.h.b16 %v4021
        %v4626 = vunpack.c.l.b16 %v4022
        %v4627 = vunpack.c.h.b16 %v4022
        %v4628 = vunpack.c.l.b16 %v4023
        %v4629 = vunpack.c.h.b16 %v4023
        %v4630 = vunpack.c.l.b16 %v4024
        %v4631 = vunpack.c.l.b16 %v4025
        %v4632 = vunpack.c.h.b16 %v4025
        %v4633 = vunpack.c.l.b16 %v4026
        %v4634 = vunpack.c.h.b16 %v4026
        %v4635 = vunpack.c.l.b16 %v4027
        %v4636 = vunpack.c.h.b16 %v4027
        %v4637 = vunpack.c.l.b16 %v4028
        %v4638 = vunpack.c.l.b16 %v4029
        %v4639 = vunpack.c.h.b16 %v4029
        %v4640 = vunpack.c.l.b16 %v4030
        %v4641 = vunpack.c.h.b16 %v4030
        %v4642 = vunpack.c.l.b16 %v4031
        %v4643 = vunpack.c.h.b16 %v4031
        %v4644 = vunpack.c.l.b16 %v4032
        %v4645 = vunpack.c.l.b16 %v4033
        %v4646 = vunpack.c.h.b16 %v4033
        %v4647 = vunpack.c.l.b16 %v4034
        %v4648 = vunpack.c.h.b16 %v4034
        %v4649 = vunpack.c.l.b16 %v4035
        %v4650 = vunpack.c.h.b16 %v4035
        %v4651 = vunpack.c.l.b16 %v4036
        %v4652 = vunpack.c.l.b16 %v4037
        %v4653 = vunpack.c.h.b16 %v4037
        %v4654 = vunpack.c.l.b16 %v4038
        %v4655 = vunpack.c.h.b16 %v4038
        %v4656 = vunpack.c.l.b16 %v4039
        %v4657 = vunpack.c.h.b16 %v4039
        %v4658 = vunpack.c.l.b16 %v4040
        %v4659 = vunpack.c.l.b16 %v4041
        %v4660 = vunpack.c.h.b16 %v4041
        %v4661 = vunpack.c.l.b16 %v4042
        %v4662 = vunpack.c.h.b16 %v4042
        %v4663 = vunpack.c.l.b16 %v4043
        %v4664 = vunpack.c.h.b16 %v4043
        %v4665 = vunpack.c.l.b16 %v4044
        %v4666 = vunpack.c.l.b16 %v4045
        %v4667 = vunpack.c.h.b16 %v4045
        %v4668 = vunpack.c.l.b16 %v4046
        %v4669 = vunpack.c.h.b16 %v4046
        %v4670 = vunpack.c.l.b16 %v4047
        %v4671 = vunpack.c.h.b16 %v4047
        %v4672 = vunpack.c.l.b16 %v4048
        %v4673 = vunpack.c.l.b16 %v4049
        %v4674 = vunpack.c.h.b16 %v4049
        %v4675 = vunpack.c.l.b16 %v4050
        %v4676 = vunpack.c.h.b16 %v4050
        %v4677 = vunpack.c.l.b16 %v4051
        %v4678 = vunpack.c.h.b16 %v4051
        %v4679 = vunpack.c.l.b16 %v4052
        %v4680 = vunpack.c.l.b16 %v4053
        %v4681 = vunpack.c.h.b16 %v4053
        %v4682 = vunpack.c.l.b16 %v4054
        %v4683 = vunpack.c.h.b16 %v4054
        %v4684 = vunpack.c.l.b16 %v4055
        %v4685 = vunpack.c.h.b16 %v4055
        %v4686 = vunpack.c.l.b16 %v4056
        %v4687 = vunpack.c.l.b16 %v4057
        %v4688 = vunpack.c.h.b16 %v4057
        %v4689 = vunpack.c.l.b16 %v4058
        %v4690 = vunpack.c.h.b16 %v4058
        %v4691 = vunpack.c.l.b16 %v4059
        %v4692 = vunpack.c.h.b16 %v4059
        %v4693 = vunpack.c.l.b16 %v4060
        %v4694 = vunpack.c.l.b16 %v4061
        %v4695 = vunpack.c.h.b16 %v4061
        %v4696 = vunpack.c.l.b16 %v4062
        %v4697 = vunpack.c.h.b16 %v4062
        %v4698 = vunpack.c.l.b16 %v4063
        %v4699 = vunpack.c.h.b16 %v4063
        %v4700 = vunpack.c.l.b16 %v4064
        %v4701 = vunpack.c.l.b16 %v4065
        %v4702 = vunpack.c.h.b16 %v4065
        %v4703 = vunpack.c.l.b16 %v4066
        %v4704 = vunpack.c.h.b16 %v4066
        %v4705 = vunpack.c.l.b16 %v4067
        %v4706 = vunpack.c.h.b16 %v4067
        %v4707 = vunpack.c.l.b16 %v4068
        %v4708 = vunpack.c.l.b16 %v4069
        %v4709 = vunpack.c.h.b16 %v4069
        %v4710 = vunpack.c.l.b16 %v4070
        %v4711 = vunpack.c.h.b16 %v4070
        %v4712 = vunpack.c.l.b16 %v4071
        %v4713 = vunpack.c.h.b16 %v4071
        %v4714 = vunpack.c.l.b16 %v4072
        %v4715 = vunpack.c.l.b16 %v4073
        %v4716 = vunpack.c.h.b16 %v4073
        %v4717 = vunpack.c.l.b16 %v4074
        %v4718 = vunpack.c.h.b16 %v4074
        %v4719 = vunpack.c.l.b16 %v4075
        %v4720 = vunpack.c.h.b16 %v4075
        %v4721 = vunpack.c.l.b16 %v4076
        %v4722 = vunpack.c.l.b16 %v4077
        %v4723 = vunpack.c.h.b16 %v4077
        %v4724 = vunpack.c.l.b16 %v4078
        %v4725 = vunpack.c.h.b16 %v4078
        %v4726 = vunpack.c.l.b16 %v4079
        %v4727 = vunpack.c.h.b16 %v4079
        %v4728 = vunpack.c.l.b16 %v4080
        %v4729 = vunpack.c.l.b16 %v4081
        %v4730 = vunpack.c.h.b16 %v4081
        %v4731 = vunpack.c.l.b16 %v4082
        %v4732 = vunpack.c.h.b16 %v4082
        %v4733 = vunpack.c.l.b16 %v4083
        %v4734 = vunpack.c.h.b16 %v4083
        %v4735 = vunpack.c.l.b16 %v4084
        %v4736 = vunpack.c.l.b16 %v4085
        %v4737 = vunpack.c.h.b16 %v4085
        %v4738 = vunpack.c.l.b16 %v4086
        %v4739 = vunpack.c.h.b16 %v4086
        %v4740 = vunpack.c.l.b16 %v4087
        %v4741 = vunpack.c.h.b16 %v4087
        %v4742 = vunpack.c.l.b16 %v4088
        %v4743 = vunpack.c.l.b16 %v4089
        %v4744 = vunpack.c.h.b16 %v4089
        %v4745 = vunpack.c.l.b16 %v4090
        %v4746 = vunpack.c.h.b16 %v4090
        %v4747 = vunpack.c.l.b16 %v4091
        %v4748 = vunpack.c.h.b16 %v4091
        %v4749 = vunpack.c.l.b16 %v4092
        %v4750 = vunpack.c.l.b16 %v4093
        %v4751 = vunpack.c.h.b16 %v4093
        %v4752 = vunpack.c.l.b16 %v4094
        %v4753 = vunpack.c.h.b16 %v4094
        %v4754 = vunpack.c.l.b16 %v4095
        %v4755 = vunpack.c.h.b16 %v4095
        %v4756 = vunpack.c.l.b16 %v4096
        %v4757 = vunpack.c.l.b16 %v4097
        %v4758 = vunpack.c.h.b16 %v4097
        %v4759 = vunpack.c.l.b16 %v4098
        %v4760 = vunpack.c.h.b16 %v4098
        %v4761 = vunpack.c.l.b16 %v4099
        %v4762 = vunpack.c.h.b16 %v4099
        %v4763 = vunpack.c.l.b16 %v4100
        %v4764 = vunpack.c.l.b16 %v4101
        %v4765 = vunpack.c.h.b16 %v4101
        %v4766 = vunpack.c.l.b16 %v4102
        %v4767 = vunpack.c.h.b16 %v4102
        %v4768 = vunpack.c.l.b16 %v4103
        %v4769 = vunpack.c.h.b16 %v4103
        %v4770 = vunpack.c.l.b16 %v4104
        %v4771 = vunpack.c.l.b16 %v4105
        %v4772 = vunpack.c.h.b16 %v4105
        %v4773 = vunpack.c.l.b16 %v4106
        %v4774 = vunpack.c.h.b16 %v4106
        %v4775 = vunpack.c.l.b16 %v4107
        %v4776 = vunpack.c.h.b16 %v4107
        %v4777 = vunpack.c.l.b16 %v4108
        %v4778 = vunpack.c.l.b16 %v4109
        %v4779 = vunpack.c.h.b16 %v4109
        %v4780 = vunpack.c.l.b16 %v4110
        %v4781 = vunpack.c.h.b16 %v4110
        %v4782 = vunpack.c.l.b16 %v4111
        %v4783 = vunpack.c.h.b16 %v4111
        %v4784 = vunpack.c.l.b16 %v4112
        %v4785 = vunpack.c.l.b16 %v4113
        %v4786 = vunpack.c.h.b16 %v4113
        %v4787 = vunpack.c.l.b16 %v4114
        %v4788 = vunpack.c.h.b16 %v4114
        %v4789 = vunpack.c.l.b16 %v4115
        %v4790 = vunpack.c.h.b16 %v4115
        %v4791 = vunpack.c.l.b16 %v4116
        %v4792 = vunpack.c.l.b16 %v4117
        %v4793 = vunpack.c.h.b16 %v4117
        %v4794 = vunpack.c.l.b16 %v4118
        %v4795 = vunpack.c.h.b16 %v4118
        %v4796 = vunpack.c.l.b16 %v4119
        %v4797 = vunpack.c.h.b16 %v4119
        %v4798 = vunpack.c.l.b16 %v4120
        %v4799 = vunpack.c.l.b16 %v4121
        %v4800 = vunpack.c.h.b16 %v4121
        %v4801 = vunpack.c.l.b16 %v4122
        %v4802 = vunpack.c.h.b16 %v4122
        %v4803 = vunpack.c.l.b16 %v4123
        %v4804 = vunpack.c.h.b16 %v4123
        %v4805 = vunpack.c.l.b16 %v4124
        %v4806 = vunpack.c.l.b16 %v4125
        %v4807 = vunpack.c.h.b16 %v4125
        %v4808 = vunpack.c.l.b16 %v4126
        %v4809 = vunpack.c.h.b16 %v4126
        %v4810 = vunpack.c.l.b16 %v4127
        %v4811 = vunpack.c.h.b16 %v4127
        %v4812 = vunpack.c.l.b16 %v4128
        %v4813 = vunpack.c.l.b16 %v4129
        %v4814 = vunpack.c.h.b16 %v4129
        %v4815 = vunpack.c.l.b16 %v4130
        %v4816 = vunpack.c.h.b16 %v4130
        %v4817 = vunpack.c.l.b16 %v4131
        %v4818 = vunpack.c.h.b16 %v4131
        %v4819 = vunpack.c.l.b16 %v4132
        %v4820 = vunpack.c.l.b16 %v4133
        %v4821 = vunpack.c.h.b16 %v4133
        %v4822 = vunpack.c.l.b16 %v4134
        %v4823 = vunpack.c.h.b16 %v4134
        %v4824 = vunpack.c.l.b16 %v4135
        %v4825 = vunpack.c.h.b16 %v4135
        %v4826 = vunpack.c.l.b16 %v4136
        %v4827 = vunpack.c.l.b16 %v4137
        %v4828 = vunpack.c.h.b16 %v4137
        %v4829 = vunpack.c.l.b16 %v4138
        %v4830 = vunpack.c.h.b16 %v4138
        %v4831 = vunpack.c.l.b16 %v4139
        %v4832 = vunpack.c.h.b16 %v4139
        %v4833 = vunpack.c.l.b16 %v4140
        %v4834 = vunpack.c.l.b16 %v4141
        %v4835 = vunpack.c.h.b16 %v4141
        %v4836 = vunpack.c.l.b16 %v4142
        %v4837 = vunpack.c.h.b16 %v4142
        %v4838 = vunpack.c.l.b16 %v4143
        %v4839 = vunpack.c.h.b16 %v4143
        %v4840 = vunpack.c.l.b16 %v4144
        %v4841 = vunpack.c.l.b16 %v4145
        %v4842 = vunpack.c.h.b16 %v4145
        %v4843 = vunpack.c.l.b16 %v4146
        %v4844 = vunpack.c.h.b16 %v4146
        %v4845 = vunpack.c.l.b16 %v4147
        %v4846 = vunpack.c.h.b16 %v4147
        %v4847 = vunpack.c.l.b16 %v4148
        %v4848 = vunpack.c.l.b16 %v4149
        %v4849 = vunpack.c.h.b16 %v4149
        %v4850 = vunpack.c.l.b16 %v4150
        %v4851 = vunpack.c.h.b16 %v4150
        %v4852 = vunpack.c.l.b16 %v4151
        %v4853 = vunpack.c.h.b16 %v4151
        %v4854 = vunpack.c.l.b16 %v4152
        %v4855 = vunpack.c.l.b16 %v4153
        %v4856 = vunpack.c.h.b16 %v4153
        %v4857 = vunpack.c.l.b16 %v4154
        %v4858 = vunpack.c.h.b16 %v4154
        %v4859 = vunpack.c.l.b16 %v4155
        %v4860 = vunpack.c.h.b16 %v4155
        %v4861 = vunpack.c.l.b16 %v4156
        %v4862 = vunpack.c.l.b16 %v4157
        %v4863 = vunpack.c.h.b16 %v4157
        %v4864 = vunpack.c.l.b16 %v4158
        %v4865 = vunpack.c.h.b16 %v4158
        %v4866 = vunpack.c.l.b16 %v4159
        %v4867 = vunpack.c.h.b16 %v4159
        %v4868 = vunpack.c.l.b16 %v4160
        %v4869 = vunpack.c.l.b16 %v4161
        %v4870 = vunpack.c.h.b16 %v4161
        %v4871 = vunpack.c.l.b16 %v4162
        %v4872 = vunpack.c.h.b16 %v4162
        %v4873 = vunpack.c.l.b16 %v4163
        %v4874 = vunpack.c.h.b16 %v4163
        %v4875 = vunpack.c.l.b16 %v4164
        %v4876 = vunpack.c.l.b16 %v4165
        %v4877 = vunpack.c.h.b16 %v4165
        %v4878 = vunpack.c.l.b16 %v4166
        %v4879 = vunpack.c.h.b16 %v4166
        %v4880 = vunpack.c.l.b16 %v4167
        %v4881 = vunpack.c.h.b16 %v4167
        %v4882 = vunpack.c.l.b16 %v4168
        %v4883 = vunpack.c.l.b16 %v4169
        %v4884 = vunpack.c.h.b16 %v4169
        %v4885 = vunpack.c.l.b16 %v4170
        %v4886 = vunpack.c.h.b16 %v4170
        %v4887 = vunpack.c.l.b16 %v4171
        %v4888 = vunpack.c.h.b16 %v4171
        %v4889 = vunpack.c.l.b16 %v4172
        %v4890 = vunpack.c.l.b16 %v4173
        %v4891 = vunpack.c.h.b16 %v4173
        %v4892 = vunpack.c.l.b16 %v4174
        %v4893 = vunpack.c.h.b16 %v4174
        %v4894 = vunpack.c.l.b16 %v4175
        %v4895 = vunpack.c.h.b16 %v4175
        %v4896 = vunpack.c.l.b16 %v4176
        %v4897 = vunpack.c.l.b16 %v4177
        %v4898 = vunpack.c.h.b16 %v4177
        %v4899 = vunpack.c.l.b16 %v4178
        %v4900 = vunpack.c.h.b16 %v4178
        %v4901 = vunpack.c.l.b16 %v4179
        %v4902 = vunpack.c.h.b16 %v4179
        %v4903 = vunpack.c.l.b16 %v4180
        %v4904 = vunpack.c.l.b16 %v4181
        %v4905 = vunpack.c.h.b16 %v4181
        %v4906 = vunpack.c.l.b16 %v4182
        %v4907 = vunpack.c.h.b16 %v4182
        %v4908 = vunpack.c.l.b16 %v4183
        %v4909 = vunpack.c.h.b16 %v4183
        %v4910 = vunpack.c.l.b16 %v4184
        %v4911 = vunpack.c.l.b16 %v4185
        %v4912 = vunpack.c.h.b16 %v4185
        %v4913 = vunpack.c.l.b16 %v4186
        %v4914 = vunpack.c.h.b16 %v4186
        %v4915 = vunpack.c.l.b16 %v4187
        %v4916 = vunpack.c.h.b16 %v4187
        %v4917 = vunpack.c.l.b16 %v4188
        %v4918 = vunpack.c.l.b16 %v4189
        %v4919 = vunpack.c.h.b16 %v4189
        %v4920 = vunpack.c.l.b16 %v4190
        %v4921 = vunpack.c.h.b16 %v4190
        %v4922 = vunpack.c.l.b16 %v4191
        %v4923 = vunpack.c.h.b16 %v4191
        %v4924 = vunpack.c.l.b16 %v4192
        %v4925 = vunpack.c.l.b16 %v4193
        %v4926 = vunpack.c.h.b16 %v4193
        %v4927 = vunpack.c.l.b16 %v4194
        %v4928 = vunpack.c.h.b16 %v4194
        %v4929 = vunpack.c.l.b16 %v4195
        %v4930 = vunpack.c.h.b16 %v4195
        %v4931 = vunpack.c.l.b16 %v4196
        %v4932 = vunpack.c.l.b16 %v4197
        %v4933 = vunpack.c.h.b16 %v4197
        %v4934 = vunpack.c.l.b16 %v4198
        %v4935 = vunpack.c.h.b16 %v4198
        %v4936 = vunpack.c.l.b16 %v4199
        %v4937 = vunpack.c.h.b16 %v4199
        %v4938 = vunpack.c.l.b16 %v4200
        %v4939 = vunpack.c.l.b16 %v4201
        %v4940 = vunpack.c.h.b16 %v4201
        %v4941 = vunpack.c.l.b16 %v4202
        %v4942 = vunpack.c.h.b16 %v4202
        %v4943 = vunpack.c.l.b16 %v4203
        %v4944 = vunpack.c.h.b16 %v4203
        %v4945 = vunpack.c.l.b16 %v4204
        %v4946 = vpack.c.b16 %v4505, %v4498
        %v4947 = vpack.c.b16 %v4506, %v4499
        %v4948 = vpack.c.b16 %v4507, %v4500
        %v4949 = vpack.c.b16 %v4508, %v4501
        %v4950 = vpack.c.b16 %v4509, %v4502
        %v4951 = vpack.c.b16 %v4510, %v4503
        %v4952 = vpack.c.b16 %v4511, %v4504
        %v4953 = vpack.c.b16 %v4519, %v4512
        %v4954 = vpack.c.b16 %v4520, %v4513
        %v4955 = vpack.c.b16 %v4521, %v4514
        %v4956 = vpack.c.b16 %v4522, %v4515
        %v4957 = vpack.c.b16 %v4523, %v4516
        %v4958 = vpack.c.b16 %v4524, %v4517
        %v4959 = vpack.c.b16 %v4525, %v4518
        %v4960 = vpack.c.b16 %v4533, %v4526
        %v4961 = vpack.c.b16 %v4534, %v4527
        %v4962 = vpack.c.b16 %v4535, %v4528
        %v4963 = vpack.c.b16 %v4536, %v4529
        %v4964 = vpack.c.b16 %v4537, %v4530
        %v4965 = vpack.c.b16 %v4538, %v4531
        %v4966 = vpack.c.b16 %v4539, %v4532
        %v4967 = vpack.c.b16 %v4547, %v4540
        %v4968 = vpack.c.b16 %v4548, %v4541
        %v4969 = vpack.c.b16 %v4549, %v4542
        %v4970 = vpack.c.b16 %v4550, %v4543
        %v4971 = vpack.c.b16 %v4551, %v4544
        %v4972 = vpack.c.b16 %v4552, %v4545
        %v4973 = vpack.c.b16 %v4553, %v4546
        %v4974 = vpack.c.b16 %v4561, %v4554
        %v4975 = vpack.c.b16 %v4562, %v4555
        %v4976 = vpack.c.b16 %v4563, %v4556
        %v4977 = vpack.c.b16 %v4564, %v4557
        %v4978 = vpack.c.b16 %v4565, %v4558
        %v4979 = vpack.c.b16 %v4566, %v4559
        %v4980 = vpack.c.b16 %v4567, %v4560
        %v4981 = vpack.c.b16 %v4575, %v4568
        %v4982 = vpack.c.b16 %v4576, %v4569
        %v4983 = vpack.c.b16 %v4577, %v4570
        %v4984 = vpack.c.b16 %v4578, %v4571
        %v4985 = vpack.c.b16 %v4579, %v4572
        %v4986 = vpack.c.b16 %v4580, %v4573
        %v4987 = vpack.c.b16 %v4581, %v4574
        %v4988 = vpack.c.b16 %v4589, %v4582
        %v4989 = vpack.c.b16 %v4590, %v4583
        %v4990 = vpack.c.b16 %v4591, %v4584
        %v4991 = vpack.c.b16 %v4592, %v4585
        %v4992 = vpack.c.b16 %v4593, %v4586
        %v4993 = vpack.c.b16 %v4594, %v4587
        %v4994 = vpack.c.b16 %v4595, %v4588
        %v4995 = vpack.c.b16 %v4603, %v4596
        %v4996 = vpack.c.b16 %v4604, %v4597
        %v4997 = vpack.c.b16 %v4605, %v4598
        %v4998 = vpack.c.b16 %v4606, %v4599
        %v4999 = vpack.c.b16 %v4607, %v4600
        %v5000 = vpack.c.b16 %v4608, %v4601
        %v5001 = vpack.c.b16 %v4609, %v4602
        %v5002 = vpack.c.b16 %v4617, %v4610
        %v5003 = vpack.c.b16 %v4618, %v4611
        %v5004 = vpack.c.b16 %v4619, %v4612
        %v5005 = vpack.c.b16 %v4620, %v4613
        %v5006 = vpack.c.b16 %v4621, %v4614
        %v5007 = vpack.c.b16 %v4622, %v4615
        %v5008 = vpack.c.b16 %v4623, %v4616
        %v5009 = vpack.c.b16 %v4631, %v4624
        %v5010 = vpack.c.b16 %v4632, %v4625
        %v5011 = vpack.c.b16 %v4633, %v4626
        %v5012 = vpack.c.b16 %v4634, %v4627
        %v5013 = vpack.c.b16 %v4635, %v4628
        %v5014 = vpack.c.b16 %v4636, %v4629
        %v5015 = vpack.c.b16 %v4637, %v4630
        %v5016 = vpack.c.b16 %v4645, %v4638
        %v5017 = vpack.c.b16 %v4646, %v4639
        %v5018 = vpack.c.b16 %v4647, %v4640
        %v5019 = vpack.c.b16 %v4648, %v4641
        %v5020 = vpack.c.b16 %v4649, %v4642
        %v5021 = vpack.c.b16 %v4650, %v4643
        %v5022 = vpack.c.b16 %v4651, %v4644
        %v5023 = vpack.c.b16 %v4659, %v4652
        %v5024 = vpack.c.b16 %v4660, %v4653
        %v5025 = vpack.c.b16 %v4661, %v4654
        %v5026 = vpack.c.b16 %v4662, %v4655
        %v5027 = vpack.c.b16 %v4663, %v4656
        %v5028 = vpack.c.b16 %v4664, %v4657
        %v5029 = vpack.c.b16 %v4665, %v4658
        %v5030 = vpack.c.b16 %v4673, %v4666
        %v5031 = vpack.c.b16 %v4674, %v4667
        %v5032 = vpack.c.b16 %v4675, %v4668
        %v5033 = vpack.c.b16 %v4676, %v4669
        %v5034 = vpack.c.b16 %v4677, %v4670
        %v5035 = vpack.c.b16 %v4678, %v4671
        %v5036 = vpack.c.b16 %v4679, %v4672
        %v5037 = vpack.c.b16 %v4687, %v4680
        %v5038 = vpack.c.b16 %v4688, %v4681
        %v5039 = vpack.c.b16 %v4689, %v4682
        %v5040 = vpack.c.b16 %v4690, %v4683
        %v5041 = vpack.c.b16 %v4691, %v4684
        %v5042 = vpack.c.b16 %v4692, %v4685
        %v5043 = vpack.c.b16 %v4693, %v4686
        %v5044 = vpack.c.b16 %v4701, %v4694
        %v5045 = vpack.c.b16 %v4702, %v4695
        %v5046 = vpack.c.b16 %v4703, %v4696
        %v5047 = vpack.c.b16 %v4704, %v4697
        %v5048 = vpack.c.b16 %v4705, %v4698
        %v5049 = vpack.c.b16 %v4706, %v4699
        %v5050 = vpack.c.b16 %v4707, %v4700
        %v5051 = vpack.c.b16 %v4715, %v4708
        %v5052 = vpack.c.b16 %v4716, %v4709
        %v5053 = vpack.c.b16 %v4717, %v4710
        %v5054 = vpack.c.b16 %v4718, %v4711
        %v5055 = vpack.c.b16 %v4719, %v4712
        %v5056 = vpack.c.b16 %v4720, %v4713
        %v5057 = vpack.c.b16 %v4721, %v4714
        %v5058 = vpack.c.b16 %v4729, %v4722
        %v5059 = vpack.c.b16 %v4730, %v4723
        %v5060 = vpack.c.b16 %v4731, %v4724
        %v5061 = vpack.c.b16 %v4732, %v4725
        %v5062 = vpack.c.b16 %v4733, %v4726
        %v5063 = vpack.c.b16 %v4734, %v4727
        %v5064 = vpack.c.b16 %v4735, %v4728
        %v5065 = vpack.c.b16 %v4743, %v4736
        %v5066 = vpack.c.b16 %v4744, %v4737
        %v5067 = vpack.c.b16 %v4745, %v4738
        %v5068 = vpack.c.b16 %v4746, %v4739
        %v5069 = vpack.c.b16 %v4747, %v4740
        %v5070 = vpack.c.b16 %v4748, %v4741
        %v5071 = vpack.c.b16 %v4749, %v4742
        %v5072 = vpack.c.b16 %v4757, %v4750
        %v5073 = vpack.c.b16 %v4758, %v4751
        %v5074 = vpack.c.b16 %v4759, %v4752
        %v5075 = vpack.c.b16 %v4760, %v4753
        %v5076 = vpack.c.b16 %v4761, %v4754
        %v5077 = vpack.c.b16 %v4762, %v4755
        %v5078 = vpack.c.b16 %v4763, %v4756
        %v5079 = vpack.c.b16 %v4771, %v4764
        %v5080 = vpack.c.b16 %v4772, %v4765
        %v5081 = vpack.c.b16 %v4773, %v4766
        %v5082 = vpack.c.b16 %v4774, %v4767
        %v5083 = vpack.c.b16 %v4775, %v4768
        %v5084 = vpack.c.b16 %v4776, %v4769
        %v5085 = vpack.c.b16 %v4777, %v4770
        %v5086 = vpack.c.b16 %v4785, %v4778
        %v5087 = vpack.c.b16 %v4786, %v4779
        %v5088 = vpack.c.b16 %v4787, %v4780
        %v5089 = vpack.c.b16 %v4788, %v4781
        %v5090 = vpack.c.b16 %v4789, %v4782
        %v5091 = vpack.c.b16 %v4790, %v4783
        %v5092 = vpack.c.b16 %v4791, %v4784
        %v5093 = vpack.c.b16 %v4799, %v4792
        %v5094 = vpack.c.b16 %v4800, %v4793
        %v5095 = vpack.c.b16 %v4801, %v4794
        %v5096 = vpack.c.b16 %v4802, %v4795
        %v5097 = vpack.c.b16 %v4803, %v4796
        %v5098 = vpack.c.b16 %v4804, %v4797
        %v5099 = vpack.c.b16 %v4805, %v4798
        %v5100 = vpack.c.b16 %v4813, %v4806
        %v5101 = vpack.c.b16 %v4814, %v4807
        %v5102 = vpack.c.b16 %v4815, %v4808
        %v5103 = vpack.c.b16 %v4816, %v4809
        %v5104 = vpack.c.b16 %v4817, %v4810
        %v5105 = vpack.c.b16 %v4818, %v4811
        %v5106 = vpack.c.b16 %v4819, %v4812
        %v5107 = vpack.c.b16 %v4827, %v4820
        %v5108 = vpack.c.b16 %v4828, %v4821
        %v5109 = vpack.c.b16 %v4829, %v4822
        %v5110 = vpack.c.b16 %v4830, %v4823
        %v5111 = vpack.c.b16 %v4831, %v4824
        %v5112 = vpack.c.b16 %v4832, %v4825
        %v5113 = vpack.c.b16 %v4833, %v4826
        %v5114 = vpack.c.b16 %v4841, %v4834
        %v5115 = vpack.c.b16 %v4842, %v4835
        %v5116 = vpack.c.b16 %v4843, %v4836
        %v5117 = vpack.c.b16 %v4844, %v4837
        %v5118 = vpack.c.b16 %v4845, %v4838
        %v5119 = vpack.c.b16 %v4846, %v4839
        %v5120 = vpack.c.b16 %v4847, %v4840
        %v5121 = vpack.c.b16 %v4855, %v4848
        %v5122 = vpack.c.b16 %v4856, %v4849
        %v5123 = vpack.c.b16 %v4857, %v4850
        %v5124 = vpack.c.b16 %v4858, %v4851
        %v5125 = vpack.c.b16 %v4859, %v4852
        %v5126 = vpack.c.b16 %v4860, %v4853
        %v5127 = vpack.c.b16 %v4861, %v4854
        %v5128 = vpack.c.b16 %v4869, %v4862
        %v5129 = vpack.c.b16 %v4870, %v4863
        %v5130 = vpack.c.b16 %v4871, %v4864
        %v5131 = vpack.c.b16 %v4872, %v4865
        %v5132 = vpack.c.b16 %v4873, %v4866
        %v5133 = vpack.c.b16 %v4874, %v4867
        %v5134 = vpack.c.b16 %v4875, %v4868
        %v5135 = vpack.c.b16 %v4883, %v4876
        %v5136 = vpack.c.b16 %v4884, %v4877
        %v5137 = vpack.c.b16 %v4885, %v4878
        %v5138 = vpack.c.b16 %v4886, %v4879
        %v5139 = vpack.c.b16 %v4887, %v4880
        %v5140 = vpack.c.b16 %v4888, %v4881
        %v5141 = vpack.c.b16 %v4889, %v4882
        %v5142 = vpack.c.b16 %v4897, %v4890
        %v5143 = vpack.c.b16 %v4898, %v4891
        %v5144 = vpack.c.b16 %v4899, %v4892
        %v5145 = vpack.c.b16 %v4900, %v4893
        %v5146 = vpack.c.b16 %v4901, %v4894
        %v5147 = vpack.c.b16 %v4902, %v4895
        %v5148 = vpack.c.b16 %v4903, %v4896
        %v5149 = vpack.c.b16 %v4911, %v4904
        %v5150 = vpack.c.b16 %v4912, %v4905
        %v5151 = vpack.c.b16 %v4913, %v4906
        %v5152 = vpack.c.b16 %v4914, %v4907
        %v5153 = vpack.c.b16 %v4915, %v4908
        %v5154 = vpack.c.b16 %v4916, %v4909
        %v5155 = vpack.c.b16 %v4917, %v4910
        %v5156 = vpack.c.b16 %v4925, %v4918
        %v5157 = vpack.c.b16 %v4926, %v4919
        %v5158 = vpack.c.b16 %v4927, %v4920
        %v5159 = vpack.c.b16 %v4928, %v4921
        %v5160 = vpack.c.b16 %v4929, %v4922
        %v5161 = vpack.c.b16 %v4930, %v4923
        %v5162 = vpack.c.b16 %v4931, %v4924
        %v5163 = vpack.c.b16 %v4939, %v4932
        %v5164 = vpack.c.b16 %v4940, %v4933
        %v5165 = vpack.c.b16 %v4941, %v4934
        %v5166 = vpack.c.b16 %v4942, %v4935
        %v5167 = vpack.c.b16 %v4943, %v4936
        %v5168 = vpack.c.b16 %v4944, %v4937
        %v5169 = vpack.c.b16 %v4945, %v4938
        %5394 = vmatprep.subr.bf16.mxu0 %v4996
        %5395 = vmatpush1.bf16.msra.mxu0 %v4995
        %5396 = vmatprep.subr.bf16.mxu0 %v4989
        %5397 = vmatpush1.bf16.msra.mxu0 %v4988
        %5398 = vmatprep.subr.bf16.mxu0 %v4982
        %5399 = vmatpush1.bf16.msra.mxu0 %v4981
        %5400 = vmatprep.subr.bf16.mxu0 %v4975
        %5401 = vmatpush1.bf16.msra.mxu0 %v4974
        %5402 = vmatprep.subr.bf16.mxu0 %v4968
        %5403 = vmatpush1.bf16.msra.mxu0 %v4967
        %5404 = vmatprep.subr.bf16.mxu0 %v4961
        %5405 = vmatpush1.bf16.msra.mxu0 %v4960
        %5406 = vmatprep.subr.bf16.mxu0 %v4954
        %5407 = vmatpush1.bf16.msra.mxu0 %v4953
        %5408 = vmatprep.subr.bf16.mxu0 %v4947
        %5409 = vmatpush1.bf16.msra.mxu0 %v4946
        %5410 = vmatprep.subr.bf16.mxu0 %v5052
        %5411 = vmatpush2.bf16.msra.mxu0 %v5051
        %5412 = vmatprep.subr.bf16.mxu0 %v5045
        %5413 = vmatpush2.bf16.msra.mxu0 %v5044
        %5414 = vmatprep.subr.bf16.mxu0 %v5038
        %5415 = vmatpush2.bf16.msra.mxu0 %v5037
        %5416 = vmatprep.subr.bf16.mxu0 %v5031
        %5417 = vmatpush2.bf16.msra.mxu0 %v5030
        %5418 = vmatprep.subr.bf16.mxu0 %v5024
        %5419 = vmatpush2.bf16.msra.mxu0 %v5023
        %5420 = vmatprep.subr.bf16.mxu0 %v5017
        %5421 = vmatpush2.bf16.msra.mxu0 %v5016
        %5422 = vmatprep.subr.bf16.mxu0 %v5010
        %5423 = vmatpush2.bf16.msra.mxu0 %v5009
        %5424 = vmatprep.subr.bf16.mxu0 %v5003
        %5425 = vmatpush2.bf16.msra.mxu0 %v5002
        %5426 = vmatprep.mubr.bf16.mxu0 %v3946
        %5427 = vmatmul.mubr.bf16.gmra.mxu0 %v3945
        %v5428 = vpop.f32.mrf.mxu0
        %v5429 = vadd.f32 %v4210, %v5428
        %v5430 = vpop.f32.mrf.mxu0
        %v5431 = vadd.f32 %v4214, %v5430
        %v5432 = vpop.f32.mrf.mxu0
        %v5433 = vadd.f32 %v4210, %v5432
        %v5434 = vpop.f32.mrf.mxu0
        %v5435 = vadd.f32 %v4214, %v5434
        %5436 = vdwg.mxu0
        %5437 = vmatprep.subr.bf16.mxu0 %v5108
        %5438 = vmatpush1.bf16.msra.mxu0 %v5107
        %5439 = vmatprep.subr.bf16.mxu0 %v5101
        %5440 = vmatpush1.bf16.msra.mxu0 %v5100
        %5441 = vmatprep.subr.bf16.mxu0 %v5094
        %5442 = vmatpush1.bf16.msra.mxu0 %v5093
        %5443 = vmatprep.subr.bf16.mxu0 %v5087
        %5444 = vmatpush1.bf16.msra.mxu0 %v5086
        %5445 = vmatprep.subr.bf16.mxu0 %v5080
        %5446 = vmatpush1.bf16.msra.mxu0 %v5079
        %5447 = vmatprep.subr.bf16.mxu0 %v5073
        %5448 = vmatpush1.bf16.msra.mxu0 %v5072
        %5449 = vmatprep.subr.bf16.mxu0 %v5066
        %5450 = vmatpush1.bf16.msra.mxu0 %v5065
        %5451 = vmatprep.subr.bf16.mxu0 %v5059
        %5452 = vmatpush1.bf16.msra.mxu0 %v5058
        %5453 = vmatprep.subr.bf16.mxu0 %v5164
        %5454 = vmatpush2.bf16.msra.mxu0 %v5163
        %5455 = vmatprep.subr.bf16.mxu0 %v5157
        %5456 = vmatpush2.bf16.msra.mxu0 %v5156
        %5457 = vmatprep.subr.bf16.mxu0 %v5150
        %5458 = vmatpush2.bf16.msra.mxu0 %v5149
        %5459 = vmatprep.subr.bf16.mxu0 %v5143
        %5460 = vmatpush2.bf16.msra.mxu0 %v5142
        %5461 = vmatprep.subr.bf16.mxu0 %v5136
        %5462 = vmatpush2.bf16.msra.mxu0 %v5135
        %5463 = vmatprep.subr.bf16.mxu0 %v5129
        %5464 = vmatpush2.bf16.msra.mxu0 %v5128
        %5465 = vmatprep.subr.bf16.mxu0 %v5122
        %5466 = vmatpush2.bf16.msra.mxu0 %v5121
        %5467 = vmatprep.subr.bf16.mxu0 %v5115
        %5468 = vmatpush2.bf16.msra.mxu0 %v5114
        %5469 = vmatprep.mubr.bf16.mxu0 %v3948
        %5470 = vmatmul.mubr.bf16.gmra.mxu0 %v3947
        %v5471 = vpop.f32.mrf.mxu0
        %v5472 = vadd.f32 %v5429, %v5471
        %v5473 = vpop.f32.mrf.mxu0
        %v5474 = vadd.f32 %v5431, %v5473
        %v5475 = vpop.f32.mrf.mxu0
        %v5476 = vadd.f32 %v5433, %v5475
        %v5477 = vpop.f32.mrf.mxu0
        %v5478 = vadd.f32 %v5435, %v5477
        %5479 = vdwg.mxu0
        %5480 = vmatprep.subr.bf16.mxu0 %v4998
        %5481 = vmatpush1.bf16.msra.mxu0 %v4997
        %5482 = vmatprep.subr.bf16.mxu0 %v4991
        %5483 = vmatpush1.bf16.msra.mxu0 %v4990
        %5484 = vmatprep.subr.bf16.mxu0 %v4984
        %5485 = vmatpush1.bf16.msra.mxu0 %v4983
        %5486 = vmatprep.subr.bf16.mxu0 %v4977
        %5487 = vmatpush1.bf16.msra.mxu0 %v4976
        %5488 = vmatprep.subr.bf16.mxu0 %v4970
        %5489 = vmatpush1.bf16.msra.mxu0 %v4969
        %5490 = vmatprep.subr.bf16.mxu0 %v4963
        %5491 = vmatpush1.bf16.msra.mxu0 %v4962
        %5492 = vmatprep.subr.bf16.mxu0 %v4956
        %5493 = vmatpush1.bf16.msra.mxu0 %v4955
        %5494 = vmatprep.subr.bf16.mxu0 %v4949
        %5495 = vmatpush1.bf16.msra.mxu0 %v4948
        %5496 = vmatprep.subr.bf16.mxu0 %v5054
        %5497 = vmatpush2.bf16.msra.mxu0 %v5053
        %5498 = vmatprep.subr.bf16.mxu0 %v5047
        %5499 = vmatpush2.bf16.msra.mxu0 %v5046
        %5500 = vmatprep.subr.bf16.mxu0 %v5040
        %5501 = vmatpush2.bf16.msra.mxu0 %v5039
        %5502 = vmatprep.subr.bf16.mxu0 %v5033
        %5503 = vmatpush2.bf16.msra.mxu0 %v5032
        %5504 = vmatprep.subr.bf16.mxu0 %v5026
        %5505 = vmatpush2.bf16.msra.mxu0 %v5025
        %5506 = vmatprep.subr.bf16.mxu0 %v5019
        %5507 = vmatpush2.bf16.msra.mxu0 %v5018
        %5508 = vmatprep.subr.bf16.mxu0 %v5012
        %5509 = vmatpush2.bf16.msra.mxu0 %v5011
        %5510 = vmatprep.subr.bf16.mxu0 %v5005
        %5511 = vmatpush2.bf16.msra.mxu0 %v5004
        %5512 = vmatprep.mubr.bf16.mxu0 %v3946
        %5513 = vmatmul.mubr.bf16.gmra.mxu0 %v3945
        %v5514 = vpop.f32.mrf.mxu0
        %v5515 = vadd.f32 %v4218, %v5514
        %v5516 = vpop.f32.mrf.mxu0
        %v5517 = vadd.f32 %v4222, %v5516
        %v5518 = vpop.f32.mrf.mxu0
        %v5519 = vadd.f32 %v4218, %v5518
        %v5520 = vpop.f32.mrf.mxu0
        %v5521 = vadd.f32 %v4222, %v5520
        %5522 = vdwg.mxu0
        %5523 = vmatprep.subr.bf16.mxu0 %v5110
        %5524 = vmatpush1.bf16.msra.mxu0 %v5109
        %5525 = vmatprep.subr.bf16.mxu0 %v5103
        %5526 = vmatpush1.bf16.msra.mxu0 %v5102
        %5527 = vmatprep.subr.bf16.mxu0 %v5096
        %5528 = vmatpush1.bf16.msra.mxu0 %v5095
        %5529 = vmatprep.subr.bf16.mxu0 %v5089
        %5530 = vmatpush1.bf16.msra.mxu0 %v5088
        %5531 = vmatprep.subr.bf16.mxu0 %v5082
        %5532 = vmatpush1.bf16.msra.mxu0 %v5081
        %5533 = vmatprep.subr.bf16.mxu0 %v5075
        %5534 = vmatpush1.bf16.msra.mxu0 %v5074
        %5535 = vmatprep.subr.bf16.mxu0 %v5068
        %5536 = vmatpush1.bf16.msra.mxu0 %v5067
        %5537 = vmatprep.subr.bf16.mxu0 %v5061
        %5538 = vmatpush1.bf16.msra.mxu0 %v5060
        %5539 = vmatprep.subr.bf16.mxu0 %v5166
        %5540 = vmatpush2.bf16.msra.mxu0 %v5165
        %5541 = vmatprep.subr.bf16.mxu0 %v5159
        %5542 = vmatpush2.bf16.msra.mxu0 %v5158
        %5543 = vmatprep.subr.bf16.mxu0 %v5152
        %5544 = vmatpush2.bf16.msra.mxu0 %v5151
        %5545 = vmatprep.subr.bf16.mxu0 %v5145
        %5546 = vmatpush2.bf16.msra.mxu0 %v5144
        %5547 = vmatprep.subr.bf16.mxu0 %v5138
        %5548 = vmatpush2.bf16.msra.mxu0 %v5137
        %5549 = vmatprep.subr.bf16.mxu0 %v5131
        %5550 = vmatpush2.bf16.msra.mxu0 %v5130
        %5551 = vmatprep.subr.bf16.mxu0 %v5124
        %5552 = vmatpush2.bf16.msra.mxu0 %v5123
        %5553 = vmatprep.subr.bf16.mxu0 %v5117
        %5554 = vmatpush2.bf16.msra.mxu0 %v5116
        %5555 = vmatprep.mubr.bf16.mxu0 %v3948
        %5556 = vmatmul.mubr.bf16.gmra.mxu0 %v3947
        %v5557 = vpop.f32.mrf.mxu0
        %v5558 = vadd.f32 %v5515, %v5557
        %v5559 = vpop.f32.mrf.mxu0
        %v5560 = vadd.f32 %v5517, %v5559
        %v5561 = vpop.f32.mrf.mxu0
        %v5562 = vadd.f32 %v5519, %v5561
        %v5563 = vpop.f32.mrf.mxu0
        %v5564 = vadd.f32 %v5521, %v5563
        %5565 = vdwg.mxu0
        %5566 = vmatprep.subr.bf16.mxu0 %v5000
        %5567 = vmatpush1.bf16.msra.mxu0 %v4999
        %5568 = vmatprep.subr.bf16.mxu0 %v4993
        %5569 = vmatpush1.bf16.msra.mxu0 %v4992
        %5570 = vmatprep.subr.bf16.mxu0 %v4986
        %5571 = vmatpush1.bf16.msra.mxu0 %v4985
        %5572 = vmatprep.subr.bf16.mxu0 %v4979
        %5573 = vmatpush1.bf16.msra.mxu0 %v4978
        %5574 = vmatprep.subr.bf16.mxu0 %v4972
        %5575 = vmatpush1.bf16.msra.mxu0 %v4971
        %5576 = vmatprep.subr.bf16.mxu0 %v4965
        %5577 = vmatpush1.bf16.msra.mxu0 %v4964
        %5578 = vmatprep.subr.bf16.mxu0 %v4958
        %5579 = vmatpush1.bf16.msra.mxu0 %v4957
        %5580 = vmatprep.subr.bf16.mxu0 %v4951
        %5581 = vmatpush1.bf16.msra.mxu0 %v4950
        %5582 = vmatprep.subr.bf16.mxu0 %v5056
        %5583 = vmatpush2.bf16.msra.mxu0 %v5055
        %5584 = vmatprep.subr.bf16.mxu0 %v5049
        %5585 = vmatpush2.bf16.msra.mxu0 %v5048
        %5586 = vmatprep.subr.bf16.mxu0 %v5042
        %5587 = vmatpush2.bf16.msra.mxu0 %v5041
        %5588 = vmatprep.subr.bf16.mxu0 %v5035
        %5589 = vmatpush2.bf16.msra.mxu0 %v5034
        %5590 = vmatprep.subr.bf16.mxu0 %v5028
        %5591 = vmatpush2.bf16.msra.mxu0 %v5027
        %5592 = vmatprep.subr.bf16.mxu0 %v5021
        %5593 = vmatpush2.bf16.msra.mxu0 %v5020
        %5594 = vmatprep.subr.bf16.mxu0 %v5014
        %5595 = vmatpush2.bf16.msra.mxu0 %v5013
        %5596 = vmatprep.subr.bf16.mxu0 %v5007
        %5597 = vmatpush2.bf16.msra.mxu0 %v5006
        %5598 = vmatprep.mubr.bf16.mxu0 %v3946
        %5599 = vmatmul.mubr.bf16.gmra.mxu0 %v3945
        %v5600 = vpop.f32.mrf.mxu0
        %v5601 = vadd.f32 %v4226, %v5600
        %v5602 = vpop.f32.mrf.mxu0
        %v5603 = vadd.f32 %v4230, %v5602
        %v5604 = vpop.f32.mrf.mxu0
        %v5605 = vadd.f32 %v4226, %v5604
        %v5606 = vpop.f32.mrf.mxu0
        %v5607 = vadd.f32 %v4230, %v5606
        %5608 = vdwg.mxu0
        %5609 = vmatprep.subr.bf16.mxu0 %v5112
        %5610 = vmatpush1.bf16.msra.mxu0 %v5111
        %5611 = vmatprep.subr.bf16.mxu0 %v5105
        %5612 = vmatpush1.bf16.msra.mxu0 %v5104
        %5613 = vmatprep.subr.bf16.mxu0 %v5098
        %5614 = vmatpush1.bf16.msra.mxu0 %v5097
        %5615 = vmatprep.subr.bf16.mxu0 %v5091
        %5616 = vmatpush1.bf16.msra.mxu0 %v5090
        %5617 = vmatprep.subr.bf16.mxu0 %v5084
        %5618 = vmatpush1.bf16.msra.mxu0 %v5083
        %5619 = vmatprep.subr.bf16.mxu0 %v5077
        %5620 = vmatpush1.bf16.msra.mxu0 %v5076
        %5621 = vmatprep.subr.bf16.mxu0 %v5070
        %5622 = vmatpush1.bf16.msra.mxu0 %v5069
        %5623 = vmatprep.subr.bf16.mxu0 %v5063
        %5624 = vmatpush1.bf16.msra.mxu0 %v5062
        %5625 = vmatprep.subr.bf16.mxu0 %v5168
        %5626 = vmatpush2.bf16.msra.mxu0 %v5167
        %5627 = vmatprep.subr.bf16.mxu0 %v5161
        %5628 = vmatpush2.bf16.msra.mxu0 %v5160
        %5629 = vmatprep.subr.bf16.mxu0 %v5154
        %5630 = vmatpush2.bf16.msra.mxu0 %v5153
        %5631 = vmatprep.subr.bf16.mxu0 %v5147
        %5632 = vmatpush2.bf16.msra.mxu0 %v5146
        %5633 = vmatprep.subr.bf16.mxu0 %v5140
        %5634 = vmatpush2.bf16.msra.mxu0 %v5139
        %5635 = vmatprep.subr.bf16.mxu0 %v5133
        %5636 = vmatpush2.bf16.msra.mxu0 %v5132
        %5637 = vmatprep.subr.bf16.mxu0 %v5126
        %5638 = vmatpush2.bf16.msra.mxu0 %v5125
        %5639 = vmatprep.subr.bf16.mxu0 %v5119
        %5640 = vmatpush2.bf16.msra.mxu0 %v5118
        %5641 = vmatprep.mubr.bf16.mxu0 %v3948
        %5642 = vmatmul.mubr.bf16.gmra.mxu0 %v3947
        %v5643 = vpop.f32.mrf.mxu0
        %v5644 = vadd.f32 %v5601, %v5643
        %v5645 = vpop.f32.mrf.mxu0
        %v5646 = vadd.f32 %v5603, %v5645
        %v5647 = vpop.f32.mrf.mxu0
        %v5648 = vadd.f32 %v5605, %v5647
        %v5649 = vpop.f32.mrf.mxu0
        %v5650 = vadd.f32 %v5607, %v5649
        %5651 = vdwg.mxu0
        %5652 = vmatprep.subr.bf16.mxu0 0
        %5653 = vmatpush1.bf16.msra.mxu0 %v5001
        %5654 = vmatprep.subr.bf16.mxu0 0
        %5655 = vmatpush1.bf16.msra.mxu0 %v4994
        %5656 = vmatprep.subr.bf16.mxu0 0
        %5657 = vmatpush1.bf16.msra.mxu0 %v4987
        %5658 = vmatprep.subr.bf16.mxu0 0
        %5659 = vmatpush1.bf16.msra.mxu0 %v4980
        %5660 = vmatprep.subr.bf16.mxu0 0
        %5661 = vmatpush1.bf16.msra.mxu0 %v4973
        %5662 = vmatprep.subr.bf16.mxu0 0
        %5663 = vmatpush1.bf16.msra.mxu0 %v4966
        %5664 = vmatprep.subr.bf16.mxu0 0
        %5665 = vmatpush1.bf16.msra.mxu0 %v4959
        %5666 = vmatprep.subr.bf16.mxu0 0
        %5667 = vmatpush1.bf16.msra.mxu0 %v4952
        %5668 = vmatprep.subr.bf16.mxu0 0
        %5669 = vmatpush2.bf16.msra.mxu0 %v5057
        %5670 = vmatprep.subr.bf16.mxu0 0
        %5671 = vmatpush2.bf16.msra.mxu0 %v5050
        %5672 = vmatprep.subr.bf16.mxu0 0
        %5673 = vmatpush2.bf16.msra.mxu0 %v5043
        %5674 = vmatprep.subr.bf16.mxu0 0
        %5675 = vmatpush2.bf16.msra.mxu0 %v5036
        %5676 = vmatprep.subr.bf16.mxu0 0
        %5677 = vmatpush2.bf16.msra.mxu0 %v5029
        %5678 = vmatprep.subr.bf16.mxu0 0
        %5679 = vmatpush2.bf16.msra.mxu0 %v5022
        %5680 = vmatprep.subr.bf16.mxu0 0
        %5681 = vmatpush2.bf16.msra.mxu0 %v5015
        %5682 = vmatprep.subr.bf16.mxu0 0
        %5683 = vmatpush2.bf16.msra.mxu0 %v5008
        %5684 = vmatprep.mubr.bf16.mxu0 %v3946
        %5685 = vmatmul.mubr.bf16.gmra.mxu0 %v3945
        %v5686 = vpop.f32.mrf.mxu0
        %v5687 = vadd.f32 %v4234, %v5686
        %v5688 = vpop.f32.mrf.mxu0
        %v5689 = vpop.f32.mrf.mxu0
        %v5690 = vadd.f32 %v4234, %v5689
        %v5691 = vpop.f32.mrf.mxu0
        %5692 = vdwg.mxu0
        %5693 = vmatprep.subr.bf16.mxu0 0
        %5694 = vmatpush1.bf16.msra.mxu0 %v5113
        %5695 = vmatprep.subr.bf16.mxu0 0
        %5696 = vmatpush1.bf16.msra.mxu0 %v5106
        %5697 = vmatprep.subr.bf16.mxu0 0
        %5698 = vmatpush1.bf16.msra.mxu0 %v5099
        %5699 = vmatprep.subr.bf16.mxu0 0
        %5700 = vmatpush1.bf16.msra.mxu0 %v5092
        %5701 = vmatprep.subr.bf16.mxu0 0
        %5702 = vmatpush1.bf16.msra.mxu0 %v5085
        %5703 = vmatprep.subr.bf16.mxu0 0
        %5704 = vmatpush1.bf16.msra.mxu0 %v5078
        %5705 = vmatprep.subr.bf16.mxu0 0
        %5706 = vmatpush1.bf16.msra.mxu0 %v5071
        %5707 = vmatprep.subr.bf16.mxu0 0
        %5708 = vmatpush1.bf16.msra.mxu0 %v5064
        %5709 = vmatprep.subr.bf16.mxu0 0
        %5710 = vmatpush2.bf16.msra.mxu0 %v5169
        %5711 = vmatprep.subr.bf16.mxu0 0
        %5712 = vmatpush2.bf16.msra.mxu0 %v5162
        %5713 = vmatprep.subr.bf16.mxu0 0
        %5714 = vmatpush2.bf16.msra.mxu0 %v5155
        %5715 = vmatprep.subr.bf16.mxu0 0
        %5716 = vmatpush2.bf16.msra.mxu0 %v5148
        %5717 = vmatprep.subr.bf16.mxu0 0
        %5718 = vmatpush2.bf16.msra.mxu0 %v5141
        %5719 = vmatprep.subr.bf16.mxu0 0
        %5720 = vmatpush2.bf16.msra.mxu0 %v5134
        %5721 = vmatprep.subr.bf16.mxu0 0
        %5722 = vmatpush2.bf16.msra.mxu0 %v5127
        %5723 = vmatprep.subr.bf16.mxu0 0
        %5724 = vmatpush2.bf16.msra.mxu0 %v5120
        %5725 = vmatprep.mubr.bf16.mxu0 %v3948
        %5726 = vmatmul.mubr.bf16.gmra.mxu0 %v3947
        %v5727 = vpop.f32.mrf.mxu0
        %v5728 = vadd.f32 %v5687, %v5727
        %v5729 = vpop.f32.mrf.mxu0
        %v5730 = vpop.f32.mrf.mxu0
        %v5731 = vadd.f32 %v5690, %v5730
        %v5732 = vpop.f32.mrf.mxu0
        %5733 = vdwg.mxu0
        %v5734 = vpack.c.bf16 %v5476, %v5472
        %v5735 = vpack.c.bf16 %v5478, %v5474
        %v5736 = vpack.c.bf16 %v5562, %v5558
        %v5737 = vpack.c.bf16 %v5564, %v5560
        %v5738 = vpack.c.bf16 %v5648, %v5644
        %v5739 = vpack.c.bf16 %v5650, %v5646
        %v5740 = vpack.c.bf16 %v5731, %v5728
        %v5741 = vtanh.bf16.pop %v5734
        %v5742 = vtanh.bf16.pop %v5735
        %v5743 = vtanh.bf16.pop %v5736
        %v5744 = vtanh.bf16.pop %v5737
        %v5745 = vtanh.bf16.pop %v5738
        %v5746 = vtanh.bf16.pop %v5739
        %v5747 = vtanh.bf16.pop %v5740
        %v5755 = vunpack.c.l.b16 %v5741
        %v5756 = vunpack.c.l.b16 %v5742
        %v5757 = vunpack.c.l.b16 %v5743
        %v5758 = vunpack.c.l.b16 %v5744
        %v5759 = vunpack.c.l.b16 %v5745
        %v5760 = vunpack.c.l.b16 %v5746
        %v5761 = vunpack.c.l.b16 %v5747
        %v5762 = vunpack.c.h.b16 %v5741
        %v5763 = vunpack.c.h.b16 %v5742
        %v5764 = vunpack.c.h.b16 %v5743
        %v5765 = vunpack.c.h.b16 %v5744
        %v5766 = vunpack.c.h.b16 %v5745
        %v5767 = vunpack.c.h.b16 %v5746
        %v5768 = vunpack.c.h.b16 %v5747
        %v5769 = vpack.c.b16 %v5756, %v5755
        %v5770 = vpack.c.b16 %v5758, %v5757
        %v5771 = vpack.c.b16 %v5760, %v5759
        %v5772 = vpack.c.b16 %v5761, %v5761
        %v5773 = vpack.c.b16 %v5763, %v5762
        %v5774 = vpack.c.b16 %v5765, %v5764
        %v5775 = vpack.c.b16 %v5767, %v5766
        %v5776 = vpack.c.b16 %v5768, %v5768
        %5785 = vst [vmem:[%s521] sm:$0xff] %v5769
        %5786 = vst [vmem:[%s521 + $0x8] sm:$0xff] %v5770
        %5787 = vst [vmem:[%s521 + $0x10] sm:$0xff] %v5771
        %5788 = vst [vmem:[%s521 + $0x18] sm:$0xf] %v5772
        %5789 = vst [vmem:[%s521 + $0x1c] sm:$0xff] %v5773
        %5790 = vst [vmem:[%s521 + $0x24] sm:$0xff] %v5774
        %5791 = vst [vmem:[%s521 + $0x2c] sm:$0xff] %v5775
        %5792 = vst [vmem:[%s521 + $0x34] sm:$0xf] %v5776
        %s5793 = smul.u32 2, %s27
        %p5794 = scmp.lt.s32.totalorder %s5793, 3
        %s5795 = scalar_select %p5794, %s5793, 3
        %s5796 = smul.addr %s5795, 7
        %s5797 = smul.addr %s5796, 4
        %s5798 = scalar_lea.vmem %s12, %s5797
        %s5799 = smul.u32 2, %s27
        %p5800 = scmp.lt.s32.totalorder %s5799, 3
        %s5801 = scalar_select %p5800, %s5799, 3
        %s5802 = smul.addr %s5801, 8
        %s5803 = scalar_lea.vmem %s13, %s5802
        // Predicated region
        $region81: #{vae_forward.1} parent=67 // pred_check
          %p5804 = pneg %p307
        $region82: #{vae_forward.1} parent=67 // pred_check_branch
          %5806 = sbr.rel (%p5804) target = $region84
        $region83: #{vae_forward.1} parent=67 // pred_region
          %s5807 = smul.u32 2, %s27
        $region84: #{vae_forward.1} parent=67 // pred_fallthru
          _
        // Predicated region
        $region85: #{vae_forward.1} parent=67 // pred_check
          %p5808 = pneg %p333
        $region86: #{vae_forward.1} parent=67 // pred_check_branch
          %5810 = sbr.rel (%p5808) target = $region88
        $region87: #{vae_forward.1} parent=67 // pred_region
          %s5811 = smul.u32 2, %s27
        $region88: #{vae_forward.1} parent=67 // pred_fallthru
          _
      $region68: #{vae_forward.1} parent=5 // pred_fallthru
        _
      %p5812 = scmp.le.s32.totalorder 2, %s22
      // Predicated region
      $region89: #{vae_forward.1} parent=5 // pred_check
        %p5813 = pneg %p5812
      $region90: #{vae_forward.1} parent=5 // pred_check_branch
        %5815 = sbr.rel (%p5813) target = $region92
      $region91: #{vae_forward.1} parent=5 // pred_region
        %s5816 = ssub.s32 %s22, 2
        // Predicated region
        $region93: #{vae_forward.1} parent=91 // pred_check
          %p5817 = pneg %p313
        $region94: #{vae_forward.1} parent=91 // pred_check_branch
          %5819 = sbr.rel (%p5817) target = $region96
        $region95: #{vae_forward.1} parent=91 // pred_region
          %s5820 = smul.u32 2, %s28
          %p5821 = scmp.lt.s32.totalorder %s5820, 3
          %s5822 = scalar_select %p5821, %s5820, 3
          %s5823 = smul.addr %s5822, 7
          %s5824 = smul.addr %s5823, 4
          %s5825 = scalar_lea.vmem %s12, %s5824
        $region96: #{vae_forward.1} parent=91 // pred_fallthru
          _
        // Predicated region
        $region97: #{vae_forward.1} parent=91 // pred_check
          %p5826 = pneg %p339
        $region98: #{vae_forward.1} parent=91 // pred_check_branch
          %5828 = sbr.rel (%p5826) target = $region100
        $region99: #{vae_forward.1} parent=91 // pred_region
          %s5829 = smul.u32 2, %s28
          %p5830 = scmp.lt.s32.totalorder %s5829, 3
          %s5831 = scalar_select %p5830, %s5829, 3
          %s5832 = smul.addr %s5831, 8
          %s5833 = scalar_lea.vmem %s13, %s5832
        $region100: #{vae_forward.1} parent=91 // pred_fallthru
          _
      $region92: #{vae_forward.1} parent=5 // pred_fallthru
        _
    $region6: #{vae_forward.1} parent=1 // loop_footer
      %s26 = sadd.s32 1, %s22
    $region7: #{vae_forward.1} parent=1 // loop_footer_branch
      %21 = sbr.rel target = $region3
    $region8: #{vae_forward.1} parent=1 // loop_exit
      _
    %5834 = vsyncpa [#allocation3], 1
    %s5835 = scalar_lea.sflag [#allocation3], 1
    %5836 = vsyncpa %s5835, 1
    %5837 = vsyncpa [#allocation5], 1

</llo_original>
